<compile_context>
chip_gen: v6e
topology: v6e:2x2x1
jax: 0.10.0
libtpu: 0.0.40
codegen_flags: <defaults>
</compile_context>

<pallas_src>
import functools

import jax
import jax.numpy as jnp
import numpy as np
from jax import lax
from jax.experimental import pallas as pl
from jax.experimental.pallas import tpu as pltpu

EPS = 1e-5
LEAKY_SLOPE = 0.2
LANE = 128
_VMEM_LIMIT = 48 * 1024 * 1024      # > 16/32 MiB scoped defaults, < v7x 64 MiB physical

# ConvTranspose(k=4, s=2, p=1) pixel-shuffle decomposition tables.
# hp[1 + i, 1 + j] == h[i, j]  (h zero-padded by 1 on every side).
# For output-row parity ry, the two contributing (row_offset_into_hp, kh):
_UP_ROW_TAPS = (((1, 1), (0, 3)),   # ry = 0:  h[i]  *W[kh=1]  +  h[i-1]*W[kh=3]
                ((1, 2), (2, 0)))   # ry = 1:  h[i]  *W[kh=2]  +  h[i+1]*W[kh=0]
_UP_COL_TAPS = (((1, 1), (0, 3)),   # rx = 0   (same structure for columns / kw)
                ((1, 2), (2, 0)))   # rx = 1
_PARITIES = ((0, 0), (0, 1), (1, 0), (1, 1))


def _round_up(x, m):
    return (x + m - 1) // m * m


# ----------------------------------------------------------------------------
# Kernel 1 (fused): LeakyReLU -> Conv2d(k4,s2,p1) -> ReLU -> ConvTranspose2d(k4,s2,p1)
#                   + per-step BatchNorm partial (sum, sumsq)
# ----------------------------------------------------------------------------
def _unet_core_kernel(x_ref, wd_ref, wu_ref, u_ref, s_ref, hp_s):
    """x_ref : (nbk, Ho+1, Wo+1, 4*Cin) bf16  parity-packed, spatially padded input block
    wd_ref: (4, 4*Cin, ICp)          bf16  down-conv weight, K grouped by (a, b) tap group
    wu_ref: (4, 4, ICp, OCp)         bf16  up-conv weight [parity, tap, in, out]
    u_ref : (4, nbk, Ho, Wo, OCp)    bf16  up-conv output, one plane per output parity
    s_ref : (1, 2, OCp)              f32   this grid step's partial (sum, sum-of-squares)
    hp_s  : (nbk, Ho+2, Wo+2, ICp)   bf16  VMEM scratch: zero-padded inner activation
    """
    nbk, hop1, wop1, _ = x_ref.shape
    ho, wo = hop1 - 1, wop1 - 1
    icp = hp_s.shape[-1]
    ocp = u_ref.shape[-1]
    m = nbk * ho * wo

    # ---- down path: LeakyReLU in f32 (VPU, v5e-safe), conv as 4 accumulated K=4*Cin dots
    xa = x_ref[...].astype(jnp.float32)
    xa = jnp.where(xa >= 0, xa, LEAKY_SLOPE * xa).astype(jnp.bfloat16)
    acc_d = None
    for g, (a, b) in enumerate(((0, 0), (0, 1), (1, 0), (1, 1))):
        slab = xa[:, a:a + ho, b:b + wo, :].reshape(m, -1)        # VMEM-only tap gather
        d = jnp.dot(slab, wd_ref[g], preferred_element_type=jnp.float32)
        acc_d = d if acc_d is None else acc_d + d                 # init from first dot
    hdown = jnp.maximum(acc_d, 0.0).astype(jnp.bfloat16).reshape(nbk, ho, wo, icp)

    # ---- fused zero-pad of the inner activation (stays in VMEM, never hits HBM)
    hp_s[...] = jnp.zeros_like(hp_s)
    hp_s[:, 1:1 + ho, 1:1 + wo, :] = hdown
    hp = hp_s[...]

    # ---- up path: ConvTranspose as 4 parity 2x2 sub-convolutions; BN partials fused on
    #      the f32 accumulator before the bf16 store.  Only the centre slab is hoisted.
    slab_c = hp[:, 1:1 + ho, 1:1 + wo, :].reshape(m, icp)         # shared by all 4 parities
    ssum = jnp.zeros((1, ocp), jnp.float32)
    ssq = jnp.zeros((1, ocp), jnp.float32)
    for p, (ry, rx) in enumerate(_PARITIES):
        rs1 = _UP_ROW_TAPS[ry][1][0]
        cs1 = _UP_COL_TAPS[rx][1][0]
        acc = jnp.dot(slab_c, wu_ref[p, 0], preferred_element_type=jnp.float32)
        for t, (rs, cs) in enumerate(((1, cs1), (rs1, 1), (rs1, cs1)), start=1):
            slab = hp[:, rs:rs + ho, cs:cs + wo, :].reshape(m, icp)   # built per parity
            acc += jnp.dot(slab, wu_ref[p, t], preferred_element_type=jnp.float32)
        ssum = ssum + jnp.sum(acc, axis=0, keepdims=True)
        ssq = ssq + jnp.sum(acc * acc, axis=0, keepdims=True)
        u_ref[p] = acc.reshape(nbk, ho, wo, ocp).astype(u_ref.dtype)
    s_ref[0] = jnp.concatenate([ssum, ssq], axis=0)


def unet_core(x_packed, wd_mat, wu_mat, *, nbk, ho, wo, icp, ocp):
    n = x_packed.shape[0]
    cin4 = x_packed.shape[-1]
    nsteps = n // nbk
    return pl.pallas_call(
        _unet_core_kernel,
        out_shape=(jax.ShapeDtypeStruct((4, n, ho, wo, ocp), jnp.bfloat16),
                   jax.ShapeDtypeStruct((nsteps, 2, ocp), jnp.float32)),
        grid=(nsteps,),
        in_specs=[
            pl.BlockSpec((nbk, ho + 1, wo + 1, cin4), lambda i: (i, 0, 0, 0)),
            pl.BlockSpec((4, cin4, icp), lambda i: (0, 0, 0)),
            pl.BlockSpec((4, 4, icp, ocp), lambda i: (0, 0, 0, 0)),
        ],
        out_specs=(
            pl.BlockSpec((4, nbk, ho, wo, ocp), lambda i: (0, i, 0, 0, 0)),
            pl.BlockSpec((1, 2, ocp), lambda i: (i, 0, 0)),
        ),
        scratch_shapes=[pltpu.VMEM((nbk, ho + 2, wo + 2, icp), jnp.bfloat16)],
        compiler_params=pltpu.CompilerParams(
            dimension_semantics=("parallel",), vmem_limit_bytes=_VMEM_LIMIT),
    )(x_packed, wd_mat, wu_mat)


# ----------------------------------------------------------------------------
# Kernel 2: BatchNorm normalize + affine (lane-dense row tiles, bf16 in -> f32 out)
# ----------------------------------------------------------------------------
def _bn_norm_kernel(u_ref, s_ref, g_ref, b_ref, o_ref, *, count):
    inv = 1.0 / count
    s = s_ref[...]
    mean = s[0:1, :] * inv
    var = jnp.maximum(s[1:2, :] * inv - mean * mean, 0.0)     # clamp rounding negatives
    scale = g_ref[...] * lax.rsqrt(var + EPS)
    shift = b_ref[...] - mean * scale
    o_ref[...] = u_ref[...].astype(jnp.float32) * scale + shift


def bn_normalize(u_flat, stats, gamma2d, beta2d, *, count, tr):
    m, c = u_flat.shape
    return pl.pallas_call(
        functools.partial(_bn_norm_kernel, count=count),
        out_shape=jax.ShapeDtypeStruct((m, c), jnp.float32),
        grid=(m // tr,),
        in_specs=[
            pl.BlockSpec((tr, c), lambda i: (i, 0)),
            pl.BlockSpec((2, c), lambda i: (0, 0)),
            pl.BlockSpec((1, c), lambda i: (0, 0)),
            pl.BlockSpec((1, c), lambda i: (0, 0)),
        ],
        out_specs=pl.BlockSpec((tr, c), lambda i: (i, 0)),
        compiler_params=pltpu.CompilerParams(dimension_semantics=("parallel",)),
    )(u_flat, stats, gamma2d, beta2d)


# ----------------------------------------------------------------------------
# Host-side weight packing (one-time, tiny)
# ----------------------------------------------------------------------------
def _build_down_weight(w_down, icp):
    # w_down: (inner_nc, input_nc, 4, 4) -> (4 groups, 4*Cin, ICp) bf16.
    # Group g = a*2 + b (tap block kh//2==a, kw//2==b); rows within a group ordered
    # (pr, pc, c) to match the parity-packed channel layout of x_packed.
    inner, cin = w_down.shape[0], w_down.shape[1]
    groups = []
    for a in range(2):
        for b in range(2):
            rows = []
            for pr in range(2):
                for pc in range(2):
                    rows.append(jnp.transpose(w_down[:, :, 2 * a + pr, 2 * b + pc], (1, 0)))
            groups.append(jnp.concatenate(rows, axis=0))          # (4*cin, inner)
    wm = jnp.stack(groups, axis=0)                                # (4, 4*cin, inner)
    return jnp.pad(wm, ((0, 0), (0, 0), (0, icp - inner))).astype(jnp.bfloat16)


def _build_up_weight(w_up, icp, ocp):
    # w_up: (inner_nc, outer_nc, 4, 4) -> (4 parities, 4 taps, ICp, OCp) bf16
    inner, outer = w_up.shape[0], w_up.shape[1]
    per_parity = []
    for (ry, rx) in _PARITIES:
        taps = []
        for (_rs, kh) in _UP_ROW_TAPS[ry]:
            for (_cs, kw) in _UP_COL_TAPS[rx]:
                taps.append(jnp.pad(w_up[:, :, kh, kw],
                                    ((0, icp - inner), (0, ocp - outer))))
        per_parity.append(jnp.stack(taps, axis=0))
    return jnp.stack(per_parity, axis=0).astype(jnp.bfloat16)


# ----------------------------------------------------------------------------
# Tiling heuristics
# ----------------------------------------------------------------------------
def _pick_batch_block(n, ho, wo, icp, ocp, target_m=256):
    """Images per grid step: target M = nbk*Ho*Wo >= 256 MXU rows, keep >=2 grid steps
    (v7x has 2 TensorCores) and a bounded per-step VMEM footprint."""
    per = max(1, ho * wo)
    nbk = min(n, max(1, -(-target_m // per)))
    while nbk > 1 and nbk * per * (icp + 5 * ocp) * 4 > 8 * 1024 * 1024:   # crude VMEM guard
        nbk -= 1
    while nbk > 1 and (n % nbk != 0 or n // nbk < 2):
        nbk -= 1
    return max(1, nbk)


def _pick_row_tile(m, target=1024):
    # big tiles for the HBM roofline (512-1024 ~= 85% of BW), but keep >= 2 grid steps
    if m <= 8:
        return m
    return max(8, min(target, _round_up(pl.cdiv(m, 2), 8)))


# ----------------------------------------------------------------------------
# Forward pass
# ----------------------------------------------------------------------------
def unet_innermost_forward(x_nchw, params):
    w_down, w_up = params["w_down"], params["w_up"]
    gamma, beta = params["gamma"], params["beta"]

    n, cin, h, w = x_nchw.shape
    inner_nc = w_down.shape[0]
    outer_nc = w_up.shape[1]
    ho, wo = h // 2, w // 2
    icp = _round_up(inner_nc, LANE)     # pad matmul output dims to the 128-lane width
    ocp = _round_up(outer_nc, LANE)

    # entry relayout (single fused XLA pass over x): NCHW -> NHWC, spatial zero-pad,
    # (row, col)-parity packed into the channel axis, bf16 cast to halve the input DMA.
    x_nhwc = jnp.transpose(x_nchw, (0, 2, 3, 1))
    xp = jnp.pad(x_nhwc, ((0, 0), (1, 1), (1, 1), (0, 0)))
    x_packed = (xp.reshape(n, ho + 1, 2, wo + 1, 2, cin)
                  .transpose(0, 1, 3, 2, 4, 5)
                  .reshape(n, ho + 1, wo + 1, 4 * cin)
                  .astype(jnp.bfloat16))

    wd_mat = _build_down_weight(w_down, icp)
    wu_mat = _build_up_weight(w_up, icp, ocp)

    # fused down-conv / up-conv / BN-partials kernel, gridded over batch blocks
    nbk = _pick_batch_block(n, ho, wo, icp, ocp)
    u, s_part = unet_core(x_packed, wd_mat, wu_mat,
                          nbk=nbk, ho=ho, wo=wo, icp=icp, ocp=ocp)
    stats = jnp.sum(s_part, axis=0)                                # (2, OCp) tiny XLA reduce

    # BatchNorm normalize (u stays bf16 in HBM; math in f32 in-kernel)
    m_true = 4 * n * ho * wo                                       # == N*H*W pixels
    u_flat = u.reshape(m_true, ocp)
    tr = _pick_row_tile(m_true)
    m_pad = _round_up(m_true, tr)
    if m_pad != m_true:
        u_flat = jnp.pad(u_flat, ((0, m_pad - m_true), (0, 0)))    # pad rows sliced off below
    g_pad = jnp.pad(gamma, (0, ocp - outer_nc)).reshape(1, ocp)
    b_pad = jnp.pad(beta, (0, ocp - outer_nc)).reshape(1, ocp)
    un = bn_normalize(u_flat, stats, g_pad, b_pad, count=m_true, tr=tr)[:m_true]

    # exit relayout (single fused XLA pass): pixel-shuffle re-interleave, channel un-pad,
    # NHWC -> NCHW, and the skip concat with the untouched x.
    un = un.reshape(2, 2, n, ho, wo, ocp)[..., :outer_nc]          # (ry, rx, n, i, j, c)
    h_nchw = un.transpose(2, 5, 3, 0, 4, 1).reshape(n, outer_nc, h, w)
    return jnp.concatenate([x_nchw, h_nchw], axis=1)


# ----------------------------------------------------------------------------
# Pure-JAX reference (lax convolutions, f32) for verification
# ----------------------------------------------------------------------------
def reference_forward(x, params):
    w_down, w_up, gamma, beta = params["w_down"], params["w_up"], params["gamma"], params["beta"]
    dn = ("NCHW", "OIHW", "NCHW")
    h = jnp.where(x >= 0, x, LEAKY_SLOPE * x)
    h = lax.conv_general_dilated(h, w_down, (2, 2), ((1, 1), (1, 1)), dimension_numbers=dn)
    h = jnp.maximum(h, 0.0)
    w_up_conv = jnp.transpose(w_up[:, :, ::-1, ::-1], (1, 0, 2, 3))    # equivalent OIHW kernel
    h = lax.conv_general_dilated(h, w_up_conv, (1, 1), ((2, 2), (2, 2)),
                                 lhs_dilation=(2, 2), dimension_numbers=dn)
    mean = jnp.mean(h, axis=(0, 2, 3), keepdims=True)
    var = jnp.mean((h - mean) ** 2, axis=(0, 2, 3), keepdims=True)
    h = (h - mean) / jnp.sqrt(var + EPS)
    h = h * gamma[None, :, None, None] + beta[None, :, None, None]
    return jnp.concatenate([x, h], axis=1)


# ----------------------------------------------------------------------------
# Deterministic parameter init + driver
# ----------------------------------------------------------------------------
def init_params(key, outer_nc, inner_nc, input_nc):
    k1, k2, k3, k4 = jax.random.split(key, 4)
    return {
        # Conv2d weight: (inner_nc, input_nc, 4, 4), bias=False (BatchNorm => use_bias=False)
        "w_down": 0.1 * jax.random.normal(k1, (inner_nc, input_nc, 4, 4), jnp.float32),
        # ConvTranspose2d weight: (inner_nc, outer_nc, 4, 4), bias=False
        "w_up": 0.1 * jax.random.normal(k2, (inner_nc, outer_nc, 4, 4), jnp.float32),
        # BatchNorm2d(outer_nc) affine params
        "gamma": 1.0 + 0.1 * jax.random.normal(k3, (outer_nc,), jnp.float32),
        "beta": 0.1 * jax.random.normal(k4, (outer_nc,), jnp.float32),
    }


if __name__ == "__main__":
    outer_nc, inner_nc = 4, 8
    input_nc = outer_nc          # innermost: input_nc defaults to outer_nc
    batch, spatial = 2, 16

    key = jax.random.PRNGKey(0)
    kx, kp = jax.random.split(key)
    x = jax.random.normal(kx, (batch, input_nc, spatial, spatial), jnp.float32)
    params = init_params(kp, outer_nc, inner_nc, input_nc)

    out = jax.jit(unet_innermost_forward)(x, params)
    out = jax.block_until_ready(out)

    ref = reference_forward(x, params)
    assert out.shape == (batch, input_nc + outer_nc, spatial, spatial), out.shape
    # bf16 MXU inputs / bf16 intermediates with f32 accumulation -> looser tolerance.
    np.testing.assert_allclose(np.asarray(out), np.asarray(ref), rtol=5e-2, atol=5e-2)

    print("KERNEL_OK")
</pallas_src>

<mosaic_0001>
module attributes {stable_mosaic.version = 11 : i64} {
  func.func @_bn_norm_kernel(%arg0: i32, %arg1: memref<256x128xbf16, #tpu.memory_space<vmem>>, %arg2: memref<2x128xf32, #tpu.memory_space<vmem>>, %arg3: memref<1x128xf32, #tpu.memory_space<vmem>>, %arg4: memref<1x128xf32, #tpu.memory_space<vmem>>, %arg5: memref<256x128xf32, #tpu.memory_space<vmem>>) attributes {dimension_semantics = [#tpu.dimension_semantics<parallel>], iteration_bounds = array<i64: 2>, scalar_prefetch = 0 : i64, scratch_operands = 0 : i64, tpu.core_type = #tpu.core_type<tc>, window_params = [{transform_indices = @transform_0, window_bounds = array<i64: 256, 128>}, {pipeline_mode = #tpu.pipeline_mode<synchronous>, transform_indices = @transform_1, window_bounds = array<i64: 2, 128>}, {pipeline_mode = #tpu.pipeline_mode<synchronous>, transform_indices = @transform_2, window_bounds = array<i64: 1, 128>}, {pipeline_mode = #tpu.pipeline_mode<synchronous>, transform_indices = @transform_3, window_bounds = array<i64: 1, 128>}, {transform_indices = @transform_4, window_bounds = array<i64: 256, 128>}]} {
    %c0 = arith.constant 0 : index
    %c0_0 = arith.constant 0 : index
    %0 = vector.load %arg2[%c0, %c0_0] : memref<2x128xf32, #tpu.memory_space<vmem>>, vector<2x128xf32>
    %1 = vector.extract_strided_slice %0 {offsets = [0, 0], sizes = [1, 128], strides = [1, 1]} : vector<2x128xf32> to vector<1x128xf32>
    %cst = arith.constant 0.001953125 : f32
    %2 = vector.broadcast %cst : f32 to vector<1x128xf32>
    %3 = arith.mulf %1, %2 : vector<1x128xf32>
    %4 = vector.extract_strided_slice %0 {offsets = [1, 0], sizes = [1, 128], strides = [1, 1]} : vector<2x128xf32> to vector<1x128xf32>
    %cst_1 = arith.constant 0.001953125 : f32
    %5 = vector.broadcast %cst_1 : f32 to vector<1x128xf32>
    %6 = arith.mulf %4, %5 : vector<1x128xf32>
    %7 = arith.mulf %3, %3 : vector<1x128xf32>
    %8 = arith.subf %6, %7 : vector<1x128xf32>
    %cst_2 = arith.constant 0.000000e+00 : f32
    %9 = vector.broadcast %cst_2 : f32 to vector<1x128xf32>
    %10 = arith.maximumf %8, %9 : vector<1x128xf32>
    %c0_3 = arith.constant 0 : index
    %c0_4 = arith.constant 0 : index
    %11 = vector.load %arg3[%c0_3, %c0_4] : memref<1x128xf32, #tpu.memory_space<vmem>>, vector<1x128xf32>
    %cst_5 = arith.constant 9.99999974E-6 : f32
    %12 = vector.broadcast %cst_5 : f32 to vector<1x128xf32>
    %13 = arith.addf %10, %12 : vector<1x128xf32>
    %14 = math.rsqrt %13 : vector<1x128xf32>
    %15 = arith.mulf %11, %14 : vector<1x128xf32>
    %c0_6 = arith.constant 0 : index
    %c0_7 = arith.constant 0 : index
    %16 = vector.load %arg4[%c0_6, %c0_7] : memref<1x128xf32, #tpu.memory_space<vmem>>, vector<1x128xf32>
    %17 = arith.mulf %3, %15 : vector<1x128xf32>
    %18 = arith.subf %16, %17 : vector<1x128xf32>
    %c0_8 = arith.constant 0 : index
    %c0_9 = arith.constant 0 : index
    %19 = vector.load %arg1[%c0_8, %c0_9] : memref<256x128xbf16, #tpu.memory_space<vmem>>, vector<256x128xbf16>
    %20 = arith.extf %19 : vector<256x128xbf16> to vector<256x128xf32>
    %21 = vector.broadcast %15 : vector<1x128xf32> to vector<256x128xf32>
    %22 = arith.mulf %20, %21 : vector<256x128xf32>
    %23 = vector.broadcast %18 : vector<1x128xf32> to vector<256x128xf32>
    %24 = arith.addf %22, %23 : vector<256x128xf32>
    %c0_10 = arith.constant 0 : index
    %c0_11 = arith.constant 0 : index
    %25 = vector.load %arg5[%c0_10, %c0_11] : memref<256x128xf32, #tpu.memory_space<vmem>>, vector<256x128xf32>
    tpu.vector_store %arg5[%c0_10, %c0_11], %24 {strides = array<i32>} : memref<256x128xf32, #tpu.memory_space<vmem>>, vector<256x128xf32>,
    return
  }
  func.func @transform_0(%arg0: i32) -> (i32, i32) {
    %c0_i32 = arith.constant 0 : i32
    %c0_i32_0 = arith.constant 0 : i32
    return %arg0, %c0_i32 : i32, i32
  }
  func.func @transform_1(%arg0: i32) -> (i32, i32) {
    %c0_i32 = arith.constant 0 : i32
    %c0_i32_0 = arith.constant 0 : i32
    %c0_i32_1 = arith.constant 0 : i32
    return %c0_i32, %c0_i32_0 : i32, i32
  }
  func.func @transform_2(%arg0: i32) -> (i32, i32) {
    %c0_i32 = arith.constant 0 : i32
    %c0_i32_0 = arith.constant 0 : i32
    %c0_i32_1 = arith.constant 0 : i32
    return %c0_i32, %c0_i32_0 : i32, i32
  }
  func.func @transform_3(%arg0: i32) -> (i32, i32) {
    %c0_i32 = arith.constant 0 : i32
    %c0_i32_0 = arith.constant 0 : i32
    %c0_i32_1 = arith.constant 0 : i32
    return %c0_i32, %c0_i32_0 : i32, i32
  }
  func.func @transform_4(%arg0: i32) -> (i32, i32) {
    %c0_i32 = arith.constant 0 : i32
    %c0_i32_0 = arith.constant 0 : i32
    return %arg0, %c0_i32 : i32, i32
  }
}

module attributes {stable_mosaic.version = 11 : i64} {
  func.func @_unet_core_kernel(%arg0: i32, %arg1: memref<1x9x9x16xbf16, #tpu.memory_space<vmem>>, %arg2: memref<4x16x128xbf16, #tpu.memory_space<vmem>>, %arg3: memref<4x4x128x128xbf16, #tpu.memory_space<vmem>>, %arg4: memref<4x1x8x8x128xbf16, #tpu.memory_space<vmem>>, %arg5: memref<1x2x128xf32, #tpu.memory_space<vmem>>, %arg6: memref<1x10x10x128xbf16, #tpu.memory_space<vmem>>) attributes {dimension_semantics = [#tpu.dimension_semantics<parallel>], iteration_bounds = array<i64: 2>, scalar_prefetch = 0 : i64, scratch_operands = 1 : i64, tpu.core_type = #tpu.core_type<tc>, window_params = [{transform_indices = @transform_0, window_bounds = array<i64: 1, 9, 9, 16>}, {pipeline_mode = #tpu.pipeline_mode<synchronous>, transform_indices = @transform_1, window_bounds = array<i64: 4, 16, 128>}, {pipeline_mode = #tpu.pipeline_mode<synchronous>, transform_indices = @transform_2, window_bounds = array<i64: 4, 4, 128, 128>}, {transform_indices = @transform_3, window_bounds = array<i64: 4, 1, 8, 8, 128>}, {transform_indices = @transform_4, window_bounds = array<i64: 1, 2, 128>}]} {
    %c0 = arith.constant 0 : index
    %c0_0 = arith.constant 0 : index
    %c0_1 = arith.constant 0 : index
    %c0_2 = arith.constant 0 : index
    %0 = vector.load %arg1[%c0, %c0_0, %c0_1, %c0_2] : memref<1x9x9x16xbf16, #tpu.memory_space<vmem>>, vector<1x9x9x16xbf16>
    %1 = arith.extf %0 : vector<1x9x9x16xbf16> to vector<1x9x9x16xf32>
    %cst = arith.constant 0.000000e+00 : f32
    %2 = vector.broadcast %cst : f32 to vector<1x9x9x16xf32>
    %3 = arith.cmpf oge, %1, %2 : vector<1x9x9x16xf32>
    %cst_3 = arith.constant 2.000000e-01 : f32
    %4 = vector.broadcast %cst_3 : f32 to vector<1x9x9x16xf32>
    %5 = arith.mulf %4, %1 : vector<1x9x9x16xf32>
    %6 = arith.select %3, %1, %5 : vector<1x9x9x16xi1>, vector<1x9x9x16xf32>
    %7 = arith.truncf %6 : vector<1x9x9x16xf32> to vector<1x9x9x16xbf16>
    %8 = vector.extract_strided_slice %7 {offsets = [0, 0, 0, 0], sizes = [1, 8, 8, 16], strides = [1, 1, 1, 1]} : vector<1x9x9x16xbf16> to vector<1x8x8x16xbf16>
    %9 = vector.shape_cast %8 : vector<1x8x8x16xbf16> to vector<64x16xbf16>
    %c0_4 = arith.constant 0 : index
    %c0_5 = arith.constant 0 : index
    %c0_6 = arith.constant 0 : index
    %10 = vector.load %arg2[%c0_4, %c0_5, %c0_6] : memref<4x16x128xbf16, #tpu.memory_space<vmem>>, vector<1x16x128xbf16>
    %11 = vector.shape_cast %10 : vector<1x16x128xbf16> to vector<16x128xbf16>
    %cst_7 = arith.constant dense<0.000000e+00> : vector<64x128xf32>
    %12 = tpu.matmul %9, %11, %cst_7 {dimension_numbers = #tpu.dot_dimension_numbers<[1], [0], [0], [1], [0, 0, 1, 1], [], []>} : vector<64x16xbf16>, vector<16x128xbf16>, vector<64x128xf32> -> vector<64x128xf32>
    %13 = vector.extract_strided_slice %7 {offsets = [0, 0, 1, 0], sizes = [1, 8, 8, 16], strides = [1, 1, 1, 1]} : vector<1x9x9x16xbf16> to vector<1x8x8x16xbf16>
    %14 = vector.shape_cast %13 : vector<1x8x8x16xbf16> to vector<64x16xbf16>
    %c1 = arith.constant 1 : index
    %c0_8 = arith.constant 0 : index
    %c0_9 = arith.constant 0 : index
    %15 = vector.load %arg2[%c1, %c0_8, %c0_9] : memref<4x16x128xbf16, #tpu.memory_space<vmem>>, vector<1x16x128xbf16>
    %16 = vector.shape_cast %15 : vector<1x16x128xbf16> to vector<16x128xbf16>
    %cst_10 = arith.constant dense<0.000000e+00> : vector<64x128xf32>
    %17 = tpu.matmul %14, %16, %cst_10 {dimension_numbers = #tpu.dot_dimension_numbers<[1], [0], [0], [1], [0, 0, 1, 1], [], []>} : vector<64x16xbf16>, vector<16x128xbf16>, vector<64x128xf32> -> vector<64x128xf32>
    %18 = arith.addf %12, %17 : vector<64x128xf32>
    %19 = vector.extract_strided_slice %7 {offsets = [0, 1, 0, 0], sizes = [1, 8, 8, 16], strides = [1, 1, 1, 1]} : vector<1x9x9x16xbf16> to vector<1x8x8x16xbf16>
    %20 = vector.shape_cast %19 : vector<1x8x8x16xbf16> to vector<64x16xbf16>
    %c2 = arith.constant 2 : index
    %c0_11 = arith.constant 0 : index
    %c0_12 = arith.constant 0 : index
    %21 = vector.load %arg2[%c2, %c0_11, %c0_12] : memref<4x16x128xbf16, #tpu.memory_space<vmem>>, vector<1x16x128xbf16>
    %22 = vector.shape_cast %21 : vector<1x16x128xbf16> to vector<16x128xbf16>
    %cst_13 = arith.constant dense<0.000000e+00> : vector<64x128xf32>
    %23 = tpu.matmul %20, %22, %cst_13 {dimension_numbers = #tpu.dot_dimension_numbers<[1], [0], [0], [1], [0, 0, 1, 1], [], []>} : vector<64x16xbf16>, vector<16x128xbf16>, vector<64x128xf32> -> vector<64x128xf32>
    %24 = arith.addf %18, %23 : vector<64x128xf32>
    %25 = vector.extract_strided_slice %7 {offsets = [0, 1, 1, 0], sizes = [1, 8, 8, 16], strides = [1, 1, 1, 1]} : vector<1x9x9x16xbf16> to vector<1x8x8x16xbf16>
    %26 = vector.shape_cast %25 : vector<1x8x8x16xbf16> to vector<64x16xbf16>
    %c3 = arith.constant 3 : index
    %c0_14 = arith.constant 0 : index
    %c0_15 = arith.constant 0 : index
    %27 = vector.load %arg2[%c3, %c0_14, %c0_15] : memref<4x16x128xbf16, #tpu.memory_space<vmem>>, vector<1x16x128xbf16>
    %28 = vector.shape_cast %27 : vector<1x16x128xbf16> to vector<16x128xbf16>
    %cst_16 = arith.constant dense<0.000000e+00> : vector<64x128xf32>
    %29 = tpu.matmul %26, %28, %cst_16 {dimension_numbers = #tpu.dot_dimension_numbers<[1], [0], [0], [1], [0, 0, 1, 1], [], []>} : vector<64x16xbf16>, vector<16x128xbf16>, vector<64x128xf32> -> vector<64x128xf32>
    %30 = arith.addf %24, %29 : vector<64x128xf32>
    %cst_17 = arith.constant 0.000000e+00 : f32
    %31 = vector.broadcast %cst_17 : f32 to vector<64x128xf32>
    %32 = arith.maximumf %30, %31 : vector<64x128xf32>
    %33 = arith.truncf %32 : vector<64x128xf32> to vector<64x128xbf16>
    %34 = vector.shape_cast %33 : vector<64x128xbf16> to vector<1x8x8x128xbf16>
    %cst_18 = arith.constant 0.000000e+00 : bf16
    %35 = vector.broadcast %cst_18 : bf16 to vector<1x10x10x128xbf16>
    %c0_19 = arith.constant 0 : index
    %c0_20 = arith.constant 0 : index
    %c0_21 = arith.constant 0 : index
    %c0_22 = arith.constant 0 : index
    %36 = vector.load %arg6[%c0_19, %c0_20, %c0_21, %c0_22] : memref<1x10x10x128xbf16, #tpu.memory_space<vmem>>, vector<1x10x10x128xbf16>
    tpu.vector_store %arg6[%c0_19, %c0_20, %c0_21, %c0_22], %35 {strides = array<i32>} : memref<1x10x10x128xbf16, #tpu.memory_space<vmem>>, vector<1x10x10x128xbf16>,
    %c0_23 = arith.constant 0 : index
    %c1_24 = arith.constant 1 : index
    %c1_25 = arith.constant 1 : index
    %c0_26 = arith.constant 0 : index
    %37 = vector.load %arg6[%c0_23, %c1_24, %c1_25, %c0_26] : memref<1x10x10x128xbf16, #tpu.memory_space<vmem>>, vector<1x8x8x128xbf16>
    tpu.vector_store %arg6[%c0_23, %c1_24, %c1_25, %c0_26], %34 {strides = array<i32>} : memref<1x10x10x128xbf16, #tpu.memory_space<vmem>>, vector<1x8x8x128xbf16>,
    %c0_27 = arith.constant 0 : index
    %c0_28 = arith.constant 0 : index
    %c0_29 = arith.constant 0 : index
    %c0_30 = arith.constant 0 : index
    %38 = vector.load %arg6[%c0_27, %c0_28, %c0_29, %c0_30] : memref<1x10x10x128xbf16, #tpu.memory_space<vmem>>, vector<1x10x10x128xbf16>
    %39 = vector.extract_strided_slice %38 {offsets = [0, 1, 1, 0], sizes = [1, 8, 8, 128], strides = [1, 1, 1, 1]} : vector<1x10x10x128xbf16> to vector<1x8x8x128xbf16>
    %40 = vector.shape_cast %39 : vector<1x8x8x128xbf16> to vector<64x128xbf16>
    %cst_31 = arith.constant 0.000000e+00 : f32
    %41 = vector.broadcast %cst_31 : f32 to vector<1x128xf32>
    %cst_32 = arith.constant 0.000000e+00 : f32
    %42 = vector.broadcast %cst_32 : f32 to vector<1x128xf32>
    %c0_33 = arith.constant 0 : index
    %c0_34 = arith.constant 0 : index
    %c0_35 = arith.constant 0 : index
    %c0_36 = arith.constant 0 : index
    %43 = vector.load %arg3[%c0_33, %c0_34, %c0_35, %c0_36] : memref<4x4x128x128xbf16, #tpu.memory_space<vmem>>, vector<1x1x128x128xbf16>
    %44 = vector.shape_cast %43 : vector<1x1x128x128xbf16> to vector<128x128xbf16>
    %cst_37 = arith.constant dense<0.000000e+00> : vector<64x128xf32>
    %45 = tpu.matmul %40, %44, %cst_37 {dimension_numbers = #tpu.dot_dimension_numbers<[1], [0], [0], [1], [0, 0, 1, 1], [], []>} : vector<64x128xbf16>, vector<128x128xbf16>, vector<64x128xf32> -> vector<64x128xf32>
    %46 = vector.extract_strided_slice %38 {offsets = [0, 1, 0, 0], sizes = [1, 8, 8, 128], strides = [1, 1, 1, 1]} : vector<1x10x10x128xbf16> to vector<1x8x8x128xbf16>
    %47 = vector.shape_cast %46 : vector<1x8x8x128xbf16> to vector<64x128xbf16>
    %c0_38 = arith.constant 0 : index
    %c1_39 = arith.constant 1 : index
    %c0_40 = arith.constant 0 : index
    %c0_41 = arith.constant 0 : index
    %48 = vector.load %arg3[%c0_38, %c1_39, %c0_40, %c0_41] : memref<4x4x128x128xbf16, #tpu.memory_space<vmem>>, vector<1x1x128x128xbf16>
    %49 = vector.shape_cast %48 : vector<1x1x128x128xbf16> to vector<128x128xbf16>
    %cst_42 = arith.constant dense<0.000000e+00> : vector<64x128xf32>
    %50 = tpu.matmul %47, %49, %cst_42 {dimension_numbers = #tpu.dot_dimension_numbers<[1], [0], [0], [1], [0, 0, 1, 1], [], []>} : vector<64x128xbf16>, vector<128x128xbf16>, vector<64x128xf32> -> vector<64x128xf32>
    %51 = arith.addf %45, %50 : vector<64x128xf32>
    %52 = vector.extract_strided_slice %38 {offsets = [0, 0, 1, 0], sizes = [1, 8, 8, 128], strides = [1, 1, 1, 1]} : vector<1x10x10x128xbf16> to vector<1x8x8x128xbf16>
    %53 = vector.shape_cast %52 : vector<1x8x8x128xbf16> to vector<64x128xbf16>
    %c0_43 = arith.constant 0 : index
    %c2_44 = arith.constant 2 : index
    %c0_45 = arith.constant 0 : index
    %c0_46 = arith.constant 0 : index
    %54 = vector.load %arg3[%c0_43, %c2_44, %c0_45, %c0_46] : memref<4x4x128x128xbf16, #tpu.memory_space<vmem>>, vector<1x1x128x128xbf16>
    %55 = vector.shape_cast %54 : vector<1x1x128x128xbf16> to vector<128x128xbf16>
    %cst_47 = arith.constant dense<0.000000e+00> : vector<64x128xf32>
    %56 = tpu.matmul %53, %55, %cst_47 {dimension_numbers = #tpu.dot_dimension_numbers<[1], [0], [0], [1], [0, 0, 1, 1], [], []>} : vector<64x128xbf16>, vector<128x128xbf16>, vector<64x128xf32> -> vector<64x128xf32>
    %57 = arith.addf %51, %56 : vector<64x128xf32>
    %58 = vector.extract_strided_slice %38 {offsets = [0, 0, 0, 0], sizes = [1, 8, 8, 128], strides = [1, 1, 1, 1]} : vector<1x10x10x128xbf16> to vector<1x8x8x128xbf16>
    %59 = vector.shape_cast %58 : vector<1x8x8x128xbf16> to vector<64x128xbf16>
    %c0_48 = arith.constant 0 : index
    %c3_49 = arith.constant 3 : index
    %c0_50 = arith.constant 0 : index
    %c0_51 = arith.constant 0 : index
    %60 = vector.load %arg3[%c0_48, %c3_49, %c0_50, %c0_51] : memref<4x4x128x128xbf16, #tpu.memory_space<vmem>>, vector<1x1x128x128xbf16>
    %61 = vector.shape_cast %60 : vector<1x1x128x128xbf16> to vector<128x128xbf16>
    %cst_52 = arith.constant dense<0.000000e+00> : vector<64x128xf32>
    %62 = tpu.matmul %59, %61, %cst_52 {dimension_numbers = #tpu.dot_dimension_numbers<[1], [0], [0], [1], [0, 0, 1, 1], [], []>} : vector<64x128xbf16>, vector<128x128xbf16>, vector<64x128xf32> -> vector<64x128xf32>
    %63 = arith.addf %57, %62 : vector<64x128xf32>
    %cst_53 = arith.constant dense<0.000000e+00> : vector<128xf32>
    %64 = vector.multi_reduction <add>, %63, %cst_53 [0] : vector<64x128xf32> to vector<128xf32>
    %65 = vector.shape_cast %64 : vector<128xf32> to vector<1x128xf32>
    %66 = arith.addf %41, %65 : vector<1x128xf32>
    %67 = arith.mulf %63, %63 : vector<64x128xf32>
    %cst_54 = arith.constant dense<0.000000e+00> : vector<128xf32>
    %68 = vector.multi_reduction <add>, %67, %cst_54 [0] : vector<64x128xf32> to vector<128xf32>
    %69 = vector.shape_cast %68 : vector<128xf32> to vector<1x128xf32>
    %70 = arith.addf %42, %69 : vector<1x128xf32>
    %71 = vector.shape_cast %63 : vector<64x128xf32> to vector<1x8x8x128xf32>
    %72 = arith.truncf %71 : vector<1x8x8x128xf32> to vector<1x8x8x128xbf16>
    %c0_55 = arith.constant 0 : index
    %c0_56 = arith.constant 0 : index
    %c0_57 = arith.constant 0 : index
    %c0_58 = arith.constant 0 : index
    %c0_59 = arith.constant 0 : index
    %73 = vector.load %arg4[%c0_55, %c0_56, %c0_57, %c0_58, %c0_59] : memref<4x1x8x8x128xbf16, #tpu.memory_space<vmem>>, vector<1x1x8x8x128xbf16>
    %74 = vector.shape_cast %73 : vector<1x1x8x8x128xbf16> to vector<1x8x8x128xbf16>
    %75 = vector.shape_cast %72 : vector<1x8x8x128xbf16> to vector<1x1x8x8x128xbf16>
    tpu.vector_store %arg4[%c0_55, %c0_56, %c0_57, %c0_58, %c0_59], %75 {strides = array<i32>} : memref<4x1x8x8x128xbf16, #tpu.memory_space<vmem>>, vector<1x1x8x8x128xbf16>,
    %c1_60 = arith.constant 1 : index
    %c0_61 = arith.constant 0 : index
    %c0_62 = arith.constant 0 : index
    %c0_63 = arith.constant 0 : index
    %76 = vector.load %arg3[%c1_60, %c0_61, %c0_62, %c0_63] : memref<4x4x128x128xbf16, #tpu.memory_space<vmem>>, vector<1x1x128x128xbf16>
    %77 = vector.shape_cast %76 : vector<1x1x128x128xbf16> to vector<128x128xbf16>
    %cst_64 = arith.constant dense<0.000000e+00> : vector<64x128xf32>
    %78 = tpu.matmul %40, %77, %cst_64 {dimension_numbers = #tpu.dot_dimension_numbers<[1], [0], [0], [1], [0, 0, 1, 1], [], []>} : vector<64x128xbf16>, vector<128x128xbf16>, vector<64x128xf32> -> vector<64x128xf32>
    %79 = vector.extract_strided_slice %38 {offsets = [0, 1, 2, 0], sizes = [1, 8, 8, 128], strides = [1, 1, 1, 1]} : vector<1x10x10x128xbf16> to vector<1x8x8x128xbf16>
    %80 = vector.shape_cast %79 : vector<1x8x8x128xbf16> to vector<64x128xbf16>
    %c1_65 = arith.constant 1 : index
    %c1_66 = arith.constant 1 : index
    %c0_67 = arith.constant 0 : index
    %c0_68 = arith.constant 0 : index
    %81 = vector.load %arg3[%c1_65, %c1_66, %c0_67, %c0_68] : memref<4x4x128x128xbf16, #tpu.memory_space<vmem>>, vector<1x1x128x128xbf16>
    %82 = vector.shape_cast %81 : vector<1x1x128x128xbf16> to vector<128x128xbf16>
    %cst_69 = arith.constant dense<0.000000e+00> : vector<64x128xf32>
    %83 = tpu.matmul %80, %82, %cst_69 {dimension_numbers = #tpu.dot_dimension_numbers<[1], [0], [0], [1], [0, 0, 1, 1], [], []>} : vector<64x128xbf16>, vector<128x128xbf16>, vector<64x128xf32> -> vector<64x128xf32>
    %84 = arith.addf %78, %83 : vector<64x128xf32>
    %85 = vector.extract_strided_slice %38 {offsets = [0, 0, 1, 0], sizes = [1, 8, 8, 128], strides = [1, 1, 1, 1]} : vector<1x10x10x128xbf16> to vector<1x8x8x128xbf16>
    %86 = vector.shape_cast %85 : vector<1x8x8x128xbf16> to vector<64x128xbf16>
    %c1_70 = arith.constant 1 : index
    %c2_71 = arith.constant 2 : index
    %c0_72 = arith.constant 0 : index
    %c0_73 = arith.constant 0 : index
    %87 = vector.load %arg3[%c1_70, %c2_71, %c0_72, %c0_73] : memref<4x4x128x128xbf16, #tpu.memory_space<vmem>>, vector<1x1x128x128xbf16>
    %88 = vector.shape_cast %87 : vector<1x1x128x128xbf16> to vector<128x128xbf16>
    %cst_74 = arith.constant dense<0.000000e+00> : vector<64x128xf32>
    %89 = tpu.matmul %86, %88, %cst_74 {dimension_numbers = #tpu.dot_dimension_numbers<[1], [0], [0], [1], [0, 0, 1, 1], [], []>} : vector<64x128xbf16>, vector<128x128xbf16>, vector<64x128xf32> -> vector<64x128xf32>
    %90 = arith.addf %84, %89 : vector<64x128xf32>
    %91 = vector.extract_strided_slice %38 {offsets = [0, 0, 2, 0], sizes = [1, 8, 8, 128], strides = [1, 1, 1, 1]} : vector<1x10x10x128xbf16> to vector<1x8x8x128xbf16>
    %92 = vector.shape_cast %91 : vector<1x8x8x128xbf16> to vector<64x128xbf16>
    %c1_75 = arith.constant 1 : index
    %c3_76 = arith.constant 3 : index
    %c0_77 = arith.constant 0 : index
    %c0_78 = arith.constant 0 : index
    %93 = vector.load %arg3[%c1_75, %c3_76, %c0_77, %c0_78] : memref<4x4x128x128xbf16, #tpu.memory_space<vmem>>, vector<1x1x128x128xbf16>
    %94 = vector.shape_cast %93 : vector<1x1x128x128xbf16> to vector<128x128xbf16>
    %cst_79 = arith.constant dense<0.000000e+00> : vector<64x128xf32>
    %95 = tpu.matmul %92, %94, %cst_79 {dimension_numbers = #tpu.dot_dimension_numbers<[1], [0], [0], [1], [0, 0, 1, 1], [], []>} : vector<64x128xbf16>, vector<128x128xbf16>, vector<64x128xf32> -> vector<64x128xf32>
    %96 = arith.addf %90, %95 : vector<64x128xf32>
    %cst_80 = arith.constant dense<0.000000e+00> : vector<128xf32>
    %97 = vector.multi_reduction <add>, %96, %cst_80 [0] : vector<64x128xf32> to vector<128xf32>
    %98 = vector.shape_cast %97 : vector<128xf32> to vector<1x128xf32>
    %99 = arith.addf %66, %98 : vector<1x128xf32>
    %100 = arith.mulf %96, %96 : vector<64x128xf32>
    %cst_81 = arith.constant dense<0.000000e+00> : vector<128xf32>
    %101 = vector.multi_reduction <add>, %100, %cst_81 [0] : vector<64x128xf32> to vector<128xf32>
    %102 = vector.shape_cast %101 : vector<128xf32> to vector<1x128xf32>
    %103 = arith.addf %70, %102 : vector<1x128xf32>
    %104 = vector.shape_cast %96 : vector<64x128xf32> to vector<1x8x8x128xf32>
    %105 = arith.truncf %104 : vector<1x8x8x128xf32> to vector<1x8x8x128xbf16>
    %c1_82 = arith.constant 1 : index
    %c0_83 = arith.constant 0 : index
    %c0_84 = arith.constant 0 : index
    %c0_85 = arith.constant 0 : index
    %c0_86 = arith.constant 0 : index
    %106 = vector.load %arg4[%c1_82, %c0_83, %c0_84, %c0_85, %c0_86] : memref<4x1x8x8x128xbf16, #tpu.memory_space<vmem>>, vector<1x1x8x8x128xbf16>
    %107 = vector.shape_cast %106 : vector<1x1x8x8x128xbf16> to vector<1x8x8x128xbf16>
    %108 = vector.shape_cast %105 : vector<1x8x8x128xbf16> to vector<1x1x8x8x128xbf16>
    tpu.vector_store %arg4[%c1_82, %c0_83, %c0_84, %c0_85, %c0_86], %108 {strides = array<i32>} : memref<4x1x8x8x128xbf16, #tpu.memory_space<vmem>>, vector<1x1x8x8x128xbf16>,
    %c2_87 = arith.constant 2 : index
    %c0_88 = arith.constant 0 : index
    %c0_89 = arith.constant 0 : index
    %c0_90 = arith.constant 0 : index
    %109 = vector.load %arg3[%c2_87, %c0_88, %c0_89, %c0_90] : memref<4x4x128x128xbf16, #tpu.memory_space<vmem>>, vector<1x1x128x128xbf16>
    %110 = vector.shape_cast %109 : vector<1x1x128x128xbf16> to vector<128x128xbf16>
    %cst_91 = arith.constant dense<0.000000e+00> : vector<64x128xf32>
    %111 = tpu.matmul %40, %110, %cst_91 {dimension_numbers = #tpu.dot_dimension_numbers<[1], [0], [0], [1], [0, 0, 1, 1], [], []>} : vector<64x128xbf16>, vector<128x128xbf16>, vector<64x128xf32> -> vector<64x128xf32>
    %112 = vector.extract_strided_slice %38 {offsets = [0, 1, 0, 0], sizes = [1, 8, 8, 128], strides = [1, 1, 1, 1]} : vector<1x10x10x128xbf16> to vector<1x8x8x128xbf16>
    %113 = vector.shape_cast %112 : vector<1x8x8x128xbf16> to vector<64x128xbf16>
    %c2_92 = arith.constant 2 : index
    %c1_93 = arith.constant 1 : index
    %c0_94 = arith.constant 0 : index
    %c0_95 = arith.constant 0 : index
    %114 = vector.load %arg3[%c2_92, %c1_93, %c0_94, %c0_95] : memref<4x4x128x128xbf16, #tpu.memory_space<vmem>>, vector<1x1x128x128xbf16>
    %115 = vector.shape_cast %114 : vector<1x1x128x128xbf16> to vector<128x128xbf16>
    %cst_96 = arith.constant dense<0.000000e+00> : vector<64x128xf32>
    %116 = tpu.matmul %113, %115, %cst_96 {dimension_numbers = #tpu.dot_dimension_numbers<[1], [0], [0], [1], [0, 0, 1, 1], [], []>} : vector<64x128xbf16>, vector<128x128xbf16>, vector<64x128xf32> -> vector<64x128xf32>
    %117 = arith.addf %111, %116 : vector<64x128xf32>
    %118 = vector.extract_strided_slice %38 {offsets = [0, 2, 1, 0], sizes = [1, 8, 8, 128], strides = [1, 1, 1, 1]} : vector<1x10x10x128xbf16> to vector<1x8x8x128xbf16>
    %119 = vector.shape_cast %118 : vector<1x8x8x128xbf16> to vector<64x128xbf16>
    %c2_97 = arith.constant 2 : index
    %c2_98 = arith.constant 2 : index
    %c0_99 = arith.constant 0 : index
    %c0_100 = arith.constant 0 : index
    %120 = vector.load %arg3[%c2_97, %c2_98, %c0_99, %c0_100] : memref<4x4x128x128xbf16, #tpu.memory_space<vmem>>, vector<1x1x128x128xbf16>
    %121 = vector.shape_cast %120 : vector<1x1x128x128xbf16> to vector<128x128xbf16>
    %cst_101 = arith.constant dense<0.000000e+00> : vector<64x128xf32>
    %122 = tpu.matmul %119, %121, %cst_101 {dimension_numbers = #tpu.dot_dimension_numbers<[1], [0], [0], [1], [0, 0, 1, 1], [], []>} : vector<64x128xbf16>, vector<128x128xbf16>, vector<64x128xf32> -> vector<64x128xf32>
    %123 = arith.addf %117, %122 : vector<64x128xf32>
    %124 = vector.extract_strided_slice %38 {offsets = [0, 2, 0, 0], sizes = [1, 8, 8, 128], strides = [1, 1, 1, 1]} : vector<1x10x10x128xbf16> to vector<1x8x8x128xbf16>
    %125 = vector.shape_cast %124 : vector<1x8x8x128xbf16> to vector<64x128xbf16>
    %c2_102 = arith.constant 2 : index
    %c3_103 = arith.constant 3 : index
    %c0_104 = arith.constant 0 : index
    %c0_105 = arith.constant 0 : index
    %126 = vector.load %arg3[%c2_102, %c3_103, %c0_104, %c0_105] : memref<4x4x128x128xbf16, #tpu.memory_space<vmem>>, vector<1x1x128x128xbf16>
    %127 = vector.shape_cast %126 : vector<1x1x128x128xbf16> to vector<128x128xbf16>
    %cst_106 = arith.constant dense<0.000000e+00> : vector<64x128xf32>
    %128 = tpu.matmul %125, %127, %cst_106 {dimension_numbers = #tpu.dot_dimension_numbers<[1], [0], [0], [1], [0, 0, 1, 1], [], []>} : vector<64x128xbf16>, vector<128x128xbf16>, vector<64x128xf32> -> vector<64x128xf32>
    %129 = arith.addf %123, %128 : vector<64x128xf32>
    %cst_107 = arith.constant dense<0.000000e+00> : vector<128xf32>
    %130 = vector.multi_reduction <add>, %129, %cst_107 [0] : vector<64x128xf32> to vector<128xf32>
    %131 = vector.shape_cast %130 : vector<128xf32> to vector<1x128xf32>
    %132 = arith.addf %99, %131 : vector<1x128xf32>
    %133 = arith.mulf %129, %129 : vector<64x128xf32>
    %cst_108 = arith.constant dense<0.000000e+00> : vector<128xf32>
    %134 = vector.multi_reduction <add>, %133, %cst_108 [0] : vector<64x128xf32> to vector<128xf32>
    %135 = vector.shape_cast %134 : vector<128xf32> to vector<1x128xf32>
    %136 = arith.addf %103, %135 : vector<1x128xf32>
    %137 = vector.shape_cast %129 : vector<64x128xf32> to vector<1x8x8x128xf32>
    %138 = arith.truncf %137 : vector<1x8x8x128xf32> to vector<1x8x8x128xbf16>
    %c2_109 = arith.constant 2 : index
    %c0_110 = arith.constant 0 : index
    %c0_111 = arith.constant 0 : index
    %c0_112 = arith.constant 0 : index
    %c0_113 = arith.constant 0 : index
    %139 = vector.load %arg4[%c2_109, %c0_110, %c0_111, %c0_112, %c0_113] : memref<4x1x8x8x128xbf16, #tpu.memory_space<vmem>>, vector<1x1x8x8x128xbf16>
    %140 = vector.shape_cast %139 : vector<1x1x8x8x128xbf16> to vector<1x8x8x128xbf16>
    %141 = vector.shape_cast %138 : vector<1x8x8x128xbf16> to vector<1x1x8x8x128xbf16>
    tpu.vector_store %arg4[%c2_109, %c0_110, %c0_111, %c0_112, %c0_113], %141 {strides = array<i32>} : memref<4x1x8x8x128xbf16, #tpu.memory_space<vmem>>, vector<1x1x8x8x128xbf16>,
    %c3_114 = arith.constant 3 : index
    %c0_115 = arith.constant 0 : index
    %c0_116 = arith.constant 0 : index
    %c0_117 = arith.constant 0 : index
    %142 = vector.load %arg3[%c3_114, %c0_115, %c0_116, %c0_117] : memref<4x4x128x128xbf16, #tpu.memory_space<vmem>>, vector<1x1x128x128xbf16>
    %143 = vector.shape_cast %142 : vector<1x1x128x128xbf16> to vector<128x128xbf16>
    %cst_118 = arith.constant dense<0.000000e+00> : vector<64x128xf32>
    %144 = tpu.matmul %40, %143, %cst_118 {dimension_numbers = #tpu.dot_dimension_numbers<[1], [0], [0], [1], [0, 0, 1, 1], [], []>} : vector<64x128xbf16>, vector<128x128xbf16>, vector<64x128xf32> -> vector<64x128xf32>
    %145 = vector.extract_strided_slice %38 {offsets = [0, 1, 2, 0], sizes = [1, 8, 8, 128], strides = [1, 1, 1, 1]} : vector<1x10x10x128xbf16> to vector<1x8x8x128xbf16>
    %146 = vector.shape_cast %145 : vector<1x8x8x128xbf16> to vector<64x128xbf16>
    %c3_119 = arith.constant 3 : index
    %c1_120 = arith.constant 1 : index
    %c0_121 = arith.constant 0 : index
    %c0_122 = arith.constant 0 : index
    %147 = vector.load %arg3[%c3_119, %c1_120, %c0_121, %c0_122] : memref<4x4x128x128xbf16, #tpu.memory_space<vmem>>, vector<1x1x128x128xbf16>
    %148 = vector.shape_cast %147 : vector<1x1x128x128xbf16> to vector<128x128xbf16>
    %cst_123 = arith.constant dense<0.000000e+00> : vector<64x128xf32>
    %149 = tpu.matmul %146, %148, %cst_123 {dimension_numbers = #tpu.dot_dimension_numbers<[1], [0], [0], [1], [0, 0, 1, 1], [], []>} : vector<64x128xbf16>, vector<128x128xbf16>, vector<64x128xf32> -> vector<64x128xf32>
    %150 = arith.addf %144, %149 : vector<64x128xf32>
    %151 = vector.extract_strided_slice %38 {offsets = [0, 2, 1, 0], sizes = [1, 8, 8, 128], strides = [1, 1, 1, 1]} : vector<1x10x10x128xbf16> to vector<1x8x8x128xbf16>
    %152 = vector.shape_cast %151 : vector<1x8x8x128xbf16> to vector<64x128xbf16>
    %c3_124 = arith.constant 3 : index
    %c2_125 = arith.constant 2 : index
    %c0_126 = arith.constant 0 : index
    %c0_127 = arith.constant 0 : index
    %153 = vector.load %arg3[%c3_124, %c2_125, %c0_126, %c0_127] : memref<4x4x128x128xbf16, #tpu.memory_space<vmem>>, vector<1x1x128x128xbf16>
    %154 = vector.shape_cast %153 : vector<1x1x128x128xbf16> to vector<128x128xbf16>
    %cst_128 = arith.constant dense<0.000000e+00> : vector<64x128xf32>
    %155 = tpu.matmul %152, %154, %cst_128 {dimension_numbers = #tpu.dot_dimension_numbers<[1], [0], [0], [1], [0, 0, 1, 1], [], []>} : vector<64x128xbf16>, vector<128x128xbf16>, vector<64x128xf32> -> vector<64x128xf32>
    %156 = arith.addf %150, %155 : vector<64x128xf32>
    %157 = vector.extract_strided_slice %38 {offsets = [0, 2, 2, 0], sizes = [1, 8, 8, 128], strides = [1, 1, 1, 1]} : vector<1x10x10x128xbf16> to vector<1x8x8x128xbf16>
    %158 = vector.shape_cast %157 : vector<1x8x8x128xbf16> to vector<64x128xbf16>
    %c3_129 = arith.constant 3 : index
    %c3_130 = arith.constant 3 : index
    %c0_131 = arith.constant 0 : index
    %c0_132 = arith.constant 0 : index
    %159 = vector.load %arg3[%c3_129, %c3_130, %c0_131, %c0_132] : memref<4x4x128x128xbf16, #tpu.memory_space<vmem>>, vector<1x1x128x128xbf16>
    %160 = vector.shape_cast %159 : vector<1x1x128x128xbf16> to vector<128x128xbf16>
    %cst_133 = arith.constant dense<0.000000e+00> : vector<64x128xf32>
    %161 = tpu.matmul %158, %160, %cst_133 {dimension_numbers = #tpu.dot_dimension_numbers<[1], [0], [0], [1], [0, 0, 1, 1], [], []>} : vector<64x128xbf16>, vector<128x128xbf16>, vector<64x128xf32> -> vector<64x128xf32>
    %162 = arith.addf %156, %161 : vector<64x128xf32>
    %cst_134 = arith.constant dense<0.000000e+00> : vector<128xf32>
    %163 = vector.multi_reduction <add>, %162, %cst_134 [0] : vector<64x128xf32> to vector<128xf32>
    %164 = vector.shape_cast %163 : vector<128xf32> to vector<1x128xf32>
    %165 = arith.addf %132, %164 : vector<1x128xf32>
    %166 = arith.mulf %162, %162 : vector<64x128xf32>
    %cst_135 = arith.constant dense<0.000000e+00> : vector<128xf32>
    %167 = vector.multi_reduction <add>, %166, %cst_135 [0] : vector<64x128xf32> to vector<128xf32>
    %168 = vector.shape_cast %167 : vector<128xf32> to vector<1x128xf32>
    %169 = arith.addf %136, %168 : vector<1x128xf32>
    %170 = vector.shape_cast %162 : vector<64x128xf32> to vector<1x8x8x128xf32>
    %171 = arith.truncf %170 : vector<1x8x8x128xf32> to vector<1x8x8x128xbf16>
    %c3_136 = arith.constant 3 : index
    %c0_137 = arith.constant 0 : index
    %c0_138 = arith.constant 0 : index
    %c0_139 = arith.constant 0 : index
    %c0_140 = arith.constant 0 : index
    %172 = vector.load %arg4[%c3_136, %c0_137, %c0_138, %c0_139, %c0_140] : memref<4x1x8x8x128xbf16, #tpu.memory_space<vmem>>, vector<1x1x8x8x128xbf16>
    %173 = vector.shape_cast %172 : vector<1x1x8x8x128xbf16> to vector<1x8x8x128xbf16>
    %174 = vector.shape_cast %171 : vector<1x8x8x128xbf16> to vector<1x1x8x8x128xbf16>
    tpu.vector_store %arg4[%c3_136, %c0_137, %c0_138, %c0_139, %c0_140], %174 {strides = array<i32>} : memref<4x1x8x8x128xbf16, #tpu.memory_space<vmem>>, vector<1x1x8x8x128xbf16>,
    %175 = tpu.concatenate %165, %169 in 0 : vector<1x128xf32>, vector<1x128xf32> -> vector<2x128xf32>
    %c0_141 = arith.constant 0 : index
    %c0_142 = arith.constant 0 : index
    %c0_143 = arith.constant 0 : index
    %176 = vector.load %arg5[%c0_141, %c0_142, %c0_143] : memref<1x2x128xf32, #tpu.memory_space<vmem>>, vector<1x2x128xf32>
    %177 = vector.shape_cast %176 : vector<1x2x128xf32> to vector<2x128xf32>
    %178 = vector.shape_cast %175 : vector<2x128xf32> to vector<1x2x128xf32>
    tpu.vector_store %arg5[%c0_141, %c0_142, %c0_143], %178 {strides = array<i32>} : memref<1x2x128xf32, #tpu.memory_space<vmem>>, vector<1x2x128xf32>,
    return
  }
  func.func @transform_0(%arg0: i32) -> (i32, i32, i32, i32) {
    %c0_i32 = arith.constant 0 : i32
    %c0_i32_0 = arith.constant 0 : i32
    %c0_i32_1 = arith.constant 0 : i32
    %c0_i32_2 = arith.constant 0 : i32
    return %arg0, %c0_i32, %c0_i32_0, %c0_i32_1 : i32, i32, i32, i32
  }
  func.func @transform_1(%arg0: i32) -> (i32, i32, i32) {
    %c0_i32 = arith.constant 0 : i32
    %c0_i32_0 = arith.constant 0 : i32
    %c0_i32_1 = arith.constant 0 : i32
    %c0_i32_2 = arith.constant 0 : i32
    return %c0_i32, %c0_i32_0, %c0_i32_1 : i32, i32, i32
  }
  func.func @transform_2(%arg0: i32) -> (i32, i32, i32, i32) {
    %c0_i32 = arith.constant 0 : i32
    %c0_i32_0 = arith.constant 0 : i32
    %c0_i32_1 = arith.constant 0 : i32
    %c0_i32_2 = arith.constant 0 : i32
    %c0_i32_3 = arith.constant 0 : i32
    return %c0_i32, %c0_i32_0, %c0_i32_1, %c0_i32_2 : i32, i32, i32, i32
  }
  func.func @transform_3(%arg0: i32) -> (i32, i32, i32, i32, i32) {
    %c0_i32 = arith.constant 0 : i32
    %c0_i32_0 = arith.constant 0 : i32
    %c0_i32_1 = arith.constant 0 : i32
    %c0_i32_2 = arith.constant 0 : i32
    %c0_i32_3 = arith.constant 0 : i32
    return %c0_i32, %arg0, %c0_i32_0, %c0_i32_1, %c0_i32_2 : i32, i32, i32, i32, i32
  }
  func.func @transform_4(%arg0: i32) -> (i32, i32, i32) {
    %c0_i32 = arith.constant 0 : i32
    %c0_i32_0 = arith.constant 0 : i32
    %c0_i32_1 = arith.constant 0 : i32
    return %arg0, %c0_i32, %c0_i32_0 : i32, i32, i32
  }
}

</mosaic_0001>

<llo_original>
// kernel: unet_innermost_forward.3
$region0: #{unet_innermost_forward.3}
  #allocation0 [shape = 'u32[]', space=smem, size = 0x4, offset = 0x4, fixed_abs, tag = 'smem constant byte address 0x4 - core index']
  #allocation1 [shape = 'u32[144,128]{1,0:T(1,128)}', space=vmem, size = 0x12000, scoped, tag = 'internal scratch']
  %s0 = inlined_call_operand.vmem [shape: bf16[512,128], index: 0, kind: input, shape index: {}]
  %s1 = inlined_call_operand.vmem [shape: f32[2,128], index: 1, kind: input, shape index: {}]
  %s2 = inlined_call_operand.vmem [shape: f32[1,128], index: 2, kind: input, shape index: {}]
  %s3 = inlined_call_operand.vmem [shape: f32[1,128], index: 3, kind: input, shape index: {}]
  %s4 = inlined_call_operand.vmem [shape: f32[512,128], index: 4, kind: output, shape index: {}]
  %s5 = sld [smem:[#allocation0]]
  $region49: #{unet_innermost_forward.3} parent=0
    _
  %s7 = ssub.s32 1, %s5
  %s8 = scalar_select 0, %s7, %s5
  loop: start=0, step=1, limit=4
  $region2: #{unet_innermost_forward.3} parent=0 // loop_pre_header
    _
  $region3: #{unet_innermost_forward.3} parent=0 // loop_header
    %s10 = sphi 0, %s14
    %p11 = scmp.ge.s32.totalorder %s10, 4
    %s20 = sphi 0, %s22
    %s23 = sphi 0, %s20
    %s24 = sphi 0, %s23
    %s40 = sphi 0, %s24
    %s44 = sphi 0, %s44
    %s46 = sphi 0, %s44
    %s47 = sphi 0, %s46
    %s61 = sphi 0, %s47
    %s65 = sphi 0, %s65
    %s67 = sphi 0, %s65
    %s68 = sphi 0, %s67
    %s82 = sphi 0, %s68
    %s86 = sphi 0, %s86
    %s88 = sphi 0, %s86
    %s89 = sphi 0, %s88
    %s103 = sphi 0, %s89
    %s109 = sphi 0, %s111
    %s112 = sphi 0, %s109
    %s113 = sphi 0, %s112
    %s129 = sphi 0, %s113
  $region4: #{unet_innermost_forward.3} parent=0 // loop_header_branch
    %13 = sbr.rel (%p11) target = $region8
  $region5: #{unet_innermost_forward.3} parent=0 // loop_body
    %s15 = ssub.s32 %s10, 1
    %s16 = ssub.s32 %s10, 2
    %s17 = sadd.s32 %s10, 1
    %s18 = ssub.s32 %s10, %s17
    %p19 = scmp.eq.s32.totalorder %s18, 0
    %s21 = sadd.s32 %s20, 1
    %s22 = scalar_select %p19, %s20, %s21
    %p25 = pneg %p19
    %p26 = scmp.eq.s32.totalorder %s10, 1
    %p27 = por %p25, %p26
    %p28 = scmp.ne.s32.totalorder %s20, %s23
    %p29 = scmp.eq.s32.totalorder %s10, 0
    %p30 = por %p28, %p29
    %p31 = scmp.ne.s32.totalorder %s20, %s23
    %p32 = scmp.eq.s32.totalorder %s15, 1
    %p33 = por %p31, %p32
    %p34 = scmp.ne.s32.totalorder %s23, %s24
    %p35 = scmp.eq.s32.totalorder %s15, 0
    %p36 = por %p34, %p35
    %p37 = scmp.ne.s32.totalorder %s23, %s24
    %p38 = scmp.eq.s32.totalorder %s16, 1
    %p39 = por %p37, %p38
    %p41 = scmp.ne.s32.totalorder %s24, %s40
    %p42 = scmp.eq.s32.totalorder %s16, 0
    %p43 = por %p41, %p42
    %s45 = sadd.s32 %s44, 1
    %p48 = scmp.eq.s32.totalorder %s10, 1
    %p49 = scmp.ne.s32.totalorder %s44, %s46
    %p50 = scmp.eq.s32.totalorder %s10, 0
    %p51 = por %p49, %p50
    %p52 = scmp.ne.s32.totalorder %s44, %s46
    %p53 = scmp.eq.s32.totalorder %s15, 1
    %p54 = por %p52, %p53
    %p55 = scmp.ne.s32.totalorder %s46, %s47
    %p56 = scmp.eq.s32.totalorder %s15, 0
    %p57 = por %p55, %p56
    %p58 = scmp.ne.s32.totalorder %s46, %s47
    %p59 = scmp.eq.s32.totalorder %s16, 1
    %p60 = por %p58, %p59
    %p62 = scmp.ne.s32.totalorder %s47, %s61
    %p63 = scmp.eq.s32.totalorder %s16, 0
    %p64 = por %p62, %p63
    %s66 = sadd.s32 %s65, 1
    %p69 = scmp.eq.s32.totalorder %s10, 1
    %p70 = scmp.ne.s32.totalorder %s65, %s67
    %p71 = scmp.eq.s32.totalorder %s10, 0
    %p72 = por %p70, %p71
    %p73 = scmp.ne.s32.totalorder %s65, %s67
    %p74 = scmp.eq.s32.totalorder %s15, 1
    %p75 = por %p73, %p74
    %p76 = scmp.ne.s32.totalorder %s67, %s68
    %p77 = scmp.eq.s32.totalorder %s15, 0
    %p78 = por %p76, %p77
    %p79 = scmp.ne.s32.totalorder %s67, %s68
    %p80 = scmp.eq.s32.totalorder %s16, 1
    %p81 = por %p79, %p80
    %p83 = scmp.ne.s32.totalorder %s68, %s82
    %p84 = scmp.eq.s32.totalorder %s16, 0
    %p85 = por %p83, %p84
    %s87 = sadd.s32 %s86, 1
    %p90 = scmp.eq.s32.totalorder %s10, 1
    %p91 = scmp.ne.s32.totalorder %s86, %s88
    %p92 = scmp.eq.s32.totalorder %s10, 0
    %p93 = por %p91, %p92
    %p94 = scmp.ne.s32.totalorder %s86, %s88
    %p95 = scmp.eq.s32.totalorder %s15, 1
    %p96 = por %p94, %p95
    %p97 = scmp.ne.s32.totalorder %s88, %s89
    %p98 = scmp.eq.s32.totalorder %s15, 0
    %p99 = por %p97, %p98
    %p100 = scmp.ne.s32.totalorder %s88, %s89
    %p101 = scmp.eq.s32.totalorder %s16, 1
    %p102 = por %p100, %p101
    %p104 = scmp.ne.s32.totalorder %s89, %s103
    %p105 = scmp.eq.s32.totalorder %s16, 0
    %p106 = por %p104, %p105
    %s107 = ssub.s32 %s10, %s17
    %p108 = scmp.eq.s32.totalorder %s107, 0
    %s110 = sadd.s32 %s109, 1
    %s111 = scalar_select %p108, %s109, %s110
    %p114 = pneg %p108
    %p115 = scmp.eq.s32.totalorder %s10, 1
    %p116 = por %p114, %p115
    %p117 = scmp.ne.s32.totalorder %s109, %s112
    %p118 = scmp.eq.s32.totalorder %s10, 0
    %p119 = por %p117, %p118
    %p120 = scmp.ne.s32.totalorder %s109, %s112
    %p121 = scmp.eq.s32.totalorder %s15, 1
    %p122 = por %p120, %p121
    %p123 = scmp.ne.s32.totalorder %s112, %s113
    %p124 = scmp.eq.s32.totalorder %s15, 0
    %p125 = por %p123, %p124
    %p126 = scmp.ne.s32.totalorder %s112, %s113
    %p127 = scmp.eq.s32.totalorder %s16, 1
    %p128 = por %p126, %p127
    %p130 = scmp.ne.s32.totalorder %s113, %s129
    %p131 = scmp.eq.s32.totalorder %s16, 0
    %p132 = por %p130, %p131
    %p133 = scmp.le.s32.totalorder 1, %s10
    %p134 = scmp.lt.s32.totalorder %s10, 3
    %p135 = pnand %p133, %p134
    %p136 = pneg %p135
    // Predicated region
    $region9: #{unet_innermost_forward.3} parent=5 // pred_check
      _
    $region10: #{unet_innermost_forward.3} parent=5 // pred_check_branch
      %138 = sbr.rel (%p135) target = $region12
    $region11: #{unet_innermost_forward.3} parent=5 // pred_region
      %s139 = ssub.s32 %s10, 1
      // Predicated region
      $region13: #{unet_innermost_forward.3} parent=11 // pred_check
        %p140 = pneg %p57
      $region14: #{unet_innermost_forward.3} parent=11 // pred_check_branch
        %142 = sbr.rel (%p140) target = $region16
      $region15: #{unet_innermost_forward.3} parent=11 // pred_region
        _
      $region16: #{unet_innermost_forward.3} parent=11 // pred_fallthru
        _
      // Predicated region
      $region17: #{unet_innermost_forward.3} parent=11 // pred_check
        %p143 = pneg %p78
      $region18: #{unet_innermost_forward.3} parent=11 // pred_check_branch
        %145 = sbr.rel (%p143) target = $region20
      $region19: #{unet_innermost_forward.3} parent=11 // pred_region
        _
      $region20: #{unet_innermost_forward.3} parent=11 // pred_fallthru
        _
      // Predicated region
      $region21: #{unet_innermost_forward.3} parent=11 // pred_check
        %p146 = pneg %p99
      $region22: #{unet_innermost_forward.3} parent=11 // pred_check_branch
        %148 = sbr.rel (%p146) target = $region24
      $region23: #{unet_innermost_forward.3} parent=11 // pred_region
        _
      $region24: #{unet_innermost_forward.3} parent=11 // pred_fallthru
        _
    $region12: #{unet_innermost_forward.3} parent=5 // pred_fallthru
      _
    %p149 = scmp.lt.s32.totalorder %s10, 2
    // Predicated region
    $region25: #{unet_innermost_forward.3} parent=5 // pred_check
      %p150 = pneg %p149
    $region26: #{unet_innermost_forward.3} parent=5 // pred_check_branch
      %152 = sbr.rel (%p150) target = $region28
    $region27: #{unet_innermost_forward.3} parent=5 // pred_region
      // Predicated region
      $region29: #{unet_innermost_forward.3} parent=27 // pred_check
        %p153 = pneg %p30
      $region30: #{unet_innermost_forward.3} parent=27 // pred_check_branch
        %155 = sbr.rel (%p153) target = $region32
      $region31: #{unet_innermost_forward.3} parent=27 // pred_region
        %s156 = smul.u32 32, %s10
        %p157 = scmp.lt.s32.totalorder %s156, 63
        %s158 = scalar_select %p157, %s156, 63
        %s159 = smul.addr %s158, 4
        %s160 = scalar_lea.vmem %s0, %s159
        %s161 = smul.u32 32, %s10
      $region32: #{unet_innermost_forward.3} parent=27 // pred_fallthru
        _
    $region28: #{unet_innermost_forward.3} parent=5 // pred_fallthru
      _
    %p162 = scmp.le.s32.totalorder 1, %s10
    %p163 = scmp.lt.s32.totalorder %s10, 3
    %p164 = pnand %p162, %p163
    %p165 = pneg %p164
    // Predicated region
    $region33: #{unet_innermost_forward.3} parent=5 // pred_check
      _
    $region34: #{unet_innermost_forward.3} parent=5 // pred_check_branch
      %167 = sbr.rel (%p164) target = $region36
    $region35: #{unet_innermost_forward.3} parent=5 // pred_region
      %s168 = ssub.s32 %s10, 1
      %s169 = smul.u32 32, %s15
      %p170 = scmp.lt.s32.totalorder %s169, 63
      %s171 = scalar_select %p170, %s169, 63
      %s172 = smul.addr %s171, 4
      %s173 = scalar_lea.vmem %s0, %s172
      %p174 = pneg %p36
      %p175 = pneg %p33
      %p176 = pneg %p57
      %p177 = pneg %p54
      %p178 = pneg %p78
      %p179 = pneg %p75
      %p180 = pneg %p99
      %p181 = pneg %p96
      %p182 = pneg %p125
      %p183 = pneg %p122
      %s184 = smul.u32 32, %s15
      %p185 = scmp.lt.s32.totalorder %s184, 63
      %s186 = scalar_select %p185, %s184, 63
      %s187 = smul.addr %s186, 8
      %s188 = scalar_lea.vmem %s4, %s187
      %s189 = smul.u32 32, %s15
      %p190 = scmp.lt.s32.totalorder %s189, 63
      %s191 = scalar_select %p190, %s189, 63
      %s192 = smul.addr %s191, 4
      %s193 = scalar_lea.vmem %s0, %s192
      %s194 = smul.u32 32, %s15
      %s195 = smul.u32 32, %s15
      %p196 = scmp.lt.s32.totalorder %s195, 63
      %s197 = scalar_select %p196, %s195, 63
      %s198 = smul.addr %s197, 8
      %s199 = scalar_lea.vmem %s4, %s198
      %s200 = smul.u32 32, %s15
      %v201 = vld [vmem:[%s1] sm:$0x3]
      %v202 = vmul.f32 %v201, 0.001953125
      %v203 = vmul.f32 %v202, %v202
      %v205 = vrot.slane %v203, 7
      %v207 = vsub.f32 %v202, %v205
      %v208 = vmax.f32 %v207, 0.0
      %v209 = vld [vmem:[%s2] sm:$0x1]
      %v210 = vadd.f32 %v208, 1e-05
      %v211 = vrsqrt.pop %v210
      %v214 = vunpack.c.l.s4 1966171168
      %v215 = vunpack.c.0.s8 %v214
      %v216 = vlaneseq
      %v217 = vshrl.u32 %v216, 7
      %v218 = vsub.s32 %v215, %v217
      %v219 = vrot.slane %v211, %v218
      %v220 = vcombine.high %v219, %v219
      %v222 = vunpack.c.l.s4 1966171168
      %v223 = vunpack.c.0.s8 %v222
      %v224 = vlaneseq
      %v225 = vshrl.u32 %v224, 7
      %v226 = vsub.s32 %v223, %v225
      %v227 = vrot.slane %v220, %v226
      %v229 = vmul.f32 %v209, %v227
      %v230 = vld [vmem:[%s3] sm:$0x1]
      %v231 = vmul.f32 %v202, %v229
      %v232 = vsub.f32 %v230, %v231
      %v233 = vld [vmem:[%s193] sm:$0xf]
      %v234 = vld [vmem:[%s193 + $0x4] sm:$0xf]
      %v235 = vld [vmem:[%s193 + $0x8] sm:$0xf]
      %v236 = vld [vmem:[%s193 + $0xc] sm:$0xf]
      %v237 = vld [vmem:[%s193 + $0x10] sm:$0xf]
      %v238 = vld [vmem:[%s193 + $0x14] sm:$0xf]
      %v239 = vld [vmem:[%s193 + $0x18] sm:$0xf]
      %v240 = vld [vmem:[%s193 + $0x1c] sm:$0xf]
      %v241 = vld [vmem:[%s193 + $0x20] sm:$0xf]
      %v242 = vld [vmem:[%s193 + $0x24] sm:$0xf]
      %v243 = vld [vmem:[%s193 + $0x28] sm:$0xf]
      %v244 = vld [vmem:[%s193 + $0x2c] sm:$0xf]
      %v245 = vld [vmem:[%s193 + $0x30] sm:$0xf]
      %v246 = vld [vmem:[%s193 + $0x34] sm:$0xf]
      %v247 = vld [vmem:[%s193 + $0x38] sm:$0xf]
      %v248 = vld [vmem:[%s193 + $0x3c] sm:$0xf]
      %v249 = vld [vmem:[%s193 + $0x40] sm:$0xf]
      %v250 = vld [vmem:[%s193 + $0x44] sm:$0xf]
      %v251 = vld [vmem:[%s193 + $0x48] sm:$0xf]
      %v252 = vld [vmem:[%s193 + $0x4c] sm:$0xf]
      %v253 = vld [vmem:[%s193 + $0x50] sm:$0xf]
      %v254 = vld [vmem:[%s193 + $0x54] sm:$0xf]
      %v255 = vld [vmem:[%s193 + $0x58] sm:$0xf]
      %v256 = vld [vmem:[%s193 + $0x5c] sm:$0xf]
      %v257 = vld [vmem:[%s193 + $0x60] sm:$0xf]
      %v258 = vld [vmem:[%s193 + $0x64] sm:$0xf]
      %v259 = vld [vmem:[%s193 + $0x68] sm:$0xf]
      %v260 = vld [vmem:[%s193 + $0x6c] sm:$0xf]
      %v261 = vld [vmem:[%s193 + $0x70] sm:$0xf]
      %v262 = vld [vmem:[%s193 + $0x74] sm:$0xf]
      %v263 = vld [vmem:[%s193 + $0x78] sm:$0xf]
      %v264 = vld [vmem:[%s193 + $0x7c] sm:$0xf]
      %v265 = vunpack.c.l.bf16 %v233
      %v266 = vunpack.c.l.bf16 %v234
      %v267 = vunpack.c.l.bf16 %v235
      %v268 = vunpack.c.l.bf16 %v236
      %v269 = vunpack.c.l.bf16 %v237
      %v270 = vunpack.c.l.bf16 %v238
      %v271 = vunpack.c.l.bf16 %v239
      %v272 = vunpack.c.l.bf16 %v240
      %v273 = vunpack.c.l.bf16 %v241
      %v274 = vunpack.c.l.bf16 %v242
      %v275 = vunpack.c.l.bf16 %v243
      %v276 = vunpack.c.l.bf16 %v244
      %v277 = vunpack.c.l.bf16 %v245
      %v278 = vunpack.c.l.bf16 %v246
      %v279 = vunpack.c.l.bf16 %v247
      %v280 = vunpack.c.l.bf16 %v248
      %v281 = vunpack.c.l.bf16 %v249
      %v282 = vunpack.c.l.bf16 %v250
      %v283 = vunpack.c.l.bf16 %v251
      %v284 = vunpack.c.l.bf16 %v252
      %v285 = vunpack.c.l.bf16 %v253
      %v286 = vunpack.c.l.bf16 %v254
      %v287 = vunpack.c.l.bf16 %v255
      %v288 = vunpack.c.l.bf16 %v256
      %v289 = vunpack.c.l.bf16 %v257
      %v290 = vunpack.c.l.bf16 %v258
      %v291 = vunpack.c.l.bf16 %v259
      %v292 = vunpack.c.l.bf16 %v260
      %v293 = vunpack.c.l.bf16 %v261
      %v294 = vunpack.c.l.bf16 %v262
      %v295 = vunpack.c.l.bf16 %v263
      %v296 = vunpack.c.l.bf16 %v264
      %v298 = vlaneseq
      %v299 = vshrl.u32 %v298, 7
      %v300 = vsub.s32 0, %v299
      %v301 = vrot.slane %v229, %v300
      %v303 = vmul.f32 %v265, %v301
      %v304 = vmul.f32 %v266, %v301
      %v305 = vmul.f32 %v267, %v301
      %v306 = vmul.f32 %v268, %v301
      %v307 = vmul.f32 %v269, %v301
      %v308 = vmul.f32 %v270, %v301
      %v309 = vmul.f32 %v271, %v301
      %v310 = vmul.f32 %v272, %v301
      %v311 = vmul.f32 %v273, %v301
      %v312 = vmul.f32 %v274, %v301
      %v313 = vmul.f32 %v275, %v301
      %v314 = vmul.f32 %v276, %v301
      %v315 = vmul.f32 %v277, %v301
      %v316 = vmul.f32 %v278, %v301
      %v317 = vmul.f32 %v279, %v301
      %v318 = vmul.f32 %v280, %v301
      %v319 = vmul.f32 %v281, %v301
      %v320 = vmul.f32 %v282, %v301
      %v321 = vmul.f32 %v283, %v301
      %v322 = vmul.f32 %v284, %v301
      %v323 = vmul.f32 %v285, %v301
      %v324 = vmul.f32 %v286, %v301
      %v325 = vmul.f32 %v287, %v301
      %v326 = vmul.f32 %v288, %v301
      %v327 = vmul.f32 %v289, %v301
      %v328 = vmul.f32 %v290, %v301
      %v329 = vmul.f32 %v291, %v301
      %v330 = vmul.f32 %v292, %v301
      %v331 = vmul.f32 %v293, %v301
      %v332 = vmul.f32 %v294, %v301
      %v333 = vmul.f32 %v295, %v301
      %v334 = vmul.f32 %v296, %v301
      %v336 = vlaneseq
      %v337 = vshrl.u32 %v336, 7
      %v338 = vsub.s32 0, %v337
      %v339 = vrot.slane %v232, %v338
      %v341 = vadd.f32 %v303, %v339
      %v342 = vadd.f32 %v304, %v339
      %v343 = vadd.f32 %v305, %v339
      %v344 = vadd.f32 %v306, %v339
      %v345 = vadd.f32 %v307, %v339
      %v346 = vadd.f32 %v308, %v339
      %v347 = vadd.f32 %v309, %v339
      %v348 = vadd.f32 %v310, %v339
      %v349 = vadd.f32 %v311, %v339
      %v350 = vadd.f32 %v312, %v339
      %v351 = vadd.f32 %v313, %v339
      %v352 = vadd.f32 %v314, %v339
      %v353 = vadd.f32 %v315, %v339
      %v354 = vadd.f32 %v316, %v339
      %v355 = vadd.f32 %v317, %v339
      %v356 = vadd.f32 %v318, %v339
      %v357 = vadd.f32 %v319, %v339
      %v358 = vadd.f32 %v320, %v339
      %v359 = vadd.f32 %v321, %v339
      %v360 = vadd.f32 %v322, %v339
      %v361 = vadd.f32 %v323, %v339
      %v362 = vadd.f32 %v324, %v339
      %v363 = vadd.f32 %v325, %v339
      %v364 = vadd.f32 %v326, %v339
      %v365 = vadd.f32 %v327, %v339
      %v366 = vadd.f32 %v328, %v339
      %v367 = vadd.f32 %v329, %v339
      %v368 = vadd.f32 %v330, %v339
      %v369 = vadd.f32 %v331, %v339
      %v370 = vadd.f32 %v332, %v339
      %v371 = vadd.f32 %v333, %v339
      %v372 = vadd.f32 %v334, %v339
      %373 = vst [vmem:[%s199] sm:$0xff] %v341
      %374 = vst [vmem:[%s199 + $0x8] sm:$0xff] %v342
      %375 = vst [vmem:[%s199 + $0x10] sm:$0xff] %v343
      %376 = vst [vmem:[%s199 + $0x18] sm:$0xff] %v344
      %377 = vst [vmem:[%s199 + $0x20] sm:$0xff] %v345
      %378 = vst [vmem:[%s199 + $0x28] sm:$0xff] %v346
      %379 = vst [vmem:[%s199 + $0x30] sm:$0xff] %v347
      %380 = vst [vmem:[%s199 + $0x38] sm:$0xff] %v348
      %381 = vst [vmem:[%s199 + $0x40] sm:$0xff] %v349
      %382 = vst [vmem:[%s199 + $0x48] sm:$0xff] %v350
      %383 = vst [vmem:[%s199 + $0x50] sm:$0xff] %v351
      %384 = vst [vmem:[%s199 + $0x58] sm:$0xff] %v352
      %385 = vst [vmem:[%s199 + $0x60] sm:$0xff] %v353
      %386 = vst [vmem:[%s199 + $0x68] sm:$0xff] %v354
      %387 = vst [vmem:[%s199 + $0x70] sm:$0xff] %v355
      %388 = vst [vmem:[%s199 + $0x78] sm:$0xff] %v356
      %389 = vst [vmem:[%s199 + $0x80] sm:$0xff] %v357
      %390 = vst [vmem:[%s199 + $0x88] sm:$0xff] %v358
      %391 = vst [vmem:[%s199 + $0x90] sm:$0xff] %v359
      %392 = vst [vmem:[%s199 + $0x98] sm:$0xff] %v360
      %393 = vst [vmem:[%s199 + $0xa0] sm:$0xff] %v361
      %394 = vst [vmem:[%s199 + $0xa8] sm:$0xff] %v362
      %395 = vst [vmem:[%s199 + $0xb0] sm:$0xff] %v363
      %396 = vst [vmem:[%s199 + $0xb8] sm:$0xff] %v364
      %397 = vst [vmem:[%s199 + $0xc0] sm:$0xff] %v365
      %398 = vst [vmem:[%s199 + $0xc8] sm:$0xff] %v366
      %399 = vst [vmem:[%s199 + $0xd0] sm:$0xff] %v367
      %400 = vst [vmem:[%s199 + $0xd8] sm:$0xff] %v368
      %401 = vst [vmem:[%s199 + $0xe0] sm:$0xff] %v369
      %402 = vst [vmem:[%s199 + $0xe8] sm:$0xff] %v370
      %403 = vst [vmem:[%s199 + $0xf0] sm:$0xff] %v371
      %404 = vst [vmem:[%s199 + $0xf8] sm:$0xff] %v372
      %s405 = smul.u32 32, %s15
      %p406 = scmp.lt.s32.totalorder %s405, 63
      %s407 = scalar_select %p406, %s405, 63
      %s408 = smul.addr %s407, 8
      %s409 = scalar_lea.vmem %s4, %s408
      // Predicated region
      $region37: #{unet_innermost_forward.3} parent=35 // pred_check
        %p410 = pneg %p122
      $region38: #{unet_innermost_forward.3} parent=35 // pred_check_branch
        %412 = sbr.rel (%p410) target = $region40
      $region39: #{unet_innermost_forward.3} parent=35 // pred_region
        %s413 = smul.u32 32, %s15
      $region40: #{unet_innermost_forward.3} parent=35 // pred_fallthru
        _
    $region36: #{unet_innermost_forward.3} parent=5 // pred_fallthru
      _
    %p414 = scmp.le.s32.totalorder 2, %s10
    // Predicated region
    $region41: #{unet_innermost_forward.3} parent=5 // pred_check
      %p415 = pneg %p414
    $region42: #{unet_innermost_forward.3} parent=5 // pred_check_branch
      %417 = sbr.rel (%p415) target = $region44
    $region43: #{unet_innermost_forward.3} parent=5 // pred_region
      %s418 = ssub.s32 %s10, 2
      // Predicated region
      $region45: #{unet_innermost_forward.3} parent=43 // pred_check
        %p419 = pneg %p128
      $region46: #{unet_innermost_forward.3} parent=43 // pred_check_branch
        %421 = sbr.rel (%p419) target = $region48
      $region47: #{unet_innermost_forward.3} parent=43 // pred_region
        %s422 = smul.u32 32, %s16
        %p423 = scmp.lt.s32.totalorder %s422, 63
        %s424 = scalar_select %p423, %s422, 63
        %s425 = smul.addr %s424, 8
        %s426 = scalar_lea.vmem %s4, %s425
      $region48: #{unet_innermost_forward.3} parent=43 // pred_fallthru
        _
    $region44: #{unet_innermost_forward.3} parent=5 // pred_fallthru
      _
  $region6: #{unet_innermost_forward.3} parent=0 // loop_footer
    %s14 = sadd.s32 1, %s10
  $region7: #{unet_innermost_forward.3} parent=0 // loop_footer_branch
    %9 = sbr.rel target = $region3
  $region8: #{unet_innermost_forward.3} parent=0 // loop_exit
    _

// kernel: unet_innermost_forward.2
$region0: #{unet_innermost_forward.2}
  #allocation0 [shape = 'u32[]', space=smem, size = 0x4, offset = 0x4, fixed_abs, tag = 'smem constant byte address 0x4 - core index']
  #allocation1 [shape = 'u32[144,128]{1,0:T(1,128)}', space=vmem, size = 0x12000, scoped, tag = 'internal scratch']
  #allocation2 [shape = 'bf16[1,10,10,128]{3,2,1,0:T(8,128)(2,1)}', space=vmem, size = 0xa000, scoped, tag = 'scratch operand']
  %s0 = inlined_call_operand.vmem [shape: bf16[2,9,9,16], index: 0, kind: input, shape index: {}]
  %s1 = inlined_call_operand.vmem [shape: bf16[4,16,128], index: 1, kind: input, shape index: {}]
  %s2 = inlined_call_operand.vmem [shape: bf16[4,4,128,128], index: 2, kind: input, shape index: {}]
  %s3 = inlined_call_operand.vmem [shape: bf16[4,2,8,8,128], index: 3, kind: output, shape index: {0}]
  %s4 = inlined_call_operand.vmem [shape: f32[2,2,128], index: 4, kind: output, shape index: {1}]
  %5 = xla_tuple %s3, %s4
  %s6 = sld [smem:[#allocation0]]
  $region90: #{unet_innermost_forward.2} parent=0
    _
  %s8 = ssub.s32 1, %s6
  %s9 = scalar_select 0, %s8, %s6
  $region1: #{unet_innermost_forward.2} parent=0
    #allocation3 [shape = 'u8[131072]{0}', space=vmem, size = 0x20000, scoped, tag = 'output window, operand 0']
    loop: start=0, step=1, limit=4
    $region2: #{unet_innermost_forward.2} parent=1 // loop_pre_header
      _
    $region3: #{unet_innermost_forward.2} parent=1 // loop_header
      %s11 = sphi 0, %s15
      %p12 = scmp.ge.s32.totalorder %s11, 4
      %s21 = sphi 0, %s23
      %s24 = sphi 0, %s21
      %s25 = sphi 0, %s24
      %s41 = sphi 0, %s25
      %s45 = sphi 0, %s45
      %s47 = sphi 0, %s45
      %s48 = sphi 0, %s47
      %s62 = sphi 0, %s48
      %s66 = sphi 0, %s66
      %s68 = sphi 0, %s66
      %s69 = sphi 0, %s68
      %s83 = sphi 0, %s69
      %s89 = sphi 0, %s91
      %s92 = sphi 0, %s89
      %s93 = sphi 0, %s92
      %s109 = sphi 0, %s93
      %s115 = sphi 0, %s117
      %s118 = sphi 0, %s115
      %s119 = sphi 0, %s118
      %s135 = sphi 0, %s119
    $region4: #{unet_innermost_forward.2} parent=1 // loop_header_branch
      %14 = sbr.rel (%p12) target = $region8
    $region5: #{unet_innermost_forward.2} parent=1 // loop_body
      %s16 = ssub.s32 %s11, 1
      %s17 = ssub.s32 %s11, 2
      %s18 = sadd.s32 %s11, 1
      %s19 = ssub.s32 %s11, %s18
      %p20 = scmp.eq.s32.totalorder %s19, 0
      %s22 = sadd.s32 %s21, 1
      %s23 = scalar_select %p20, %s21, %s22
      %p26 = pneg %p20
      %p27 = scmp.eq.s32.totalorder %s11, 1
      %p28 = por %p26, %p27
      %p29 = scmp.ne.s32.totalorder %s21, %s24
      %p30 = scmp.eq.s32.totalorder %s11, 0
      %p31 = por %p29, %p30
      %p32 = scmp.ne.s32.totalorder %s21, %s24
      %p33 = scmp.eq.s32.totalorder %s16, 1
      %p34 = por %p32, %p33
      %p35 = scmp.ne.s32.totalorder %s24, %s25
      %p36 = scmp.eq.s32.totalorder %s16, 0
      %p37 = por %p35, %p36
      %p38 = scmp.ne.s32.totalorder %s24, %s25
      %p39 = scmp.eq.s32.totalorder %s17, 1
      %p40 = por %p38, %p39
      %p42 = scmp.ne.s32.totalorder %s25, %s41
      %p43 = scmp.eq.s32.totalorder %s17, 0
      %p44 = por %p42, %p43
      %s46 = sadd.s32 %s45, 1
      %p49 = scmp.eq.s32.totalorder %s11, 1
      %p50 = scmp.ne.s32.totalorder %s45, %s47
      %p51 = scmp.eq.s32.totalorder %s11, 0
      %p52 = por %p50, %p51
      %p53 = scmp.ne.s32.totalorder %s45, %s47
      %p54 = scmp.eq.s32.totalorder %s16, 1
      %p55 = por %p53, %p54
      %p56 = scmp.ne.s32.totalorder %s47, %s48
      %p57 = scmp.eq.s32.totalorder %s16, 0
      %p58 = por %p56, %p57
      %p59 = scmp.ne.s32.totalorder %s47, %s48
      %p60 = scmp.eq.s32.totalorder %s17, 1
      %p61 = por %p59, %p60
      %p63 = scmp.ne.s32.totalorder %s48, %s62
      %p64 = scmp.eq.s32.totalorder %s17, 0
      %p65 = por %p63, %p64
      %s67 = sadd.s32 %s66, 1
      %p70 = scmp.eq.s32.totalorder %s11, 1
      %p71 = scmp.ne.s32.totalorder %s66, %s68
      %p72 = scmp.eq.s32.totalorder %s11, 0
      %p73 = por %p71, %p72
      %p74 = scmp.ne.s32.totalorder %s66, %s68
      %p75 = scmp.eq.s32.totalorder %s16, 1
      %p76 = por %p74, %p75
      %p77 = scmp.ne.s32.totalorder %s68, %s69
      %p78 = scmp.eq.s32.totalorder %s16, 0
      %p79 = por %p77, %p78
      %p80 = scmp.ne.s32.totalorder %s68, %s69
      %p81 = scmp.eq.s32.totalorder %s17, 1
      %p82 = por %p80, %p81
      %p84 = scmp.ne.s32.totalorder %s69, %s83
      %p85 = scmp.eq.s32.totalorder %s17, 0
      %p86 = por %p84, %p85
      %s87 = ssub.s32 %s11, %s18
      %p88 = scmp.eq.s32.totalorder %s87, 0
      %s90 = sadd.s32 %s89, 1
      %s91 = scalar_select %p88, %s89, %s90
      %p94 = pneg %p88
      %p95 = scmp.eq.s32.totalorder %s11, 1
      %p96 = por %p94, %p95
      %p97 = scmp.ne.s32.totalorder %s89, %s92
      %p98 = scmp.eq.s32.totalorder %s11, 0
      %p99 = por %p97, %p98
      %p100 = scmp.ne.s32.totalorder %s89, %s92
      %p101 = scmp.eq.s32.totalorder %s16, 1
      %p102 = por %p100, %p101
      %p103 = scmp.ne.s32.totalorder %s92, %s93
      %p104 = scmp.eq.s32.totalorder %s16, 0
      %p105 = por %p103, %p104
      %p106 = scmp.ne.s32.totalorder %s92, %s93
      %p107 = scmp.eq.s32.totalorder %s17, 1
      %p108 = por %p106, %p107
      %p110 = scmp.ne.s32.totalorder %s93, %s109
      %p111 = scmp.eq.s32.totalorder %s17, 0
      %p112 = por %p110, %p111
      %s113 = ssub.s32 %s11, %s18
      %p114 = scmp.eq.s32.totalorder %s113, 0
      %s116 = sadd.s32 %s115, 1
      %s117 = scalar_select %p114, %s115, %s116
      %p120 = pneg %p114
      %p121 = scmp.eq.s32.totalorder %s11, 1
      %p122 = por %p120, %p121
      %p123 = scmp.ne.s32.totalorder %s115, %s118
      %p124 = scmp.eq.s32.totalorder %s11, 0
      %p125 = por %p123, %p124
      %p126 = scmp.ne.s32.totalorder %s115, %s118
      %p127 = scmp.eq.s32.totalorder %s16, 1
      %p128 = por %p126, %p127
      %p129 = scmp.ne.s32.totalorder %s118, %s119
      %p130 = scmp.eq.s32.totalorder %s16, 0
      %p131 = por %p129, %p130
      %p132 = scmp.ne.s32.totalorder %s118, %s119
      %p133 = scmp.eq.s32.totalorder %s17, 1
      %p134 = por %p132, %p133
      %p136 = scmp.ne.s32.totalorder %s119, %s135
      %p137 = scmp.eq.s32.totalorder %s17, 0
      %p138 = por %p136, %p137
      %p139 = scmp.le.s32.totalorder 1, %s11
      %p140 = scmp.lt.s32.totalorder %s11, 3
      %p141 = pnand %p139, %p140
      %p142 = pneg %p141
      // Predicated region
      $region9: #{unet_innermost_forward.2} parent=5 // pred_check
        _
      $region10: #{unet_innermost_forward.2} parent=5 // pred_check_branch
        %144 = sbr.rel (%p141) target = $region12
      $region11: #{unet_innermost_forward.2} parent=5 // pred_region
        %s145 = ssub.s32 %s11, 1
        // Predicated region
        $region13: #{unet_innermost_forward.2} parent=11 // pred_check
          %p146 = pneg %p58
        $region14: #{unet_innermost_forward.2} parent=11 // pred_check_branch
          %148 = sbr.rel (%p146) target = $region16
        $region15: #{unet_innermost_forward.2} parent=11 // pred_region
          _
        $region16: #{unet_innermost_forward.2} parent=11 // pred_fallthru
          _
        // Predicated region
        $region17: #{unet_innermost_forward.2} parent=11 // pred_check
          %p149 = pneg %p79
        $region18: #{unet_innermost_forward.2} parent=11 // pred_check_branch
          %151 = sbr.rel (%p149) target = $region20
        $region19: #{unet_innermost_forward.2} parent=11 // pred_region
          _
        $region20: #{unet_innermost_forward.2} parent=11 // pred_fallthru
          _
      $region12: #{unet_innermost_forward.2} parent=5 // pred_fallthru
        _
      %p152 = scmp.lt.s32.totalorder %s11, 2
      // Predicated region
      $region21: #{unet_innermost_forward.2} parent=5 // pred_check
        %p153 = pneg %p152
      $region22: #{unet_innermost_forward.2} parent=5 // pred_check_branch
        %155 = sbr.rel (%p153) target = $region24
      $region23: #{unet_innermost_forward.2} parent=5 // pred_region
        // Predicated region
        $region25: #{unet_innermost_forward.2} parent=23 // pred_check
          %p156 = pneg %p31
        $region26: #{unet_innermost_forward.2} parent=23 // pred_check_branch
          %158 = sbr.rel (%p156) target = $region28
        $region27: #{unet_innermost_forward.2} parent=23 // pred_region
          %p159 = scmp.lt.s32.totalorder %s11, 1
          %s160 = scalar_select %p159, %s11, 1
          %s161 = smul.addr %s160, 18
          %s162 = smul.addr %s161, 4
          %s163 = scalar_lea.vmem %s0, %s162
        $region28: #{unet_innermost_forward.2} parent=23 // pred_fallthru
          _
      $region24: #{unet_innermost_forward.2} parent=5 // pred_fallthru
        _
      %p164 = scmp.le.s32.totalorder 1, %s11
      %p165 = scmp.lt.s32.totalorder %s11, 3
      %p166 = pnand %p164, %p165
      %p167 = pneg %p166
      // Predicated region
      $region29: #{unet_innermost_forward.2} parent=5 // pred_check
        _
      $region30: #{unet_innermost_forward.2} parent=5 // pred_check_branch
        %169 = sbr.rel (%p166) target = $region32
      $region31: #{unet_innermost_forward.2} parent=5 // pred_region
        %s170 = ssub.s32 %s11, 1
        %p171 = scmp.lt.s32.totalorder %s16, 1
        %s172 = scalar_select %p171, %s16, 1
        %s173 = smul.addr %s172, 18
        %s174 = smul.addr %s173, 4
        %s175 = scalar_lea.vmem %s0, %s174
        %p176 = pneg %p37
        %p177 = pneg %p34
        %p178 = pneg %p58
        %p179 = pneg %p55
        %p180 = pneg %p79
        %p181 = pneg %p76
        %p182 = pneg %p105
        %p183 = pneg %p102
        %s184 = sand.u32 %s92, 1
        %s185 = sand.u32 %s92, 1
        %s186 = smul.addr %s185, 128
        %s187 = scalar_lea.vmem [#allocation3], %s186
        %p188 = pneg %p131
        %p189 = pneg %p128
        %p190 = scmp.lt.s32.totalorder %s16, 1
        %s191 = scalar_select %p190, %s16, 1
        %s192 = smul.addr %s191, 2
        %s193 = scalar_lea.vmem %s4, %s192
        %p194 = scmp.lt.s32.totalorder %s16, 1
        %s195 = scalar_select %p194, %s16, 1
        %s196 = smul.addr %s195, 18
        %s197 = smul.addr %s196, 4
        %s198 = scalar_lea.vmem %s0, %s197
        %p199 = scmp.lt.s32.totalorder %s16, 1
        %s200 = scalar_select %p199, %s16, 1
        %s201 = smul.addr %s200, 2
        %s202 = scalar_lea.vmem %s4, %s201
        %v204 = vld [vmem:[%s198] sm:$0xf]
        %v205 = vld [vmem:[%s198 + $0x4] sm:$0x1]
        %v206 = vld [vmem:[%s198 + $0x8] sm:$0xf]
        %v207 = vld [vmem:[%s198 + $0xc] sm:$0x1]
        %v208 = vld [vmem:[%s198 + $0x10] sm:$0xf]
        %v209 = vld [vmem:[%s198 + $0x14] sm:$0x1]
        %v210 = vld [vmem:[%s198 + $0x18] sm:$0xf]
        %v211 = vld [vmem:[%s198 + $0x1c] sm:$0x1]
        %v212 = vld [vmem:[%s198 + $0x20] sm:$0xf]
        %v213 = vld [vmem:[%s198 + $0x24] sm:$0x1]
        %v214 = vld [vmem:[%s198 + $0x28] sm:$0xf]
        %v215 = vld [vmem:[%s198 + $0x2c] sm:$0x1]
        %v216 = vld [vmem:[%s198 + $0x30] sm:$0xf]
        %v217 = vld [vmem:[%s198 + $0x34] sm:$0x1]
        %v218 = vld [vmem:[%s198 + $0x38] sm:$0xf]
        %v219 = vld [vmem:[%s198 + $0x3c] sm:$0x1]
        %v220 = vld [vmem:[%s198 + $0x40] sm:$0xf]
        %v221 = vld [vmem:[%s198 + $0x44] sm:$0x1]
        %v222 = vunpack.c.l.bf16 %v204
        %v223 = vunpack.c.l.bf16 %v205
        %v224 = vunpack.c.l.bf16 %v206
        %v225 = vunpack.c.l.bf16 %v207
        %v226 = vunpack.c.l.bf16 %v208
        %v227 = vunpack.c.l.bf16 %v209
        %v228 = vunpack.c.l.bf16 %v210
        %v229 = vunpack.c.l.bf16 %v211
        %v230 = vunpack.c.l.bf16 %v212
        %v231 = vunpack.c.l.bf16 %v213
        %v232 = vunpack.c.l.bf16 %v214
        %v233 = vunpack.c.l.bf16 %v215
        %v234 = vunpack.c.l.bf16 %v216
        %v235 = vunpack.c.l.bf16 %v217
        %v236 = vunpack.c.l.bf16 %v218
        %v237 = vunpack.c.l.bf16 %v219
        %v238 = vunpack.c.l.bf16 %v220
        %v239 = vunpack.c.l.bf16 %v221
        %vm240 = vcmp.ge.f32.partialorder %v222, 0.0
        %vm241 = vcmp.ge.f32.partialorder %v223, 0.0
        %vm242 = vcmp.ge.f32.partialorder %v224, 0.0
        %vm243 = vcmp.ge.f32.partialorder %v225, 0.0
        %vm244 = vcmp.ge.f32.partialorder %v226, 0.0
        %vm245 = vcmp.ge.f32.partialorder %v227, 0.0
        %vm246 = vcmp.ge.f32.partialorder %v228, 0.0
        %vm247 = vcmp.ge.f32.partialorder %v229, 0.0
        %vm248 = vcmp.ge.f32.partialorder %v230, 0.0
        %vm249 = vcmp.ge.f32.partialorder %v231, 0.0
        %vm250 = vcmp.ge.f32.partialorder %v232, 0.0
        %vm251 = vcmp.ge.f32.partialorder %v233, 0.0
        %vm252 = vcmp.ge.f32.partialorder %v234, 0.0
        %vm253 = vcmp.ge.f32.partialorder %v235, 0.0
        %vm254 = vcmp.ge.f32.partialorder %v236, 0.0
        %vm255 = vcmp.ge.f32.partialorder %v237, 0.0
        %vm256 = vcmp.ge.f32.partialorder %v238, 0.0
        %vm257 = vcmp.ge.f32.partialorder %v239, 0.0
        %v258 = vmul.f32 %v222, 0.2
        %v259 = vmul.f32 %v223, 0.2
        %v260 = vmul.f32 %v224, 0.2
        %v261 = vmul.f32 %v225, 0.2
        %v262 = vmul.f32 %v226, 0.2
        %v263 = vmul.f32 %v227, 0.2
        %v264 = vmul.f32 %v228, 0.2
        %v265 = vmul.f32 %v229, 0.2
        %v266 = vmul.f32 %v230, 0.2
        %v267 = vmul.f32 %v231, 0.2
        %v268 = vmul.f32 %v232, 0.2
        %v269 = vmul.f32 %v233, 0.2
        %v270 = vmul.f32 %v234, 0.2
        %v271 = vmul.f32 %v235, 0.2
        %v272 = vmul.f32 %v236, 0.2
        %v273 = vmul.f32 %v237, 0.2
        %v274 = vmul.f32 %v238, 0.2
        %v275 = vmul.f32 %v239, 0.2
        %v276 = vsel %vm240, %v222, %v258
        %v277 = vsel %vm241, %v223, %v259
        %v278 = vsel %vm242, %v224, %v260
        %v279 = vsel %vm243, %v225, %v261
        %v280 = vsel %vm244, %v226, %v262
        %v281 = vsel %vm245, %v227, %v263
        %v282 = vsel %vm246, %v228, %v264
        %v283 = vsel %vm247, %v229, %v265
        %v284 = vsel %vm248, %v230, %v266
        %v285 = vsel %vm249, %v231, %v267
        %v286 = vsel %vm250, %v232, %v268
        %v287 = vsel %vm251, %v233, %v269
        %v288 = vsel %vm252, %v234, %v270
        %v289 = vsel %vm253, %v235, %v271
        %v290 = vsel %vm254, %v236, %v272
        %v291 = vsel %vm255, %v237, %v273
        %v292 = vsel %vm256, %v238, %v274
        %v293 = vsel %vm257, %v239, %v275
        %v294 = vpack.c.bf16 %v277, %v276
        %v295 = vpack.c.bf16 %v279, %v278
        %v296 = vpack.c.bf16 %v281, %v280
        %v297 = vpack.c.bf16 %v283, %v282
        %v298 = vpack.c.bf16 %v285, %v284
        %v299 = vpack.c.bf16 %v287, %v286
        %v300 = vpack.c.bf16 %v289, %v288
        %v301 = vpack.c.bf16 %v291, %v290
        %v302 = vpack.c.bf16 %v293, %v292
        %v303 = vld [vmem:[%s1] sm:$0xf]
        %v304 = vld [vmem:[%s1 + $0x4] sm:$0xf]
        %v313 = vunpack.c.l.b16 %v294
        %v314 = vunpack.c.h.b16 %v294
        %v315 = vunpack.c.l.b16 %v295
        %v316 = vunpack.c.h.b16 %v295
        %v317 = vunpack.c.l.b16 %v296
        %v318 = vunpack.c.h.b16 %v296
        %v319 = vunpack.c.l.b16 %v297
        %v320 = vunpack.c.h.b16 %v297
        %v321 = vunpack.c.l.b16 %v298
        %v322 = vunpack.c.h.b16 %v298
        %v323 = vunpack.c.l.b16 %v299
        %v324 = vunpack.c.h.b16 %v299
        %v325 = vunpack.c.l.b16 %v300
        %v326 = vunpack.c.h.b16 %v300
        %v327 = vunpack.c.l.b16 %v301
        %v328 = vunpack.c.h.b16 %v301
        %v329 = vpack.c.b16 %v313, %v313
        %v330 = vpack.c.b16 %v314, %v314
        %v331 = vpack.c.b16 %v315, %v315
        %v332 = vpack.c.b16 %v316, %v316
        %v333 = vpack.c.b16 %v317, %v317
        %v334 = vpack.c.b16 %v318, %v318
        %v335 = vpack.c.b16 %v319, %v319
        %v336 = vpack.c.b16 %v320, %v320
        %v337 = vpack.c.b16 %v321, %v321
        %v338 = vpack.c.b16 %v322, %v322
        %v339 = vpack.c.b16 %v323, %v323
        %v340 = vpack.c.b16 %v324, %v324
        %v341 = vpack.c.b16 %v325, %v325
        %v342 = vpack.c.b16 %v326, %v326
        %v343 = vpack.c.b16 %v327, %v327
        %v344 = vpack.c.b16 %v328, %v328
        %vm345 = vsmask.f32 3328
        %vm346 = vsmask.f32 7440
        %vm347 = vmor %vm345, %vm346
        %v349 = vshrl.u32 %v329, 16
        %v351 = vrot.slane %v349, 4
        %v352 = vshll.u32 %v329, 16
        %v354 = vrot.slane %v352, 5
        %v355 = vor.u32 %v351, %v354
        %v356 = vrot.slane %v355, 4
        %v358 = vshll.u32 %v330, 16
        %v360 = vrot.slane %v358, 5
        %v361 = vsel %vm347, %v356, %v360
        %v363 = vshrl.u32 %v331, 16
        %v365 = vrot.slane %v363, 4
        %v366 = vshll.u32 %v331, 16
        %v368 = vrot.slane %v366, 5
        %v369 = vor.u32 %v365, %v368
        %v370 = vrot.slane %v369, 4
        %v372 = vshll.u32 %v332, 16
        %v374 = vrot.slane %v372, 5
        %v375 = vsel %vm347, %v370, %v374
        %v377 = vshrl.u32 %v333, 16
        %v379 = vrot.slane %v377, 4
        %v380 = vshll.u32 %v333, 16
        %v382 = vrot.slane %v380, 5
        %v383 = vor.u32 %v379, %v382
        %v384 = vrot.slane %v383, 4
        %v386 = vshll.u32 %v334, 16
        %v388 = vrot.slane %v386, 5
        %v389 = vsel %vm347, %v384, %v388
        %v391 = vshrl.u32 %v335, 16
        %v393 = vrot.slane %v391, 4
        %v394 = vshll.u32 %v335, 16
        %v396 = vrot.slane %v394, 5
        %v397 = vor.u32 %v393, %v396
        %v398 = vrot.slane %v397, 4
        %v400 = vshll.u32 %v336, 16
        %v402 = vrot.slane %v400, 5
        %v403 = vsel %vm347, %v398, %v402
        %v405 = vshrl.u32 %v337, 16
        %v407 = vrot.slane %v405, 4
        %v408 = vshll.u32 %v337, 16
        %v410 = vrot.slane %v408, 5
        %v411 = vor.u32 %v407, %v410
        %v412 = vrot.slane %v411, 4
        %v414 = vshll.u32 %v338, 16
        %v416 = vrot.slane %v414, 5
        %v417 = vsel %vm347, %v412, %v416
        %v419 = vshrl.u32 %v339, 16
        %v421 = vrot.slane %v419, 4
        %v422 = vshll.u32 %v339, 16
        %v424 = vrot.slane %v422, 5
        %v425 = vor.u32 %v421, %v424
        %v426 = vrot.slane %v425, 4
        %v428 = vshll.u32 %v340, 16
        %v430 = vrot.slane %v428, 5
        %v431 = vsel %vm347, %v426, %v430
        %v433 = vshrl.u32 %v341, 16
        %v435 = vrot.slane %v433, 4
        %v436 = vshll.u32 %v341, 16
        %v438 = vrot.slane %v436, 5
        %v439 = vor.u32 %v435, %v438
        %v440 = vrot.slane %v439, 4
        %v442 = vshll.u32 %v342, 16
        %v444 = vrot.slane %v442, 5
        %v445 = vsel %vm347, %v440, %v444
        %v447 = vshrl.u32 %v343, 16
        %v449 = vrot.slane %v447, 4
        %v450 = vshll.u32 %v343, 16
        %v452 = vrot.slane %v450, 5
        %v453 = vor.u32 %v449, %v452
        %v454 = vrot.slane %v453, 4
        %v456 = vshll.u32 %v344, 16
        %v458 = vrot.slane %v456, 5
        %v459 = vsel %vm347, %v454, %v458
        %s460 = scalar_lea.vmem %s1, 8
        %v461 = vld [vmem:[%s460] sm:$0xf]
        %v462 = vld [vmem:[%s460 + $0x4] sm:$0xf]
        %v463 = vunpack.c.l.b16 %v361
        %v464 = vunpack.c.l.b16 %v375
        %v465 = vunpack.c.l.b16 %v389
        %v466 = vunpack.c.l.b16 %v403
        %v467 = vunpack.c.l.b16 %v417
        %v468 = vunpack.c.l.b16 %v431
        %v469 = vunpack.c.l.b16 %v445
        %v470 = vunpack.c.l.b16 %v459
        %v471 = vpack.c.b16 %v464, %v463
        %v472 = vpack.c.b16 %v466, %v465
        %v473 = vpack.c.b16 %v468, %v467
        %v474 = vpack.c.b16 %v470, %v469
        %v477 = vunpack.c.l.b16 %v461
        %v478 = vunpack.c.l.b16 %v462
        %v479 = vpack.c.b16 %v478, %v477
        %vm481 = vcmask 130048
        %v483 = vsel %vm481, %v471, 0
        %v486 = vsel %vm481, %v472, 0
        %v489 = vsel %vm481, %v473, 0
        %v492 = vsel %vm481, %v474, 0
        %494 = vmatprep.subr.bf16.mxu0 0
        %495 = vmatpush1.bf16.msra.mxu0 0
        %496 = vmatprep.subr.bf16.mxu0 0
        %497 = vmatpush1.bf16.msra.mxu0 0
        %498 = vmatprep.subr.bf16.mxu0 0
        %499 = vmatpush1.bf16.msra.mxu0 0
        %500 = vmatprep.subr.bf16.mxu0 0
        %501 = vmatpush1.bf16.msra.mxu0 0
        %502 = vmatprep.subr.bf16.mxu0 0
        %503 = vmatpush1.bf16.msra.mxu0 0
        %504 = vmatprep.subr.bf16.mxu0 0
        %505 = vmatpush1.bf16.msra.mxu0 0
        %506 = vmatprep.subr.bf16.mxu0 0
        %507 = vmatpush1.bf16.msra.mxu0 0
        %508 = vmatprep.subr.bf16.mxu0 0
        %509 = vmatpush1.bf16.msra.mxu0 %v479
        %510 = vmatprep.subr.bf16.mxu0 0
        %511 = vmatpush2.bf16.msra.mxu0 0
        %512 = vmatprep.subr.bf16.mxu0 0
        %513 = vmatpush2.bf16.msra.mxu0 0
        %514 = vmatprep.subr.bf16.mxu0 0
        %515 = vmatpush2.bf16.msra.mxu0 0
        %516 = vmatprep.subr.bf16.mxu0 0
        %517 = vmatpush2.bf16.msra.mxu0 0
        %518 = vmatprep.subr.bf16.mxu0 0
        %519 = vmatpush2.bf16.msra.mxu0 0
        %520 = vmatprep.subr.bf16.mxu0 0
        %521 = vmatpush2.bf16.msra.mxu0 0
        %522 = vmatprep.subr.bf16.mxu0 0
        %523 = vmatpush2.bf16.msra.mxu0 0
        %524 = vmatprep.subr.bf16.mxu0 0
        %525 = vmatpush2.bf16.msra.mxu0 0
        %526 = vmatprep.mubr.bf16.mxu0 0
        %527 = vmatmul.mubr.bf16.gmra.mxu0 %v483
        %v528 = vpop.f32.mrf.mxu0
        %v529 = vadd.f32 0.0, %v528
        %v530 = vpop.f32.mrf.mxu0
        %v531 = vpop.f32.mrf.mxu0
        %v532 = vadd.f32 0.0, %v531
        %v533 = vpop.f32.mrf.mxu0
        %534 = vmatprep.mubr.bf16.mxu0 0
        %535 = vmatmul.mubr.bf16.gmra.mxu0 %v486
        %v536 = vpop.f32.mrf.mxu0
        %v537 = vadd.f32 0.0, %v536
        %v538 = vpop.f32.mrf.mxu0
        %v539 = vpop.f32.mrf.mxu0
        %v540 = vadd.f32 0.0, %v539
        %v541 = vpop.f32.mrf.mxu0
        %542 = vmatprep.mubr.bf16.mxu0 0
        %543 = vmatmul.mubr.bf16.gmra.mxu0 %v489
        %v544 = vpop.f32.mrf.mxu0
        %v545 = vadd.f32 0.0, %v544
        %v546 = vpop.f32.mrf.mxu0
        %v547 = vpop.f32.mrf.mxu0
        %v548 = vadd.f32 0.0, %v547
        %v549 = vpop.f32.mrf.mxu0
        %550 = vmatprep.mubr.bf16.mxu0 0
        %551 = vmatmul.mubr.bf16.gmra.mxu0 %v492
        %v552 = vpop.f32.mrf.mxu0
        %v553 = vadd.f32 0.0, %v552
        %v554 = vpop.f32.mrf.mxu0
        %v555 = vpop.f32.mrf.mxu0
        %v556 = vadd.f32 0.0, %v555
        %v557 = vpop.f32.mrf.mxu0
        %558 = vdwg.mxu0
        %v559 = vpack.c.b16 %v315, %v313
        %v560 = vpack.c.b16 %v319, %v317
        %v561 = vpack.c.b16 %v323, %v321
        %v562 = vpack.c.b16 %v327, %v325
        %v565 = vunpack.c.l.b16 %v303
        %v566 = vunpack.c.l.b16 %v304
        %v567 = vpack.c.b16 %v566, %v565
        %v570 = vsel %vm481, %v559, 0
        %v573 = vsel %vm481, %v560, 0
        %v576 = vsel %vm481, %v561, 0
        %v579 = vsel %vm481, %v562, 0
        %581 = vmatprep.subr.bf16.mxu0 0
        %582 = vmatpush1.bf16.msra.mxu0 0
        %583 = vmatprep.subr.bf16.mxu0 0
        %584 = vmatpush1.bf16.msra.mxu0 0
        %585 = vmatprep.subr.bf16.mxu0 0
        %586 = vmatpush1.bf16.msra.mxu0 0
        %587 = vmatprep.subr.bf16.mxu0 0
        %588 = vmatpush1.bf16.msra.mxu0 0
        %589 = vmatprep.subr.bf16.mxu0 0
        %590 = vmatpush1.bf16.msra.mxu0 0
        %591 = vmatprep.subr.bf16.mxu0 0
        %592 = vmatpush1.bf16.msra.mxu0 0
        %593 = vmatprep.subr.bf16.mxu0 0
        %594 = vmatpush1.bf16.msra.mxu0 0
        %595 = vmatprep.subr.bf16.mxu0 0
        %596 = vmatpush1.bf16.msra.mxu0 %v567
        %597 = vmatprep.subr.bf16.mxu0 0
        %598 = vmatpush2.bf16.msra.mxu0 0
        %599 = vmatprep.subr.bf16.mxu0 0
        %600 = vmatpush2.bf16.msra.mxu0 0
        %601 = vmatprep.subr.bf16.mxu0 0
        %602 = vmatpush2.bf16.msra.mxu0 0
        %603 = vmatprep.subr.bf16.mxu0 0
        %604 = vmatpush2.bf16.msra.mxu0 0
        %605 = vmatprep.subr.bf16.mxu0 0
        %606 = vmatpush2.bf16.msra.mxu0 0
        %607 = vmatprep.subr.bf16.mxu0 0
        %608 = vmatpush2.bf16.msra.mxu0 0
        %609 = vmatprep.subr.bf16.mxu0 0
        %610 = vmatpush2.bf16.msra.mxu0 0
        %611 = vmatprep.subr.bf16.mxu0 0
        %612 = vmatpush2.bf16.msra.mxu0 0
        %613 = vmatprep.mubr.bf16.mxu0 0
        %614 = vmatmul.mubr.bf16.gmra.mxu0 %v570
        %v615 = vpop.f32.mrf.mxu0
        %v616 = vadd.f32 %v529, %v615
        %v617 = vpop.f32.mrf.mxu0
        %v618 = vpop.f32.mrf.mxu0
        %v619 = vadd.f32 %v532, %v618
        %v620 = vpop.f32.mrf.mxu0
        %621 = vmatprep.mubr.bf16.mxu0 0
        %622 = vmatmul.mubr.bf16.gmra.mxu0 %v573
        %v623 = vpop.f32.mrf.mxu0
        %v624 = vadd.f32 %v537, %v623
        %v625 = vpop.f32.mrf.mxu0
        %v626 = vpop.f32.mrf.mxu0
        %v627 = vadd.f32 %v540, %v626
        %v628 = vpop.f32.mrf.mxu0
        %629 = vmatprep.mubr.bf16.mxu0 0
        %630 = vmatmul.mubr.bf16.gmra.mxu0 %v576
        %v631 = vpop.f32.mrf.mxu0
        %v632 = vadd.f32 %v545, %v631
        %v633 = vpop.f32.mrf.mxu0
        %v634 = vpop.f32.mrf.mxu0
        %v635 = vadd.f32 %v548, %v634
        %v636 = vpop.f32.mrf.mxu0
        %637 = vmatprep.mubr.bf16.mxu0 0
        %638 = vmatmul.mubr.bf16.gmra.mxu0 %v579
        %v639 = vpop.f32.mrf.mxu0
        %v640 = vadd.f32 %v553, %v639
        %v641 = vpop.f32.mrf.mxu0
        %v642 = vpop.f32.mrf.mxu0
        %v643 = vadd.f32 %v556, %v642
        %v644 = vpop.f32.mrf.mxu0
        %645 = vdwg.mxu0
        %s646 = scalar_lea.vmem %s1, 16
        %v647 = vld [vmem:[%s646] sm:$0xf]
        %v648 = vld [vmem:[%s646 + $0x4] sm:$0xf]
        %v650 = vunpack.c.l.b16 %v302
        %v651 = vpack.c.b16 %v317, %v315
        %v652 = vpack.c.b16 %v321, %v319
        %v653 = vpack.c.b16 %v325, %v323
        %v654 = vpack.c.b16 %v650, %v327
        %v657 = vunpack.c.l.b16 %v647
        %v658 = vunpack.c.l.b16 %v648
        %v659 = vpack.c.b16 %v658, %v657
        %v662 = vsel %vm481, %v651, 0
        %v665 = vsel %vm481, %v652, 0
        %v668 = vsel %vm481, %v653, 0
        %v671 = vsel %vm481, %v654, 0
        %673 = vmatprep.subr.bf16.mxu0 0
        %674 = vmatpush1.bf16.msra.mxu0 0
        %675 = vmatprep.subr.bf16.mxu0 0
        %676 = vmatpush1.bf16.msra.mxu0 0
        %677 = vmatprep.subr.bf16.mxu0 0
        %678 = vmatpush1.bf16.msra.mxu0 0
        %679 = vmatprep.subr.bf16.mxu0 0
        %680 = vmatpush1.bf16.msra.mxu0 0
        %681 = vmatprep.subr.bf16.mxu0 0
        %682 = vmatpush1.bf16.msra.mxu0 0
        %683 = vmatprep.subr.bf16.mxu0 0
        %684 = vmatpush1.bf16.msra.mxu0 0
        %685 = vmatprep.subr.bf16.mxu0 0
        %686 = vmatpush1.bf16.msra.mxu0 0
        %687 = vmatprep.subr.bf16.mxu0 0
        %688 = vmatpush1.bf16.msra.mxu0 %v659
        %689 = vmatprep.subr.bf16.mxu0 0
        %690 = vmatpush2.bf16.msra.mxu0 0
        %691 = vmatprep.subr.bf16.mxu0 0
        %692 = vmatpush2.bf16.msra.mxu0 0
        %693 = vmatprep.subr.bf16.mxu0 0
        %694 = vmatpush2.bf16.msra.mxu0 0
        %695 = vmatprep.subr.bf16.mxu0 0
        %696 = vmatpush2.bf16.msra.mxu0 0
        %697 = vmatprep.subr.bf16.mxu0 0
        %698 = vmatpush2.bf16.msra.mxu0 0
        %699 = vmatprep.subr.bf16.mxu0 0
        %700 = vmatpush2.bf16.msra.mxu0 0
        %701 = vmatprep.subr.bf16.mxu0 0
        %702 = vmatpush2.bf16.msra.mxu0 0
        %703 = vmatprep.subr.bf16.mxu0 0
        %704 = vmatpush2.bf16.msra.mxu0 0
        %705 = vmatprep.mubr.bf16.mxu0 0
        %706 = vmatmul.mubr.bf16.gmra.mxu0 %v662
        %v707 = vpop.f32.mrf.mxu0
        %v708 = vadd.f32 0.0, %v707
        %v709 = vpop.f32.mrf.mxu0
        %v710 = vpop.f32.mrf.mxu0
        %v711 = vadd.f32 0.0, %v710
        %v712 = vpop.f32.mrf.mxu0
        %713 = vmatprep.mubr.bf16.mxu0 0
        %714 = vmatmul.mubr.bf16.gmra.mxu0 %v665
        %v715 = vpop.f32.mrf.mxu0
        %v716 = vadd.f32 0.0, %v715
        %v717 = vpop.f32.mrf.mxu0
        %v718 = vpop.f32.mrf.mxu0
        %v719 = vadd.f32 0.0, %v718
        %v720 = vpop.f32.mrf.mxu0
        %721 = vmatprep.mubr.bf16.mxu0 0
        %722 = vmatmul.mubr.bf16.gmra.mxu0 %v668
        %v723 = vpop.f32.mrf.mxu0
        %v724 = vadd.f32 0.0, %v723
        %v725 = vpop.f32.mrf.mxu0
        %v726 = vpop.f32.mrf.mxu0
        %v727 = vadd.f32 0.0, %v726
        %v728 = vpop.f32.mrf.mxu0
        %729 = vmatprep.mubr.bf16.mxu0 0
        %730 = vmatmul.mubr.bf16.gmra.mxu0 %v671
        %v731 = vpop.f32.mrf.mxu0
        %v732 = vadd.f32 0.0, %v731
        %v733 = vpop.f32.mrf.mxu0
        %v734 = vpop.f32.mrf.mxu0
        %v735 = vadd.f32 0.0, %v734
        %v736 = vpop.f32.mrf.mxu0
        %737 = vdwg.mxu0
        %v738 = vadd.f32 %v616, %v708
        %v739 = vadd.f32 %v619, %v711
        %v740 = vadd.f32 %v624, %v716
        %v741 = vadd.f32 %v627, %v719
        %v742 = vadd.f32 %v632, %v724
        %v743 = vadd.f32 %v635, %v727
        %v744 = vadd.f32 %v640, %v732
        %v745 = vadd.f32 %v643, %v735
        %v746 = vunpack.c.h.b16 %v302
        %v747 = vpack.c.b16 %v650, %v650
        %v748 = vpack.c.b16 %v746, %v746
        %v750 = vshrl.u32 %v747, 16
        %v752 = vrot.slane %v750, 4
        %v753 = vshll.u32 %v747, 16
        %v755 = vrot.slane %v753, 5
        %v756 = vor.u32 %v752, %v755
        %v757 = vrot.slane %v756, 4
        %v759 = vshll.u32 %v748, 16
        %v761 = vrot.slane %v759, 5
        %v762 = vsel %vm347, %v757, %v761
        %s763 = scalar_lea.vmem %s1, 24
        %v764 = vld [vmem:[%s763] sm:$0xf]
        %v765 = vld [vmem:[%s763 + $0x4] sm:$0xf]
        %v766 = vunpack.c.l.b16 %v762
        %v767 = vpack.c.b16 %v465, %v464
        %v768 = vpack.c.b16 %v467, %v466
        %v769 = vpack.c.b16 %v469, %v468
        %v770 = vpack.c.b16 %v766, %v470
        %v773 = vunpack.c.l.b16 %v764
        %v774 = vunpack.c.l.b16 %v765
        %v775 = vpack.c.b16 %v774, %v773
        %v778 = vsel %vm481, %v767, 0
        %v781 = vsel %vm481, %v768, 0
        %v784 = vsel %vm481, %v769, 0
        %v787 = vsel %vm481, %v770, 0
        %789 = vmatprep.subr.bf16.mxu0 0
        %790 = vmatpush1.bf16.msra.mxu0 0
        %791 = vmatprep.subr.bf16.mxu0 0
        %792 = vmatpush1.bf16.msra.mxu0 0
        %793 = vmatprep.subr.bf16.mxu0 0
        %794 = vmatpush1.bf16.msra.mxu0 0
        %795 = vmatprep.subr.bf16.mxu0 0
        %796 = vmatpush1.bf16.msra.mxu0 0
        %797 = vmatprep.subr.bf16.mxu0 0
        %798 = vmatpush1.bf16.msra.mxu0 0
        %799 = vmatprep.subr.bf16.mxu0 0
        %800 = vmatpush1.bf16.msra.mxu0 0
        %801 = vmatprep.subr.bf16.mxu0 0
        %802 = vmatpush1.bf16.msra.mxu0 0
        %803 = vmatprep.subr.bf16.mxu0 0
        %804 = vmatpush1.bf16.msra.mxu0 %v775
        %805 = vmatprep.subr.bf16.mxu0 0
        %806 = vmatpush2.bf16.msra.mxu0 0
        %807 = vmatprep.subr.bf16.mxu0 0
        %808 = vmatpush2.bf16.msra.mxu0 0
        %809 = vmatprep.subr.bf16.mxu0 0
        %810 = vmatpush2.bf16.msra.mxu0 0
        %811 = vmatprep.subr.bf16.mxu0 0
        %812 = vmatpush2.bf16.msra.mxu0 0
        %813 = vmatprep.subr.bf16.mxu0 0
        %814 = vmatpush2.bf16.msra.mxu0 0
        %815 = vmatprep.subr.bf16.mxu0 0
        %816 = vmatpush2.bf16.msra.mxu0 0
        %817 = vmatprep.subr.bf16.mxu0 0
        %818 = vmatpush2.bf16.msra.mxu0 0
        %819 = vmatprep.subr.bf16.mxu0 0
        %820 = vmatpush2.bf16.msra.mxu0 0
        %821 = vmatprep.mubr.bf16.mxu0 0
        %822 = vmatmul.mubr.bf16.gmra.mxu0 %v778
        %v823 = vpop.f32.mrf.mxu0
        %v824 = vadd.f32 0.0, %v823
        %v825 = vpop.f32.mrf.mxu0
        %v826 = vpop.f32.mrf.mxu0
        %v827 = vadd.f32 0.0, %v826
        %v828 = vpop.f32.mrf.mxu0
        %829 = vmatprep.mubr.bf16.mxu0 0
        %830 = vmatmul.mubr.bf16.gmra.mxu0 %v781
        %v831 = vpop.f32.mrf.mxu0
        %v832 = vadd.f32 0.0, %v831
        %v833 = vpop.f32.mrf.mxu0
        %v834 = vpop.f32.mrf.mxu0
        %v835 = vadd.f32 0.0, %v834
        %v836 = vpop.f32.mrf.mxu0
        %837 = vmatprep.mubr.bf16.mxu0 0
        %838 = vmatmul.mubr.bf16.gmra.mxu0 %v784
        %v839 = vpop.f32.mrf.mxu0
        %v840 = vadd.f32 0.0, %v839
        %v841 = vpop.f32.mrf.mxu0
        %v842 = vpop.f32.mrf.mxu0
        %v843 = vadd.f32 0.0, %v842
        %v844 = vpop.f32.mrf.mxu0
        %845 = vmatprep.mubr.bf16.mxu0 0
        %846 = vmatmul.mubr.bf16.gmra.mxu0 %v787
        %v847 = vpop.f32.mrf.mxu0
        %v848 = vadd.f32 0.0, %v847
        %v849 = vpop.f32.mrf.mxu0
        %v850 = vpop.f32.mrf.mxu0
        %v851 = vadd.f32 0.0, %v850
        %v852 = vpop.f32.mrf.mxu0
        %853 = vdwg.mxu0
        %v854 = vadd.f32 %v738, %v824
        %v855 = vadd.f32 %v739, %v827
        %v856 = vadd.f32 %v740, %v832
        %v857 = vadd.f32 %v741, %v835
        %v858 = vadd.f32 %v742, %v840
        %v859 = vadd.f32 %v743, %v843
        %v860 = vadd.f32 %v744, %v848
        %v861 = vadd.f32 %v745, %v851
        %v862 = vmax.f32 %v854, 0.0
        %v863 = vmax.f32 %v855, 0.0
        %v864 = vmax.f32 %v856, 0.0
        %v865 = vmax.f32 %v857, 0.0
        %v866 = vmax.f32 %v858, 0.0
        %v867 = vmax.f32 %v859, 0.0
        %v868 = vmax.f32 %v860, 0.0
        %v869 = vmax.f32 %v861, 0.0
        %v870 = vpack.c.bf16 %v863, %v862
        %v871 = vpack.c.bf16 %v865, %v864
        %v872 = vpack.c.bf16 %v867, %v866
        %v873 = vpack.c.bf16 %v869, %v868
        %v878 = vunpack.c.l.b16 %v870
        %v879 = vunpack.c.h.b16 %v870
        %v880 = vunpack.c.l.b16 %v871
        %v881 = vunpack.c.h.b16 %v871
        %v882 = vunpack.c.l.b16 %v872
        %v883 = vunpack.c.h.b16 %v872
        %v884 = vunpack.c.l.b16 %v873
        %v885 = vunpack.c.h.b16 %v873
        %v886 = vpack.c.b16 %v878, %v878
        %v887 = vpack.c.b16 %v879, %v879
        %v888 = vpack.c.b16 %v880, %v880
        %v889 = vpack.c.b16 %v881, %v881
        %v890 = vpack.c.b16 %v882, %v882
        %v891 = vpack.c.b16 %v883, %v883
        %v892 = vpack.c.b16 %v884, %v884
        %v893 = vpack.c.b16 %v885, %v885
        %894 = vst [vmem:[#allocation2] sm:$0xf] 0
        %895 = vst [vmem:[#allocation2 + $0x4] sm:$0x1] 0
        %896 = vst [vmem:[#allocation2 + $0x8] sm:$0xf] 0
        %897 = vst [vmem:[#allocation2 + $0xc] sm:$0x1] 0
        %898 = vst [vmem:[#allocation2 + $0x10] sm:$0xf] 0
        %899 = vst [vmem:[#allocation2 + $0x14] sm:$0x1] 0
        %900 = vst [vmem:[#allocation2 + $0x18] sm:$0xf] 0
        %901 = vst [vmem:[#allocation2 + $0x1c] sm:$0x1] 0
        %902 = vst [vmem:[#allocation2 + $0x20] sm:$0xf] 0
        %903 = vst [vmem:[#allocation2 + $0x24] sm:$0x1] 0
        %904 = vst [vmem:[#allocation2 + $0x28] sm:$0xf] 0
        %905 = vst [vmem:[#allocation2 + $0x2c] sm:$0x1] 0
        %906 = vst [vmem:[#allocation2 + $0x30] sm:$0xf] 0
        %907 = vst [vmem:[#allocation2 + $0x34] sm:$0x1] 0
        %908 = vst [vmem:[#allocation2 + $0x38] sm:$0xf] 0
        %909 = vst [vmem:[#allocation2 + $0x3c] sm:$0x1] 0
        %910 = vst [vmem:[#allocation2 + $0x40] sm:$0xf] 0
        %911 = vst [vmem:[#allocation2 + $0x44] sm:$0x1] 0
        %912 = vst [vmem:[#allocation2 + $0x48] sm:$0xf] 0
        %913 = vst [vmem:[#allocation2 + $0x4c] sm:$0x1] 0
        %v915 = vshrl.u32 %v886, 16
        %v917 = vrot.slane %v915, 7
        %v918 = vshll.u32 %v886, 16
        %v920 = vor.u32 %v917, %v918
        %v921 = vrot.slane %v917, 4
        %v923 = vshrl.u32 %v887, 16
        %v925 = vrot.slane %v923, 7
        %v926 = vshll.u32 %v887, 16
        %v928 = vor.u32 %v925, %v926
        %v929 = vrot.slane %v925, 4
        %v931 = vshrl.u32 %v888, 16
        %v933 = vrot.slane %v931, 7
        %v934 = vshll.u32 %v888, 16
        %v936 = vor.u32 %v933, %v934
        %v937 = vrot.slane %v933, 4
        %v939 = vshrl.u32 %v889, 16
        %v941 = vrot.slane %v939, 7
        %v942 = vshll.u32 %v889, 16
        %v944 = vor.u32 %v941, %v942
        %v945 = vrot.slane %v941, 4
        %v947 = vshrl.u32 %v890, 16
        %v949 = vrot.slane %v947, 7
        %v950 = vshll.u32 %v890, 16
        %v952 = vor.u32 %v949, %v950
        %v953 = vrot.slane %v949, 4
        %v955 = vshrl.u32 %v891, 16
        %v957 = vrot.slane %v955, 7
        %v958 = vshll.u32 %v891, 16
        %v960 = vor.u32 %v957, %v958
        %v961 = vrot.slane %v957, 4
        %v963 = vshrl.u32 %v892, 16
        %v965 = vrot.slane %v963, 7
        %v966 = vshll.u32 %v892, 16
        %v968 = vor.u32 %v965, %v966
        %v969 = vrot.slane %v965, 4
        %v971 = vshrl.u32 %v893, 16
        %v973 = vrot.slane %v971, 7
        %v974 = vshll.u32 %v893, 16
        %v976 = vor.u32 %v973, %v974
        %v977 = vrot.slane %v973, 4
        %s994 = scalar_lea.vmem [#allocation2], 8
        %vm995 = vcmask 1043456
        %vm996 = vsmask.f32 7938
        %vm997 = vmand %vm995, %vm996
        %v998 = vld [vmem:[%s994] sm:$0xf]
        %v999 = vsel %vm997, %v920, %v998
        %1000 = vst [vmem:[%s994] sm:$0xf] %v999
        %vm1001 = vcmask 1040384
        %vm1002 = vsmask.f32 256
        %vm1003 = vmand %vm1001, %vm1002
        %v1004 = vld [vmem:[%s994 + $0x4] sm:$0x1]
        %v1005 = vsel %vm1003, %v921, %v1004
        %1006 = vst [vmem:[%s994 + $0x4] sm:$0x1] %v1005
        %v1007 = vld [vmem:[%s994 + $0x8] sm:$0xf]
        %v1008 = vsel %vm997, %v928, %v1007
        %1009 = vst [vmem:[%s994 + $0x8] sm:$0xf] %v1008
        %v1010 = vld [vmem:[%s994 + $0xc] sm:$0x1]
        %v1011 = vsel %vm1003, %v929, %v1010
        %1012 = vst [vmem:[%s994 + $0xc] sm:$0x1] %v1011
        %v1013 = vld [vmem:[%s994 + $0x10] sm:$0xf]
        %v1014 = vsel %vm997, %v936, %v1013
        %1015 = vst [vmem:[%s994 + $0x10] sm:$0xf] %v1014
        %v1016 = vld [vmem:[%s994 + $0x14] sm:$0x1]
        %v1017 = vsel %vm1003, %v937, %v1016
        %1018 = vst [vmem:[%s994 + $0x14] sm:$0x1] %v1017
        %v1019 = vld [vmem:[%s994 + $0x18] sm:$0xf]
        %v1020 = vsel %vm997, %v944, %v1019
        %1021 = vst [vmem:[%s994 + $0x18] sm:$0xf] %v1020
        %v1022 = vld [vmem:[%s994 + $0x1c] sm:$0x1]
        %v1023 = vsel %vm1003, %v945, %v1022
        %1024 = vst [vmem:[%s994 + $0x1c] sm:$0x1] %v1023
        %v1025 = vld [vmem:[%s994 + $0x20] sm:$0xf]
        %v1026 = vsel %vm997, %v952, %v1025
        %1027 = vst [vmem:[%s994 + $0x20] sm:$0xf] %v1026
        %v1028 = vld [vmem:[%s994 + $0x24] sm:$0x1]
        %v1029 = vsel %vm1003, %v953, %v1028
        %1030 = vst [vmem:[%s994 + $0x24] sm:$0x1] %v1029
        %v1031 = vld [vmem:[%s994 + $0x28] sm:$0xf]
        %v1032 = vsel %vm997, %v960, %v1031
        %1033 = vst [vmem:[%s994 + $0x28] sm:$0xf] %v1032
        %v1034 = vld [vmem:[%s994 + $0x2c] sm:$0x1]
        %v1035 = vsel %vm1003, %v961, %v1034
        %1036 = vst [vmem:[%s994 + $0x2c] sm:$0x1] %v1035
        %v1037 = vld [vmem:[%s994 + $0x30] sm:$0xf]
        %v1038 = vsel %vm997, %v968, %v1037
        %1039 = vst [vmem:[%s994 + $0x30] sm:$0xf] %v1038
        %v1040 = vld [vmem:[%s994 + $0x34] sm:$0x1]
        %v1041 = vsel %vm1003, %v969, %v1040
        %1042 = vst [vmem:[%s994 + $0x34] sm:$0x1] %v1041
        %v1043 = vld [vmem:[%s994 + $0x38] sm:$0xf]
        %v1044 = vsel %vm997, %v976, %v1043
        %1045 = vst [vmem:[%s994 + $0x38] sm:$0xf] %v1044
        %v1046 = vld [vmem:[%s994 + $0x3c] sm:$0x1]
        %v1047 = vsel %vm1003, %v977, %v1046
        %1048 = vst [vmem:[%s994 + $0x3c] sm:$0x1] %v1047
        %v1049 = vld [vmem:[#allocation2] sm:$0xf]
        %v1050 = vld [vmem:[#allocation2 + $0x4] sm:$0x1]
        %v1051 = vld [vmem:[#allocation2 + $0x8] sm:$0xf]
        %v1052 = vld [vmem:[#allocation2 + $0xc] sm:$0x1]
        %v1053 = vld [vmem:[#allocation2 + $0x10] sm:$0xf]
        %v1054 = vld [vmem:[#allocation2 + $0x14] sm:$0x1]
        %v1055 = vld [vmem:[#allocation2 + $0x18] sm:$0xf]
        %v1056 = vld [vmem:[#allocation2 + $0x1c] sm:$0x1]
        %v1057 = vld [vmem:[#allocation2 + $0x20] sm:$0xf]
        %v1058 = vld [vmem:[#allocation2 + $0x24] sm:$0x1]
        %v1059 = vld [vmem:[#allocation2 + $0x28] sm:$0xf]
        %v1060 = vld [vmem:[#allocation2 + $0x2c] sm:$0x1]
        %v1061 = vld [vmem:[#allocation2 + $0x30] sm:$0xf]
        %v1062 = vld [vmem:[#allocation2 + $0x34] sm:$0x1]
        %v1063 = vld [vmem:[#allocation2 + $0x38] sm:$0xf]
        %v1064 = vld [vmem:[#allocation2 + $0x3c] sm:$0x1]
        %v1065 = vld [vmem:[#allocation2 + $0x40] sm:$0xf]
        %v1066 = vld [vmem:[#allocation2 + $0x44] sm:$0x1]
        %v1067 = vld [vmem:[#allocation2 + $0x48] sm:$0xf]
        %v1068 = vld [vmem:[#allocation2 + $0x4c] sm:$0x1]
        %v1070 = vshrl.u32 %v1051, 16
        %v1072 = vrot.slane %v1070, 4
        %v1073 = vshll.u32 %v1051, 16
        %v1075 = vrot.slane %v1073, 5
        %v1076 = vor.u32 %v1072, %v1075
        %v1077 = vrot.slane %v1076, 4
        %v1079 = vshll.u32 %v1052, 16
        %v1081 = vrot.slane %v1079, 5
        %v1082 = vsel %vm347, %v1077, %v1081
        %v1084 = vshrl.u32 %v1053, 16
        %v1086 = vrot.slane %v1084, 4
        %v1087 = vshll.u32 %v1053, 16
        %v1089 = vrot.slane %v1087, 5
        %v1090 = vor.u32 %v1086, %v1089
        %v1091 = vrot.slane %v1090, 4
        %v1093 = vshll.u32 %v1054, 16
        %v1095 = vrot.slane %v1093, 5
        %v1096 = vsel %vm347, %v1091, %v1095
        %v1098 = vshrl.u32 %v1055, 16
        %v1100 = vrot.slane %v1098, 4
        %v1101 = vshll.u32 %v1055, 16
        %v1103 = vrot.slane %v1101, 5
        %v1104 = vor.u32 %v1100, %v1103
        %v1105 = vrot.slane %v1104, 4
        %v1107 = vshll.u32 %v1056, 16
        %v1109 = vrot.slane %v1107, 5
        %v1110 = vsel %vm347, %v1105, %v1109
        %v1112 = vshrl.u32 %v1057, 16
        %v1114 = vrot.slane %v1112, 4
        %v1115 = vshll.u32 %v1057, 16
        %v1117 = vrot.slane %v1115, 5
        %v1118 = vor.u32 %v1114, %v1117
        %v1119 = vrot.slane %v1118, 4
        %v1121 = vshll.u32 %v1058, 16
        %v1123 = vrot.slane %v1121, 5
        %v1124 = vsel %vm347, %v1119, %v1123
        %v1126 = vshrl.u32 %v1059, 16
        %v1128 = vrot.slane %v1126, 4
        %v1129 = vshll.u32 %v1059, 16
        %v1131 = vrot.slane %v1129, 5
        %v1132 = vor.u32 %v1128, %v1131
        %v1133 = vrot.slane %v1132, 4
        %v1135 = vshll.u32 %v1060, 16
        %v1137 = vrot.slane %v1135, 5
        %v1138 = vsel %vm347, %v1133, %v1137
        %v1140 = vshrl.u32 %v1061, 16
        %v1142 = vrot.slane %v1140, 4
        %v1143 = vshll.u32 %v1061, 16
        %v1145 = vrot.slane %v1143, 5
        %v1146 = vor.u32 %v1142, %v1145
        %v1147 = vrot.slane %v1146, 4
        %v1149 = vshll.u32 %v1062, 16
        %v1151 = vrot.slane %v1149, 5
        %v1152 = vsel %vm347, %v1147, %v1151
        %v1154 = vshrl.u32 %v1063, 16
        %v1156 = vrot.slane %v1154, 4
        %v1157 = vshll.u32 %v1063, 16
        %v1159 = vrot.slane %v1157, 5
        %v1160 = vor.u32 %v1156, %v1159
        %v1161 = vrot.slane %v1160, 4
        %v1163 = vshll.u32 %v1064, 16
        %v1165 = vrot.slane %v1163, 5
        %v1166 = vsel %vm347, %v1161, %v1165
        %v1168 = vshrl.u32 %v1065, 16
        %v1170 = vrot.slane %v1168, 4
        %v1171 = vshll.u32 %v1065, 16
        %v1173 = vrot.slane %v1171, 5
        %v1174 = vor.u32 %v1170, %v1173
        %v1175 = vrot.slane %v1174, 4
        %v1177 = vshll.u32 %v1066, 16
        %v1179 = vrot.slane %v1177, 5
        %v1180 = vsel %vm347, %v1175, %v1179
        %v1181 = vld [vmem:[%s2] sm:$0xf]
        %v1182 = vld [vmem:[%s2 + $0x4] sm:$0xf]
        %v1183 = vld [vmem:[%s2 + $0x8] sm:$0xf]
        %v1184 = vld [vmem:[%s2 + $0xc] sm:$0xf]
        %v1185 = vld [vmem:[%s2 + $0x10] sm:$0xf]
        %v1186 = vld [vmem:[%s2 + $0x14] sm:$0xf]
        %v1187 = vld [vmem:[%s2 + $0x18] sm:$0xf]
        %v1188 = vld [vmem:[%s2 + $0x1c] sm:$0xf]
        %v1189 = vld [vmem:[%s2 + $0x20] sm:$0xf]
        %v1190 = vld [vmem:[%s2 + $0x24] sm:$0xf]
        %v1191 = vld [vmem:[%s2 + $0x28] sm:$0xf]
        %v1192 = vld [vmem:[%s2 + $0x2c] sm:$0xf]
        %v1193 = vld [vmem:[%s2 + $0x30] sm:$0xf]
        %v1194 = vld [vmem:[%s2 + $0x34] sm:$0xf]
        %v1195 = vld [vmem:[%s2 + $0x38] sm:$0xf]
        %v1196 = vld [vmem:[%s2 + $0x3c] sm:$0xf]
        %s1197 = scalar_lea.vmem %s2, 64
        %v1198 = vld [vmem:[%s1197] sm:$0xf]
        %v1199 = vld [vmem:[%s1197 + $0x4] sm:$0xf]
        %v1200 = vld [vmem:[%s1197 + $0x8] sm:$0xf]
        %v1201 = vld [vmem:[%s1197 + $0xc] sm:$0xf]
        %v1202 = vld [vmem:[%s1197 + $0x10] sm:$0xf]
        %v1203 = vld [vmem:[%s1197 + $0x14] sm:$0xf]
        %v1204 = vld [vmem:[%s1197 + $0x18] sm:$0xf]
        %v1205 = vld [vmem:[%s1197 + $0x1c] sm:$0xf]
        %v1206 = vld [vmem:[%s1197 + $0x20] sm:$0xf]
        %v1207 = vld [vmem:[%s1197 + $0x24] sm:$0xf]
        %v1208 = vld [vmem:[%s1197 + $0x28] sm:$0xf]
        %v1209 = vld [vmem:[%s1197 + $0x2c] sm:$0xf]
        %v1210 = vld [vmem:[%s1197 + $0x30] sm:$0xf]
        %v1211 = vld [vmem:[%s1197 + $0x34] sm:$0xf]
        %v1212 = vld [vmem:[%s1197 + $0x38] sm:$0xf]
        %v1213 = vld [vmem:[%s1197 + $0x3c] sm:$0xf]
        %v1222 = vunpack.c.l.b16 %v1051
        %v1223 = vunpack.c.l.b16 %v1053
        %v1224 = vunpack.c.l.b16 %v1055
        %v1225 = vunpack.c.l.b16 %v1057
        %v1226 = vunpack.c.l.b16 %v1059
        %v1227 = vunpack.c.l.b16 %v1061
        %v1228 = vunpack.c.l.b16 %v1063
        %v1229 = vunpack.c.l.b16 %v1065
        %v1230 = vpack.c.b16 %v1223, %v1222
        %v1231 = vpack.c.b16 %v1225, %v1224
        %v1232 = vpack.c.b16 %v1227, %v1226
        %v1233 = vpack.c.b16 %v1229, %v1228
        %v1254 = vunpack.c.l.b16 %v1198
        %v1255 = vunpack.c.l.b16 %v1199
        %v1256 = vunpack.c.l.b16 %v1200
        %v1257 = vunpack.c.l.b16 %v1201
        %v1258 = vunpack.c.l.b16 %v1202
        %v1259 = vunpack.c.l.b16 %v1203
        %v1260 = vunpack.c.l.b16 %v1204
        %v1261 = vunpack.c.l.b16 %v1205
        %v1262 = vunpack.c.l.b16 %v1206
        %v1263 = vunpack.c.l.b16 %v1207
        %v1264 = vunpack.c.l.b16 %v1208
        %v1265 = vunpack.c.l.b16 %v1209
        %v1266 = vunpack.c.l.b16 %v1210
        %v1267 = vunpack.c.l.b16 %v1211
        %v1268 = vunpack.c.l.b16 %v1212
        %v1269 = vunpack.c.l.b16 %v1213
        %v1270 = vpack.c.b16 %v1255, %v1254
        %v1271 = vpack.c.b16 %v1257, %v1256
        %v1272 = vpack.c.b16 %v1259, %v1258
        %v1273 = vpack.c.b16 %v1261, %v1260
        %v1274 = vpack.c.b16 %v1263, %v1262
        %v1275 = vpack.c.b16 %v1265, %v1264
        %v1276 = vpack.c.b16 %v1267, %v1266
        %v1277 = vpack.c.b16 %v1269, %v1268
        %1286 = vmatprep.subr.bf16.mxu0 0
        %1287 = vmatpush1.bf16.msra.mxu0 %v1277
        %1288 = vmatprep.subr.bf16.mxu0 0
        %1289 = vmatpush1.bf16.msra.mxu0 %v1276
        %1290 = vmatprep.subr.bf16.mxu0 0
        %1291 = vmatpush1.bf16.msra.mxu0 %v1275
        %1292 = vmatprep.subr.bf16.mxu0 0
        %1293 = vmatpush1.bf16.msra.mxu0 %v1274
        %1294 = vmatprep.subr.bf16.mxu0 0
        %1295 = vmatpush1.bf16.msra.mxu0 %v1273
        %1296 = vmatprep.subr.bf16.mxu0 0
        %1297 = vmatpush1.bf16.msra.mxu0 %v1272
        %1298 = vmatprep.subr.bf16.mxu0 0
        %1299 = vmatpush1.bf16.msra.mxu0 %v1271
        %1300 = vmatprep.subr.bf16.mxu0 0
        %1301 = vmatpush1.bf16.msra.mxu0 %v1270
        %1302 = vmatprep.subr.bf16.mxu0 0
        %1303 = vmatpush2.bf16.msra.mxu0 0
        %1304 = vmatprep.subr.bf16.mxu0 0
        %1305 = vmatpush2.bf16.msra.mxu0 0
        %1306 = vmatprep.subr.bf16.mxu0 0
        %1307 = vmatpush2.bf16.msra.mxu0 0
        %1308 = vmatprep.subr.bf16.mxu0 0
        %1309 = vmatpush2.bf16.msra.mxu0 0
        %1310 = vmatprep.subr.bf16.mxu0 0
        %1311 = vmatpush2.bf16.msra.mxu0 0
        %1312 = vmatprep.subr.bf16.mxu0 0
        %1313 = vmatpush2.bf16.msra.mxu0 0
        %1314 = vmatprep.subr.bf16.mxu0 0
        %1315 = vmatpush2.bf16.msra.mxu0 0
        %1316 = vmatprep.subr.bf16.mxu0 0
        %1317 = vmatpush2.bf16.msra.mxu0 0
        %1318 = vmatprep.mubr.bf16.mxu0 0
        %1319 = vmatmul.mubr.bf16.gmra.mxu0 %v1230
        %v1320 = vpop.f32.mrf.mxu0
        %v1321 = vadd.f32 0.0, %v1320
        %v1322 = vpop.f32.mrf.mxu0
        %v1323 = vpop.f32.mrf.mxu0
        %v1324 = vadd.f32 0.0, %v1323
        %v1325 = vpop.f32.mrf.mxu0
        %1326 = vmatprep.mubr.bf16.mxu0 0
        %1327 = vmatmul.mubr.bf16.gmra.mxu0 %v1231
        %v1328 = vpop.f32.mrf.mxu0
        %v1329 = vadd.f32 0.0, %v1328
        %v1330 = vpop.f32.mrf.mxu0
        %v1331 = vpop.f32.mrf.mxu0
        %v1332 = vadd.f32 0.0, %v1331
        %v1333 = vpop.f32.mrf.mxu0
        %1334 = vmatprep.mubr.bf16.mxu0 0
        %1335 = vmatmul.mubr.bf16.gmra.mxu0 %v1232
        %v1336 = vpop.f32.mrf.mxu0
        %v1337 = vadd.f32 0.0, %v1336
        %v1338 = vpop.f32.mrf.mxu0
        %v1339 = vpop.f32.mrf.mxu0
        %v1340 = vadd.f32 0.0, %v1339
        %v1341 = vpop.f32.mrf.mxu0
        %1342 = vmatprep.mubr.bf16.mxu0 0
        %1343 = vmatmul.mubr.bf16.gmra.mxu0 %v1233
        %v1344 = vpop.f32.mrf.mxu0
        %v1345 = vadd.f32 0.0, %v1344
        %v1346 = vpop.f32.mrf.mxu0
        %v1347 = vpop.f32.mrf.mxu0
        %v1348 = vadd.f32 0.0, %v1347
        %v1349 = vpop.f32.mrf.mxu0
        %1350 = vdwg.mxu0
        %v1351 = vunpack.c.l.b16 %v1082
        %v1352 = vunpack.c.l.b16 %v1096
        %v1353 = vunpack.c.l.b16 %v1110
        %v1354 = vunpack.c.l.b16 %v1124
        %v1355 = vunpack.c.l.b16 %v1138
        %v1356 = vunpack.c.l.b16 %v1152
        %v1357 = vunpack.c.l.b16 %v1166
        %v1358 = vunpack.c.l.b16 %v1180
        %v1359 = vpack.c.b16 %v1352, %v1351
        %v1360 = vpack.c.b16 %v1354, %v1353
        %v1361 = vpack.c.b16 %v1356, %v1355
        %v1362 = vpack.c.b16 %v1358, %v1357
        %v1383 = vunpack.c.l.b16 %v1181
        %v1384 = vunpack.c.l.b16 %v1182
        %v1385 = vunpack.c.l.b16 %v1183
        %v1386 = vunpack.c.l.b16 %v1184
        %v1387 = vunpack.c.l.b16 %v1185
        %v1388 = vunpack.c.l.b16 %v1186
        %v1389 = vunpack.c.l.b16 %v1187
        %v1390 = vunpack.c.l.b16 %v1188
        %v1391 = vunpack.c.l.b16 %v1189
        %v1392 = vunpack.c.l.b16 %v1190
        %v1393 = vunpack.c.l.b16 %v1191
        %v1394 = vunpack.c.l.b16 %v1192
        %v1395 = vunpack.c.l.b16 %v1193
        %v1396 = vunpack.c.l.b16 %v1194
        %v1397 = vunpack.c.l.b16 %v1195
        %v1398 = vunpack.c.l.b16 %v1196
        %v1399 = vpack.c.b16 %v1384, %v1383
        %v1400 = vpack.c.b16 %v1386, %v1385
        %v1401 = vpack.c.b16 %v1388, %v1387
        %v1402 = vpack.c.b16 %v1390, %v1389
        %v1403 = vpack.c.b16 %v1392, %v1391
        %v1404 = vpack.c.b16 %v1394, %v1393
        %v1405 = vpack.c.b16 %v1396, %v1395
        %v1406 = vpack.c.b16 %v1398, %v1397
        %1415 = vmatprep.subr.bf16.mxu0 0
        %1416 = vmatpush1.bf16.msra.mxu0 %v1406
        %1417 = vmatprep.subr.bf16.mxu0 0
        %1418 = vmatpush1.bf16.msra.mxu0 %v1405
        %1419 = vmatprep.subr.bf16.mxu0 0
        %1420 = vmatpush1.bf16.msra.mxu0 %v1404
        %1421 = vmatprep.subr.bf16.mxu0 0
        %1422 = vmatpush1.bf16.msra.mxu0 %v1403
        %1423 = vmatprep.subr.bf16.mxu0 0
        %1424 = vmatpush1.bf16.msra.mxu0 %v1402
        %1425 = vmatprep.subr.bf16.mxu0 0
        %1426 = vmatpush1.bf16.msra.mxu0 %v1401
        %1427 = vmatprep.subr.bf16.mxu0 0
        %1428 = vmatpush1.bf16.msra.mxu0 %v1400
        %1429 = vmatprep.subr.bf16.mxu0 0
        %1430 = vmatpush1.bf16.msra.mxu0 %v1399
        %1431 = vmatprep.subr.bf16.mxu0 0
        %1432 = vmatpush2.bf16.msra.mxu0 0
        %1433 = vmatprep.subr.bf16.mxu0 0
        %1434 = vmatpush2.bf16.msra.mxu0 0
        %1435 = vmatprep.subr.bf16.mxu0 0
        %1436 = vmatpush2.bf16.msra.mxu0 0
        %1437 = vmatprep.subr.bf16.mxu0 0
        %1438 = vmatpush2.bf16.msra.mxu0 0
        %1439 = vmatprep.subr.bf16.mxu0 0
        %1440 = vmatpush2.bf16.msra.mxu0 0
        %1441 = vmatprep.subr.bf16.mxu0 0
        %1442 = vmatpush2.bf16.msra.mxu0 0
        %1443 = vmatprep.subr.bf16.mxu0 0
        %1444 = vmatpush2.bf16.msra.mxu0 0
        %1445 = vmatprep.subr.bf16.mxu0 0
        %1446 = vmatpush2.bf16.msra.mxu0 0
        %1447 = vmatprep.mubr.bf16.mxu0 0
        %1448 = vmatmul.mubr.bf16.gmra.mxu0 %v1359
        %v1449 = vpop.f32.mrf.mxu0
        %v1450 = vadd.f32 %v1321, %v1449
        %v1451 = vpop.f32.mrf.mxu0
        %v1452 = vpop.f32.mrf.mxu0
        %v1453 = vadd.f32 %v1324, %v1452
        %v1454 = vpop.f32.mrf.mxu0
        %1455 = vmatprep.mubr.bf16.mxu0 0
        %1456 = vmatmul.mubr.bf16.gmra.mxu0 %v1360
        %v1457 = vpop.f32.mrf.mxu0
        %v1458 = vadd.f32 %v1329, %v1457
        %v1459 = vpop.f32.mrf.mxu0
        %v1460 = vpop.f32.mrf.mxu0
        %v1461 = vadd.f32 %v1332, %v1460
        %v1462 = vpop.f32.mrf.mxu0
        %1463 = vmatprep.mubr.bf16.mxu0 0
        %1464 = vmatmul.mubr.bf16.gmra.mxu0 %v1361
        %v1465 = vpop.f32.mrf.mxu0
        %v1466 = vadd.f32 %v1337, %v1465
        %v1467 = vpop.f32.mrf.mxu0
        %v1468 = vpop.f32.mrf.mxu0
        %v1469 = vadd.f32 %v1340, %v1468
        %v1470 = vpop.f32.mrf.mxu0
        %1471 = vmatprep.mubr.bf16.mxu0 0
        %1472 = vmatmul.mubr.bf16.gmra.mxu0 %v1362
        %v1473 = vpop.f32.mrf.mxu0
        %v1474 = vadd.f32 %v1345, %v1473
        %v1475 = vpop.f32.mrf.mxu0
        %v1476 = vpop.f32.mrf.mxu0
        %v1477 = vadd.f32 %v1348, %v1476
        %v1478 = vpop.f32.mrf.mxu0
        %1479 = vdwg.mxu0
        %v1481 = vshrl.u32 %v1049, 16
        %v1483 = vrot.slane %v1481, 4
        %v1484 = vshll.u32 %v1049, 16
        %v1486 = vrot.slane %v1484, 5
        %v1487 = vor.u32 %v1483, %v1486
        %v1488 = vrot.slane %v1487, 4
        %v1490 = vshll.u32 %v1050, 16
        %v1492 = vrot.slane %v1490, 5
        %v1493 = vsel %vm347, %v1488, %v1492
        %s1494 = scalar_lea.vmem %s2, 128
        %v1495 = vld [vmem:[%s1494] sm:$0xf]
        %v1496 = vld [vmem:[%s1494 + $0x4] sm:$0xf]
        %v1497 = vld [vmem:[%s1494 + $0x8] sm:$0xf]
        %v1498 = vld [vmem:[%s1494 + $0xc] sm:$0xf]
        %v1499 = vld [vmem:[%s1494 + $0x10] sm:$0xf]
        %v1500 = vld [vmem:[%s1494 + $0x14] sm:$0xf]
        %v1501 = vld [vmem:[%s1494 + $0x18] sm:$0xf]
        %v1502 = vld [vmem:[%s1494 + $0x1c] sm:$0xf]
        %v1503 = vld [vmem:[%s1494 + $0x20] sm:$0xf]
        %v1504 = vld [vmem:[%s1494 + $0x24] sm:$0xf]
        %v1505 = vld [vmem:[%s1494 + $0x28] sm:$0xf]
        %v1506 = vld [vmem:[%s1494 + $0x2c] sm:$0xf]
        %v1507 = vld [vmem:[%s1494 + $0x30] sm:$0xf]
        %v1508 = vld [vmem:[%s1494 + $0x34] sm:$0xf]
        %v1509 = vld [vmem:[%s1494 + $0x38] sm:$0xf]
        %v1510 = vld [vmem:[%s1494 + $0x3c] sm:$0xf]
        %v1511 = vunpack.c.l.b16 %v1493
        %v1512 = vpack.c.b16 %v1351, %v1511
        %v1513 = vpack.c.b16 %v1353, %v1352
        %v1514 = vpack.c.b16 %v1355, %v1354
        %v1515 = vpack.c.b16 %v1357, %v1356
        %v1536 = vunpack.c.l.b16 %v1495
        %v1537 = vunpack.c.l.b16 %v1496
        %v1538 = vunpack.c.l.b16 %v1497
        %v1539 = vunpack.c.l.b16 %v1498
        %v1540 = vunpack.c.l.b16 %v1499
        %v1541 = vunpack.c.l.b16 %v1500
        %v1542 = vunpack.c.l.b16 %v1501
        %v1543 = vunpack.c.l.b16 %v1502
        %v1544 = vunpack.c.l.b16 %v1503
        %v1545 = vunpack.c.l.b16 %v1504
        %v1546 = vunpack.c.l.b16 %v1505
        %v1547 = vunpack.c.l.b16 %v1506
        %v1548 = vunpack.c.l.b16 %v1507
        %v1549 = vunpack.c.l.b16 %v1508
        %v1550 = vunpack.c.l.b16 %v1509
        %v1551 = vunpack.c.l.b16 %v1510
        %v1552 = vpack.c.b16 %v1537, %v1536
        %v1553 = vpack.c.b16 %v1539, %v1538
        %v1554 = vpack.c.b16 %v1541, %v1540
        %v1555 = vpack.c.b16 %v1543, %v1542
        %v1556 = vpack.c.b16 %v1545, %v1544
        %v1557 = vpack.c.b16 %v1547, %v1546
        %v1558 = vpack.c.b16 %v1549, %v1548
        %v1559 = vpack.c.b16 %v1551, %v1550
        %1568 = vmatprep.subr.bf16.mxu0 0
        %1569 = vmatpush1.bf16.msra.mxu0 %v1559
        %1570 = vmatprep.subr.bf16.mxu0 0
        %1571 = vmatpush1.bf16.msra.mxu0 %v1558
        %1572 = vmatprep.subr.bf16.mxu0 0
        %1573 = vmatpush1.bf16.msra.mxu0 %v1557
        %1574 = vmatprep.subr.bf16.mxu0 0
        %1575 = vmatpush1.bf16.msra.mxu0 %v1556
        %1576 = vmatprep.subr.bf16.mxu0 0
        %1577 = vmatpush1.bf16.msra.mxu0 %v1555
        %1578 = vmatprep.subr.bf16.mxu0 0
        %1579 = vmatpush1.bf16.msra.mxu0 %v1554
        %1580 = vmatprep.subr.bf16.mxu0 0
        %1581 = vmatpush1.bf16.msra.mxu0 %v1553
        %1582 = vmatprep.subr.bf16.mxu0 0
        %1583 = vmatpush1.bf16.msra.mxu0 %v1552
        %1584 = vmatprep.subr.bf16.mxu0 0
        %1585 = vmatpush2.bf16.msra.mxu0 0
        %1586 = vmatprep.subr.bf16.mxu0 0
        %1587 = vmatpush2.bf16.msra.mxu0 0
        %1588 = vmatprep.subr.bf16.mxu0 0
        %1589 = vmatpush2.bf16.msra.mxu0 0
        %1590 = vmatprep.subr.bf16.mxu0 0
        %1591 = vmatpush2.bf16.msra.mxu0 0
        %1592 = vmatprep.subr.bf16.mxu0 0
        %1593 = vmatpush2.bf16.msra.mxu0 0
        %1594 = vmatprep.subr.bf16.mxu0 0
        %1595 = vmatpush2.bf16.msra.mxu0 0
        %1596 = vmatprep.subr.bf16.mxu0 0
        %1597 = vmatpush2.bf16.msra.mxu0 0
        %1598 = vmatprep.subr.bf16.mxu0 0
        %1599 = vmatpush2.bf16.msra.mxu0 0
        %1600 = vmatprep.mubr.bf16.mxu0 0
        %1601 = vmatmul.mubr.bf16.gmra.mxu0 %v1512
        %v1602 = vpop.f32.mrf.mxu0
        %v1603 = vadd.f32 0.0, %v1602
        %v1604 = vpop.f32.mrf.mxu0
        %v1605 = vpop.f32.mrf.mxu0
        %v1606 = vadd.f32 0.0, %v1605
        %v1607 = vpop.f32.mrf.mxu0
        %1608 = vmatprep.mubr.bf16.mxu0 0
        %1609 = vmatmul.mubr.bf16.gmra.mxu0 %v1513
        %v1610 = vpop.f32.mrf.mxu0
        %v1611 = vadd.f32 0.0, %v1610
        %v1612 = vpop.f32.mrf.mxu0
        %v1613 = vpop.f32.mrf.mxu0
        %v1614 = vadd.f32 0.0, %v1613
        %v1615 = vpop.f32.mrf.mxu0
        %1616 = vmatprep.mubr.bf16.mxu0 0
        %1617 = vmatmul.mubr.bf16.gmra.mxu0 %v1514
        %v1618 = vpop.f32.mrf.mxu0
        %v1619 = vadd.f32 0.0, %v1618
        %v1620 = vpop.f32.mrf.mxu0
        %v1621 = vpop.f32.mrf.mxu0
        %v1622 = vadd.f32 0.0, %v1621
        %v1623 = vpop.f32.mrf.mxu0
        %1624 = vmatprep.mubr.bf16.mxu0 0
        %1625 = vmatmul.mubr.bf16.gmra.mxu0 %v1515
        %v1626 = vpop.f32.mrf.mxu0
        %v1627 = vadd.f32 0.0, %v1626
        %v1628 = vpop.f32.mrf.mxu0
        %v1629 = vpop.f32.mrf.mxu0
        %v1630 = vadd.f32 0.0, %v1629
        %v1631 = vpop.f32.mrf.mxu0
        %1632 = vdwg.mxu0
        %v1633 = vadd.f32 %v1450, %v1603
        %v1634 = vadd.f32 %v1453, %v1606
        %v1635 = vadd.f32 %v1458, %v1611
        %v1636 = vadd.f32 %v1461, %v1614
        %v1637 = vadd.f32 %v1466, %v1619
        %v1638 = vadd.f32 %v1469, %v1622
        %v1639 = vadd.f32 %v1474, %v1627
        %v1640 = vadd.f32 %v1477, %v1630
        %s1641 = scalar_lea.vmem %s2, 192
        %v1642 = vld [vmem:[%s1641] sm:$0xf]
        %v1643 = vld [vmem:[%s1641 + $0x4] sm:$0xf]
        %v1644 = vld [vmem:[%s1641 + $0x8] sm:$0xf]
        %v1645 = vld [vmem:[%s1641 + $0xc] sm:$0xf]
        %v1646 = vld [vmem:[%s1641 + $0x10] sm:$0xf]
        %v1647 = vld [vmem:[%s1641 + $0x14] sm:$0xf]
        %v1648 = vld [vmem:[%s1641 + $0x18] sm:$0xf]
        %v1649 = vld [vmem:[%s1641 + $0x1c] sm:$0xf]
        %v1650 = vld [vmem:[%s1641 + $0x20] sm:$0xf]
        %v1651 = vld [vmem:[%s1641 + $0x24] sm:$0xf]
        %v1652 = vld [vmem:[%s1641 + $0x28] sm:$0xf]
        %v1653 = vld [vmem:[%s1641 + $0x2c] sm:$0xf]
        %v1654 = vld [vmem:[%s1641 + $0x30] sm:$0xf]
        %v1655 = vld [vmem:[%s1641 + $0x34] sm:$0xf]
        %v1656 = vld [vmem:[%s1641 + $0x38] sm:$0xf]
        %v1657 = vld [vmem:[%s1641 + $0x3c] sm:$0xf]
        %v1659 = vunpack.c.l.b16 %v1049
        %v1660 = vpack.c.b16 %v1222, %v1659
        %v1661 = vpack.c.b16 %v1224, %v1223
        %v1662 = vpack.c.b16 %v1226, %v1225
        %v1663 = vpack.c.b16 %v1228, %v1227
        %v1684 = vunpack.c.l.b16 %v1642
        %v1685 = vunpack.c.l.b16 %v1643
        %v1686 = vunpack.c.l.b16 %v1644
        %v1687 = vunpack.c.l.b16 %v1645
        %v1688 = vunpack.c.l.b16 %v1646
        %v1689 = vunpack.c.l.b16 %v1647
        %v1690 = vunpack.c.l.b16 %v1648
        %v1691 = vunpack.c.l.b16 %v1649
        %v1692 = vunpack.c.l.b16 %v1650
        %v1693 = vunpack.c.l.b16 %v1651
        %v1694 = vunpack.c.l.b16 %v1652
        %v1695 = vunpack.c.l.b16 %v1653
        %v1696 = vunpack.c.l.b16 %v1654
        %v1697 = vunpack.c.l.b16 %v1655
        %v1698 = vunpack.c.l.b16 %v1656
        %v1699 = vunpack.c.l.b16 %v1657
        %v1700 = vpack.c.b16 %v1685, %v1684
        %v1701 = vpack.c.b16 %v1687, %v1686
        %v1702 = vpack.c.b16 %v1689, %v1688
        %v1703 = vpack.c.b16 %v1691, %v1690
        %v1704 = vpack.c.b16 %v1693, %v1692
        %v1705 = vpack.c.b16 %v1695, %v1694
        %v1706 = vpack.c.b16 %v1697, %v1696
        %v1707 = vpack.c.b16 %v1699, %v1698
        %1716 = vmatprep.subr.bf16.mxu0 0
        %1717 = vmatpush1.bf16.msra.mxu0 %v1707
        %1718 = vmatprep.subr.bf16.mxu0 0
        %1719 = vmatpush1.bf16.msra.mxu0 %v1706
        %1720 = vmatprep.subr.bf16.mxu0 0
        %1721 = vmatpush1.bf16.msra.mxu0 %v1705
        %1722 = vmatprep.subr.bf16.mxu0 0
        %1723 = vmatpush1.bf16.msra.mxu0 %v1704
        %1724 = vmatprep.subr.bf16.mxu0 0
        %1725 = vmatpush1.bf16.msra.mxu0 %v1703
        %1726 = vmatprep.subr.bf16.mxu0 0
        %1727 = vmatpush1.bf16.msra.mxu0 %v1702
        %1728 = vmatprep.subr.bf16.mxu0 0
        %1729 = vmatpush1.bf16.msra.mxu0 %v1701
        %1730 = vmatprep.subr.bf16.mxu0 0
        %1731 = vmatpush1.bf16.msra.mxu0 %v1700
        %1732 = vmatprep.subr.bf16.mxu0 0
        %1733 = vmatpush2.bf16.msra.mxu0 0
        %1734 = vmatprep.subr.bf16.mxu0 0
        %1735 = vmatpush2.bf16.msra.mxu0 0
        %1736 = vmatprep.subr.bf16.mxu0 0
        %1737 = vmatpush2.bf16.msra.mxu0 0
        %1738 = vmatprep.subr.bf16.mxu0 0
        %1739 = vmatpush2.bf16.msra.mxu0 0
        %1740 = vmatprep.subr.bf16.mxu0 0
        %1741 = vmatpush2.bf16.msra.mxu0 0
        %1742 = vmatprep.subr.bf16.mxu0 0
        %1743 = vmatpush2.bf16.msra.mxu0 0
        %1744 = vmatprep.subr.bf16.mxu0 0
        %1745 = vmatpush2.bf16.msra.mxu0 0
        %1746 = vmatprep.subr.bf16.mxu0 0
        %1747 = vmatpush2.bf16.msra.mxu0 0
        %1748 = vmatprep.mubr.bf16.mxu0 0
        %1749 = vmatmul.mubr.bf16.gmra.mxu0 %v1660
        %v1750 = vpop.f32.mrf.mxu0
        %v1751 = vadd.f32 0.0, %v1750
        %v1752 = vpop.f32.mrf.mxu0
        %v1753 = vpop.f32.mrf.mxu0
        %v1754 = vadd.f32 0.0, %v1753
        %v1755 = vpop.f32.mrf.mxu0
        %1756 = vmatprep.mubr.bf16.mxu0 0
        %1757 = vmatmul.mubr.bf16.gmra.mxu0 %v1661
        %v1758 = vpop.f32.mrf.mxu0
        %v1759 = vadd.f32 0.0, %v1758
        %v1760 = vpop.f32.mrf.mxu0
        %v1761 = vpop.f32.mrf.mxu0
        %v1762 = vadd.f32 0.0, %v1761
        %v1763 = vpop.f32.mrf.mxu0
        %1764 = vmatprep.mubr.bf16.mxu0 0
        %1765 = vmatmul.mubr.bf16.gmra.mxu0 %v1662
        %v1766 = vpop.f32.mrf.mxu0
        %v1767 = vadd.f32 0.0, %v1766
        %v1768 = vpop.f32.mrf.mxu0
        %v1769 = vpop.f32.mrf.mxu0
        %v1770 = vadd.f32 0.0, %v1769
        %v1771 = vpop.f32.mrf.mxu0
        %1772 = vmatprep.mubr.bf16.mxu0 0
        %1773 = vmatmul.mubr.bf16.gmra.mxu0 %v1663
        %v1774 = vpop.f32.mrf.mxu0
        %v1775 = vadd.f32 0.0, %v1774
        %v1776 = vpop.f32.mrf.mxu0
        %v1777 = vpop.f32.mrf.mxu0
        %v1778 = vadd.f32 0.0, %v1777
        %v1779 = vpop.f32.mrf.mxu0
        %1780 = vdwg.mxu0
        %v1781 = vadd.f32 %v1633, %v1751
        %v1782 = vadd.f32 %v1634, %v1754
        %v1783 = vadd.f32 %v1635, %v1759
        %v1784 = vadd.f32 %v1636, %v1762
        %v1785 = vadd.f32 %v1637, %v1767
        %v1786 = vadd.f32 %v1638, %v1770
        %v1787 = vadd.f32 %v1639, %v1775
        %v1788 = vadd.f32 %v1640, %v1778
        %v1789 = vadd.f32 %v1781, %v1782
        %v1790 = vadd.f32 %v1789, %v1783
        %v1791 = vadd.f32 %v1790, %v1784
        %v1792 = vadd.f32 %v1791, %v1785
        %v1793 = vadd.f32 %v1792, %v1786
        %v1794 = vadd.f32 %v1793, %v1787
        %v1795 = vadd.f32 %v1794, %v1788
        %v1796 = vrot.slane %v1795, 4
        %v1797 = vadd.f32 %v1795, %v1796
        %v1798 = vrot.slane %v1797, 2
        %v1799 = vadd.f32 %v1797, %v1798
        %v1800 = vrot.slane %v1799, 1
        %v1801 = vadd.f32 %v1799, %v1800
        %v1802 = vadd.f32 %v1801, 0.0
        %v1803 = vmul.f32 %v1781, %v1781
        %v1804 = vmul.f32 %v1782, %v1782
        %v1805 = vmul.f32 %v1783, %v1783
        %v1806 = vmul.f32 %v1784, %v1784
        %v1807 = vmul.f32 %v1785, %v1785
        %v1808 = vmul.f32 %v1786, %v1786
        %v1809 = vmul.f32 %v1787, %v1787
        %v1810 = vmul.f32 %v1788, %v1788
        %v1811 = vadd.f32 %v1803, %v1804
        %v1812 = vadd.f32 %v1811, %v1805
        %v1813 = vadd.f32 %v1812, %v1806
        %v1814 = vadd.f32 %v1813, %v1807
        %v1815 = vadd.f32 %v1814, %v1808
        %v1816 = vadd.f32 %v1815, %v1809
        %v1817 = vadd.f32 %v1816, %v1810
        %v1818 = vrot.slane %v1817, 4
        %v1819 = vadd.f32 %v1817, %v1818
        %v1820 = vrot.slane %v1819, 2
        %v1821 = vadd.f32 %v1819, %v1820
        %v1822 = vrot.slane %v1821, 1
        %v1823 = vadd.f32 %v1821, %v1822
        %v1824 = vadd.f32 %v1823, 0.0
        %v1825 = vpack.c.bf16 %v1781, %v1781
        %v1826 = vpack.c.bf16 %v1782, %v1782
        %v1827 = vpack.c.bf16 %v1783, %v1783
        %v1828 = vpack.c.bf16 %v1784, %v1784
        %v1829 = vpack.c.bf16 %v1785, %v1785
        %v1830 = vpack.c.bf16 %v1786, %v1786
        %v1831 = vpack.c.bf16 %v1787, %v1787
        %v1832 = vpack.c.bf16 %v1788, %v1788
        %1833 = vst [vmem:[%s187] sm:$0xf] %v1825
        %1834 = vst [vmem:[%s187 + $0x4] sm:$0xf] %v1826
        %1835 = vst [vmem:[%s187 + $0x8] sm:$0xf] %v1827
        %1836 = vst [vmem:[%s187 + $0xc] sm:$0xf] %v1828
        %1837 = vst [vmem:[%s187 + $0x10] sm:$0xf] %v1829
        %1838 = vst [vmem:[%s187 + $0x14] sm:$0xf] %v1830
        %1839 = vst [vmem:[%s187 + $0x18] sm:$0xf] %v1831
        %1840 = vst [vmem:[%s187 + $0x1c] sm:$0xf] %v1832
        %s1841 = scalar_lea.vmem %s2, 256
        %v1842 = vld [vmem:[%s1841] sm:$0xf]
        %v1843 = vld [vmem:[%s1841 + $0x4] sm:$0xf]
        %v1844 = vld [vmem:[%s1841 + $0x8] sm:$0xf]
        %v1845 = vld [vmem:[%s1841 + $0xc] sm:$0xf]
        %v1846 = vld [vmem:[%s1841 + $0x10] sm:$0xf]
        %v1847 = vld [vmem:[%s1841 + $0x14] sm:$0xf]
        %v1848 = vld [vmem:[%s1841 + $0x18] sm:$0xf]
        %v1849 = vld [vmem:[%s1841 + $0x1c] sm:$0xf]
        %v1850 = vld [vmem:[%s1841 + $0x20] sm:$0xf]
        %v1851 = vld [vmem:[%s1841 + $0x24] sm:$0xf]
        %v1852 = vld [vmem:[%s1841 + $0x28] sm:$0xf]
        %v1853 = vld [vmem:[%s1841 + $0x2c] sm:$0xf]
        %v1854 = vld [vmem:[%s1841 + $0x30] sm:$0xf]
        %v1855 = vld [vmem:[%s1841 + $0x34] sm:$0xf]
        %v1856 = vld [vmem:[%s1841 + $0x38] sm:$0xf]
        %v1857 = vld [vmem:[%s1841 + $0x3c] sm:$0xf]
        %vm1866 = vcmask 1042432
        %vm1867 = vcmask 1046532
        %vm1868 = vmor %vm1866, %vm1867
        %v1869 = vrot.slane %v1051, 5
        %v1870 = vrot.slane %v1869, 4
        %v1871 = vrot.slane %v1052, 5
        %v1872 = vsel %vm1868, %v1870, %v1871
        %v1873 = vrot.slane %v1053, 5
        %v1874 = vrot.slane %v1873, 4
        %v1875 = vrot.slane %v1054, 5
        %v1876 = vsel %vm1868, %v1874, %v1875
        %v1877 = vrot.slane %v1055, 5
        %v1878 = vrot.slane %v1877, 4
        %v1879 = vrot.slane %v1056, 5
        %v1880 = vsel %vm1868, %v1878, %v1879
        %v1881 = vrot.slane %v1057, 5
        %v1882 = vrot.slane %v1881, 4
        %v1883 = vrot.slane %v1058, 5
        %v1884 = vsel %vm1868, %v1882, %v1883
        %v1885 = vrot.slane %v1059, 5
        %v1886 = vrot.slane %v1885, 4
        %v1887 = vrot.slane %v1060, 5
        %v1888 = vsel %vm1868, %v1886, %v1887
        %v1889 = vrot.slane %v1061, 5
        %v1890 = vrot.slane %v1889, 4
        %v1891 = vrot.slane %v1062, 5
        %v1892 = vsel %vm1868, %v1890, %v1891
        %v1893 = vrot.slane %v1063, 5
        %v1894 = vrot.slane %v1893, 4
        %v1895 = vrot.slane %v1064, 5
        %v1896 = vsel %vm1868, %v1894, %v1895
        %v1897 = vrot.slane %v1065, 5
        %v1898 = vrot.slane %v1897, 4
        %v1899 = vrot.slane %v1066, 5
        %v1900 = vsel %vm1868, %v1898, %v1899
        %s1901 = scalar_lea.vmem %s2, 320
        %v1902 = vld [vmem:[%s1901] sm:$0xf]
        %v1903 = vld [vmem:[%s1901 + $0x4] sm:$0xf]
        %v1904 = vld [vmem:[%s1901 + $0x8] sm:$0xf]
        %v1905 = vld [vmem:[%s1901 + $0xc] sm:$0xf]
        %v1906 = vld [vmem:[%s1901 + $0x10] sm:$0xf]
        %v1907 = vld [vmem:[%s1901 + $0x14] sm:$0xf]
        %v1908 = vld [vmem:[%s1901 + $0x18] sm:$0xf]
        %v1909 = vld [vmem:[%s1901 + $0x1c] sm:$0xf]
        %v1910 = vld [vmem:[%s1901 + $0x20] sm:$0xf]
        %v1911 = vld [vmem:[%s1901 + $0x24] sm:$0xf]
        %v1912 = vld [vmem:[%s1901 + $0x28] sm:$0xf]
        %v1913 = vld [vmem:[%s1901 + $0x2c] sm:$0xf]
        %v1914 = vld [vmem:[%s1901 + $0x30] sm:$0xf]
        %v1915 = vld [vmem:[%s1901 + $0x34] sm:$0xf]
        %v1916 = vld [vmem:[%s1901 + $0x38] sm:$0xf]
        %v1917 = vld [vmem:[%s1901 + $0x3c] sm:$0xf]
        %v1918 = vunpack.c.l.b16 %v1872
        %v1919 = vunpack.c.l.b16 %v1876
        %v1920 = vunpack.c.l.b16 %v1880
        %v1921 = vunpack.c.l.b16 %v1884
        %v1922 = vunpack.c.l.b16 %v1888
        %v1923 = vunpack.c.l.b16 %v1892
        %v1924 = vunpack.c.l.b16 %v1896
        %v1925 = vunpack.c.l.b16 %v1900
        %v1926 = vpack.c.b16 %v1919, %v1918
        %v1927 = vpack.c.b16 %v1921, %v1920
        %v1928 = vpack.c.b16 %v1923, %v1922
        %v1929 = vpack.c.b16 %v1925, %v1924
        %v1950 = vunpack.c.l.b16 %v1902
        %v1951 = vunpack.c.l.b16 %v1903
        %v1952 = vunpack.c.l.b16 %v1904
        %v1953 = vunpack.c.l.b16 %v1905
        %v1954 = vunpack.c.l.b16 %v1906
        %v1955 = vunpack.c.l.b16 %v1907
        %v1956 = vunpack.c.l.b16 %v1908
        %v1957 = vunpack.c.l.b16 %v1909
        %v1958 = vunpack.c.l.b16 %v1910
        %v1959 = vunpack.c.l.b16 %v1911
        %v1960 = vunpack.c.l.b16 %v1912
        %v1961 = vunpack.c.l.b16 %v1913
        %v1962 = vunpack.c.l.b16 %v1914
        %v1963 = vunpack.c.l.b16 %v1915
        %v1964 = vunpack.c.l.b16 %v1916
        %v1965 = vunpack.c.l.b16 %v1917
        %v1966 = vpack.c.b16 %v1951, %v1950
        %v1967 = vpack.c.b16 %v1953, %v1952
        %v1968 = vpack.c.b16 %v1955, %v1954
        %v1969 = vpack.c.b16 %v1957, %v1956
        %v1970 = vpack.c.b16 %v1959, %v1958
        %v1971 = vpack.c.b16 %v1961, %v1960
        %v1972 = vpack.c.b16 %v1963, %v1962
        %v1973 = vpack.c.b16 %v1965, %v1964
        %1982 = vmatprep.subr.bf16.mxu0 0
        %1983 = vmatpush1.bf16.msra.mxu0 %v1973
        %1984 = vmatprep.subr.bf16.mxu0 0
        %1985 = vmatpush1.bf16.msra.mxu0 %v1972
        %1986 = vmatprep.subr.bf16.mxu0 0
        %1987 = vmatpush1.bf16.msra.mxu0 %v1971
        %1988 = vmatprep.subr.bf16.mxu0 0
        %1989 = vmatpush1.bf16.msra.mxu0 %v1970
        %1990 = vmatprep.subr.bf16.mxu0 0
        %1991 = vmatpush1.bf16.msra.mxu0 %v1969
        %1992 = vmatprep.subr.bf16.mxu0 0
        %1993 = vmatpush1.bf16.msra.mxu0 %v1968
        %1994 = vmatprep.subr.bf16.mxu0 0
        %1995 = vmatpush1.bf16.msra.mxu0 %v1967
        %1996 = vmatprep.subr.bf16.mxu0 0
        %1997 = vmatpush1.bf16.msra.mxu0 %v1966
        %1998 = vmatprep.subr.bf16.mxu0 0
        %1999 = vmatpush2.bf16.msra.mxu0 0
        %2000 = vmatprep.subr.bf16.mxu0 0
        %2001 = vmatpush2.bf16.msra.mxu0 0
        %2002 = vmatprep.subr.bf16.mxu0 0
        %2003 = vmatpush2.bf16.msra.mxu0 0
        %2004 = vmatprep.subr.bf16.mxu0 0
        %2005 = vmatpush2.bf16.msra.mxu0 0
        %2006 = vmatprep.subr.bf16.mxu0 0
        %2007 = vmatpush2.bf16.msra.mxu0 0
        %2008 = vmatprep.subr.bf16.mxu0 0
        %2009 = vmatpush2.bf16.msra.mxu0 0
        %2010 = vmatprep.subr.bf16.mxu0 0
        %2011 = vmatpush2.bf16.msra.mxu0 0
        %2012 = vmatprep.subr.bf16.mxu0 0
        %2013 = vmatpush2.bf16.msra.mxu0 0
        %2014 = vmatprep.mubr.bf16.mxu0 0
        %2015 = vmatmul.mubr.bf16.gmra.mxu0 %v1926
        %v2016 = vpop.f32.mrf.mxu0
        %v2017 = vadd.f32 0.0, %v2016
        %v2018 = vpop.f32.mrf.mxu0
        %v2019 = vpop.f32.mrf.mxu0
        %v2020 = vadd.f32 0.0, %v2019
        %v2021 = vpop.f32.mrf.mxu0
        %2022 = vmatprep.mubr.bf16.mxu0 0
        %2023 = vmatmul.mubr.bf16.gmra.mxu0 %v1927
        %v2024 = vpop.f32.mrf.mxu0
        %v2025 = vadd.f32 0.0, %v2024
        %v2026 = vpop.f32.mrf.mxu0
        %v2027 = vpop.f32.mrf.mxu0
        %v2028 = vadd.f32 0.0, %v2027
        %v2029 = vpop.f32.mrf.mxu0
        %2030 = vmatprep.mubr.bf16.mxu0 0
        %2031 = vmatmul.mubr.bf16.gmra.mxu0 %v1928
        %v2032 = vpop.f32.mrf.mxu0
        %v2033 = vadd.f32 0.0, %v2032
        %v2034 = vpop.f32.mrf.mxu0
        %v2035 = vpop.f32.mrf.mxu0
        %v2036 = vadd.f32 0.0, %v2035
        %v2037 = vpop.f32.mrf.mxu0
        %2038 = vmatprep.mubr.bf16.mxu0 0
        %2039 = vmatmul.mubr.bf16.gmra.mxu0 %v1929
        %v2040 = vpop.f32.mrf.mxu0
        %v2041 = vadd.f32 0.0, %v2040
        %v2042 = vpop.f32.mrf.mxu0
        %v2043 = vpop.f32.mrf.mxu0
        %v2044 = vadd.f32 0.0, %v2043
        %v2045 = vpop.f32.mrf.mxu0
        %2046 = vdwg.mxu0
        %v2063 = vunpack.c.l.b16 %v1842
        %v2064 = vunpack.c.l.b16 %v1843
        %v2065 = vunpack.c.l.b16 %v1844
        %v2066 = vunpack.c.l.b16 %v1845
        %v2067 = vunpack.c.l.b16 %v1846
        %v2068 = vunpack.c.l.b16 %v1847
        %v2069 = vunpack.c.l.b16 %v1848
        %v2070 = vunpack.c.l.b16 %v1849
        %v2071 = vunpack.c.l.b16 %v1850
        %v2072 = vunpack.c.l.b16 %v1851
        %v2073 = vunpack.c.l.b16 %v1852
        %v2074 = vunpack.c.l.b16 %v1853
        %v2075 = vunpack.c.l.b16 %v1854
        %v2076 = vunpack.c.l.b16 %v1855
        %v2077 = vunpack.c.l.b16 %v1856
        %v2078 = vunpack.c.l.b16 %v1857
        %v2079 = vpack.c.b16 %v2064, %v2063
        %v2080 = vpack.c.b16 %v2066, %v2065
        %v2081 = vpack.c.b16 %v2068, %v2067
        %v2082 = vpack.c.b16 %v2070, %v2069
        %v2083 = vpack.c.b16 %v2072, %v2071
        %v2084 = vpack.c.b16 %v2074, %v2073
        %v2085 = vpack.c.b16 %v2076, %v2075
        %v2086 = vpack.c.b16 %v2078, %v2077
        %2095 = vmatprep.subr.bf16.mxu0 0
        %2096 = vmatpush1.bf16.msra.mxu0 %v2086
        %2097 = vmatprep.subr.bf16.mxu0 0
        %2098 = vmatpush1.bf16.msra.mxu0 %v2085
        %2099 = vmatprep.subr.bf16.mxu0 0
        %2100 = vmatpush1.bf16.msra.mxu0 %v2084
        %2101 = vmatprep.subr.bf16.mxu0 0
        %2102 = vmatpush1.bf16.msra.mxu0 %v2083
        %2103 = vmatprep.subr.bf16.mxu0 0
        %2104 = vmatpush1.bf16.msra.mxu0 %v2082
        %2105 = vmatprep.subr.bf16.mxu0 0
        %2106 = vmatpush1.bf16.msra.mxu0 %v2081
        %2107 = vmatprep.subr.bf16.mxu0 0
        %2108 = vmatpush1.bf16.msra.mxu0 %v2080
        %2109 = vmatprep.subr.bf16.mxu0 0
        %2110 = vmatpush1.bf16.msra.mxu0 %v2079
        %2111 = vmatprep.subr.bf16.mxu0 0
        %2112 = vmatpush2.bf16.msra.mxu0 0
        %2113 = vmatprep.subr.bf16.mxu0 0
        %2114 = vmatpush2.bf16.msra.mxu0 0
        %2115 = vmatprep.subr.bf16.mxu0 0
        %2116 = vmatpush2.bf16.msra.mxu0 0
        %2117 = vmatprep.subr.bf16.mxu0 0
        %2118 = vmatpush2.bf16.msra.mxu0 0
        %2119 = vmatprep.subr.bf16.mxu0 0
        %2120 = vmatpush2.bf16.msra.mxu0 0
        %2121 = vmatprep.subr.bf16.mxu0 0
        %2122 = vmatpush2.bf16.msra.mxu0 0
        %2123 = vmatprep.subr.bf16.mxu0 0
        %2124 = vmatpush2.bf16.msra.mxu0 0
        %2125 = vmatprep.subr.bf16.mxu0 0
        %2126 = vmatpush2.bf16.msra.mxu0 0
        %2127 = vmatprep.mubr.bf16.mxu0 0
        %2128 = vmatmul.mubr.bf16.gmra.mxu0 %v1359
        %v2129 = vpop.f32.mrf.mxu0
        %v2130 = vadd.f32 %v2017, %v2129
        %v2131 = vpop.f32.mrf.mxu0
        %v2132 = vpop.f32.mrf.mxu0
        %v2133 = vadd.f32 %v2020, %v2132
        %v2134 = vpop.f32.mrf.mxu0
        %2135 = vmatprep.mubr.bf16.mxu0 0
        %2136 = vmatmul.mubr.bf16.gmra.mxu0 %v1360
        %v2137 = vpop.f32.mrf.mxu0
        %v2138 = vadd.f32 %v2025, %v2137
        %v2139 = vpop.f32.mrf.mxu0
        %v2140 = vpop.f32.mrf.mxu0
        %v2141 = vadd.f32 %v2028, %v2140
        %v2142 = vpop.f32.mrf.mxu0
        %2143 = vmatprep.mubr.bf16.mxu0 0
        %2144 = vmatmul.mubr.bf16.gmra.mxu0 %v1361
        %v2145 = vpop.f32.mrf.mxu0
        %v2146 = vadd.f32 %v2033, %v2145
        %v2147 = vpop.f32.mrf.mxu0
        %v2148 = vpop.f32.mrf.mxu0
        %v2149 = vadd.f32 %v2036, %v2148
        %v2150 = vpop.f32.mrf.mxu0
        %2151 = vmatprep.mubr.bf16.mxu0 0
        %2152 = vmatmul.mubr.bf16.gmra.mxu0 %v1362
        %v2153 = vpop.f32.mrf.mxu0
        %v2154 = vadd.f32 %v2041, %v2153
        %v2155 = vpop.f32.mrf.mxu0
        %v2156 = vpop.f32.mrf.mxu0
        %v2157 = vadd.f32 %v2044, %v2156
        %v2158 = vpop.f32.mrf.mxu0
        %2159 = vdwg.mxu0
        %s2160 = scalar_lea.vmem %s2, 384
        %v2161 = vld [vmem:[%s2160] sm:$0xf]
        %v2162 = vld [vmem:[%s2160 + $0x4] sm:$0xf]
        %v2163 = vld [vmem:[%s2160 + $0x8] sm:$0xf]
        %v2164 = vld [vmem:[%s2160 + $0xc] sm:$0xf]
        %v2165 = vld [vmem:[%s2160 + $0x10] sm:$0xf]
        %v2166 = vld [vmem:[%s2160 + $0x14] sm:$0xf]
        %v2167 = vld [vmem:[%s2160 + $0x18] sm:$0xf]
        %v2168 = vld [vmem:[%s2160 + $0x1c] sm:$0xf]
        %v2169 = vld [vmem:[%s2160 + $0x20] sm:$0xf]
        %v2170 = vld [vmem:[%s2160 + $0x24] sm:$0xf]
        %v2171 = vld [vmem:[%s2160 + $0x28] sm:$0xf]
        %v2172 = vld [vmem:[%s2160 + $0x2c] sm:$0xf]
        %v2173 = vld [vmem:[%s2160 + $0x30] sm:$0xf]
        %v2174 = vld [vmem:[%s2160 + $0x34] sm:$0xf]
        %v2175 = vld [vmem:[%s2160 + $0x38] sm:$0xf]
        %v2176 = vld [vmem:[%s2160 + $0x3c] sm:$0xf]
        %v2193 = vunpack.c.l.b16 %v2161
        %v2194 = vunpack.c.l.b16 %v2162
        %v2195 = vunpack.c.l.b16 %v2163
        %v2196 = vunpack.c.l.b16 %v2164
        %v2197 = vunpack.c.l.b16 %v2165
        %v2198 = vunpack.c.l.b16 %v2166
        %v2199 = vunpack.c.l.b16 %v2167
        %v2200 = vunpack.c.l.b16 %v2168
        %v2201 = vunpack.c.l.b16 %v2169
        %v2202 = vunpack.c.l.b16 %v2170
        %v2203 = vunpack.c.l.b16 %v2171
        %v2204 = vunpack.c.l.b16 %v2172
        %v2205 = vunpack.c.l.b16 %v2173
        %v2206 = vunpack.c.l.b16 %v2174
        %v2207 = vunpack.c.l.b16 %v2175
        %v2208 = vunpack.c.l.b16 %v2176
        %v2209 = vpack.c.b16 %v2194, %v2193
        %v2210 = vpack.c.b16 %v2196, %v2195
        %v2211 = vpack.c.b16 %v2198, %v2197
        %v2212 = vpack.c.b16 %v2200, %v2199
        %v2213 = vpack.c.b16 %v2202, %v2201
        %v2214 = vpack.c.b16 %v2204, %v2203
        %v2215 = vpack.c.b16 %v2206, %v2205
        %v2216 = vpack.c.b16 %v2208, %v2207
        %2225 = vmatprep.subr.bf16.mxu0 0
        %2226 = vmatpush1.bf16.msra.mxu0 %v2216
        %2227 = vmatprep.subr.bf16.mxu0 0
        %2228 = vmatpush1.bf16.msra.mxu0 %v2215
        %2229 = vmatprep.subr.bf16.mxu0 0
        %2230 = vmatpush1.bf16.msra.mxu0 %v2214
        %2231 = vmatprep.subr.bf16.mxu0 0
        %2232 = vmatpush1.bf16.msra.mxu0 %v2213
        %2233 = vmatprep.subr.bf16.mxu0 0
        %2234 = vmatpush1.bf16.msra.mxu0 %v2212
        %2235 = vmatprep.subr.bf16.mxu0 0
        %2236 = vmatpush1.bf16.msra.mxu0 %v2211
        %2237 = vmatprep.subr.bf16.mxu0 0
        %2238 = vmatpush1.bf16.msra.mxu0 %v2210
        %2239 = vmatprep.subr.bf16.mxu0 0
        %2240 = vmatpush1.bf16.msra.mxu0 %v2209
        %2241 = vmatprep.subr.bf16.mxu0 0
        %2242 = vmatpush2.bf16.msra.mxu0 0
        %2243 = vmatprep.subr.bf16.mxu0 0
        %2244 = vmatpush2.bf16.msra.mxu0 0
        %2245 = vmatprep.subr.bf16.mxu0 0
        %2246 = vmatpush2.bf16.msra.mxu0 0
        %2247 = vmatprep.subr.bf16.mxu0 0
        %2248 = vmatpush2.bf16.msra.mxu0 0
        %2249 = vmatprep.subr.bf16.mxu0 0
        %2250 = vmatpush2.bf16.msra.mxu0 0
        %2251 = vmatprep.subr.bf16.mxu0 0
        %2252 = vmatpush2.bf16.msra.mxu0 0
        %2253 = vmatprep.subr.bf16.mxu0 0
        %2254 = vmatpush2.bf16.msra.mxu0 0
        %2255 = vmatprep.subr.bf16.mxu0 0
        %2256 = vmatpush2.bf16.msra.mxu0 0
        %2257 = vmatprep.mubr.bf16.mxu0 0
        %2258 = vmatmul.mubr.bf16.gmra.mxu0 %v1512
        %v2259 = vpop.f32.mrf.mxu0
        %v2260 = vadd.f32 0.0, %v2259
        %v2261 = vpop.f32.mrf.mxu0
        %v2262 = vpop.f32.mrf.mxu0
        %v2263 = vadd.f32 0.0, %v2262
        %v2264 = vpop.f32.mrf.mxu0
        %2265 = vmatprep.mubr.bf16.mxu0 0
        %2266 = vmatmul.mubr.bf16.gmra.mxu0 %v1513
        %v2267 = vpop.f32.mrf.mxu0
        %v2268 = vadd.f32 0.0, %v2267
        %v2269 = vpop.f32.mrf.mxu0
        %v2270 = vpop.f32.mrf.mxu0
        %v2271 = vadd.f32 0.0, %v2270
        %v2272 = vpop.f32.mrf.mxu0
        %2273 = vmatprep.mubr.bf16.mxu0 0
        %2274 = vmatmul.mubr.bf16.gmra.mxu0 %v1514
        %v2275 = vpop.f32.mrf.mxu0
        %v2276 = vadd.f32 0.0, %v2275
        %v2277 = vpop.f32.mrf.mxu0
        %v2278 = vpop.f32.mrf.mxu0
        %v2279 = vadd.f32 0.0, %v2278
        %v2280 = vpop.f32.mrf.mxu0
        %2281 = vmatprep.mubr.bf16.mxu0 0
        %2282 = vmatmul.mubr.bf16.gmra.mxu0 %v1515
        %v2283 = vpop.f32.mrf.mxu0
        %v2284 = vadd.f32 0.0, %v2283
        %v2285 = vpop.f32.mrf.mxu0
        %v2286 = vpop.f32.mrf.mxu0
        %v2287 = vadd.f32 0.0, %v2286
        %v2288 = vpop.f32.mrf.mxu0
        %2289 = vdwg.mxu0
        %v2290 = vadd.f32 %v2130, %v2260
        %v2291 = vadd.f32 %v2133, %v2263
        %v2292 = vadd.f32 %v2138, %v2268
        %v2293 = vadd.f32 %v2141, %v2271
        %v2294 = vadd.f32 %v2146, %v2276
        %v2295 = vadd.f32 %v2149, %v2279
        %v2296 = vadd.f32 %v2154, %v2284
        %v2297 = vadd.f32 %v2157, %v2287
        %v2299 = vrot.slane %v1049, 5
        %v2300 = vrot.slane %v2299, 4
        %v2301 = vrot.slane %v1050, 5
        %v2302 = vsel %vm1868, %v2300, %v2301
        %s2303 = scalar_lea.vmem %s2, 448
        %v2304 = vld [vmem:[%s2303] sm:$0xf]
        %v2305 = vld [vmem:[%s2303 + $0x4] sm:$0xf]
        %v2306 = vld [vmem:[%s2303 + $0x8] sm:$0xf]
        %v2307 = vld [vmem:[%s2303 + $0xc] sm:$0xf]
        %v2308 = vld [vmem:[%s2303 + $0x10] sm:$0xf]
        %v2309 = vld [vmem:[%s2303 + $0x14] sm:$0xf]
        %v2310 = vld [vmem:[%s2303 + $0x18] sm:$0xf]
        %v2311 = vld [vmem:[%s2303 + $0x1c] sm:$0xf]
        %v2312 = vld [vmem:[%s2303 + $0x20] sm:$0xf]
        %v2313 = vld [vmem:[%s2303 + $0x24] sm:$0xf]
        %v2314 = vld [vmem:[%s2303 + $0x28] sm:$0xf]
        %v2315 = vld [vmem:[%s2303 + $0x2c] sm:$0xf]
        %v2316 = vld [vmem:[%s2303 + $0x30] sm:$0xf]
        %v2317 = vld [vmem:[%s2303 + $0x34] sm:$0xf]
        %v2318 = vld [vmem:[%s2303 + $0x38] sm:$0xf]
        %v2319 = vld [vmem:[%s2303 + $0x3c] sm:$0xf]
        %v2320 = vunpack.c.l.b16 %v2302
        %v2321 = vpack.c.b16 %v1918, %v2320
        %v2322 = vpack.c.b16 %v1920, %v1919
        %v2323 = vpack.c.b16 %v1922, %v1921
        %v2324 = vpack.c.b16 %v1924, %v1923
        %v2345 = vunpack.c.l.b16 %v2304
        %v2346 = vunpack.c.l.b16 %v2305
        %v2347 = vunpack.c.l.b16 %v2306
        %v2348 = vunpack.c.l.b16 %v2307
        %v2349 = vunpack.c.l.b16 %v2308
        %v2350 = vunpack.c.l.b16 %v2309
        %v2351 = vunpack.c.l.b16 %v2310
        %v2352 = vunpack.c.l.b16 %v2311
        %v2353 = vunpack.c.l.b16 %v2312
        %v2354 = vunpack.c.l.b16 %v2313
        %v2355 = vunpack.c.l.b16 %v2314
        %v2356 = vunpack.c.l.b16 %v2315
        %v2357 = vunpack.c.l.b16 %v2316
        %v2358 = vunpack.c.l.b16 %v2317
        %v2359 = vunpack.c.l.b16 %v2318
        %v2360 = vunpack.c.l.b16 %v2319
        %v2361 = vpack.c.b16 %v2346, %v2345
        %v2362 = vpack.c.b16 %v2348, %v2347
        %v2363 = vpack.c.b16 %v2350, %v2349
        %v2364 = vpack.c.b16 %v2352, %v2351
        %v2365 = vpack.c.b16 %v2354, %v2353
        %v2366 = vpack.c.b16 %v2356, %v2355
        %v2367 = vpack.c.b16 %v2358, %v2357
        %v2368 = vpack.c.b16 %v2360, %v2359
        %2377 = vmatprep.subr.bf16.mxu0 0
        %2378 = vmatpush1.bf16.msra.mxu0 %v2368
        %2379 = vmatprep.subr.bf16.mxu0 0
        %2380 = vmatpush1.bf16.msra.mxu0 %v2367
        %2381 = vmatprep.subr.bf16.mxu0 0
        %2382 = vmatpush1.bf16.msra.mxu0 %v2366
        %2383 = vmatprep.subr.bf16.mxu0 0
        %2384 = vmatpush1.bf16.msra.mxu0 %v2365
        %2385 = vmatprep.subr.bf16.mxu0 0
        %2386 = vmatpush1.bf16.msra.mxu0 %v2364
        %2387 = vmatprep.subr.bf16.mxu0 0
        %2388 = vmatpush1.bf16.msra.mxu0 %v2363
        %2389 = vmatprep.subr.bf16.mxu0 0
        %2390 = vmatpush1.bf16.msra.mxu0 %v2362
        %2391 = vmatprep.subr.bf16.mxu0 0
        %2392 = vmatpush1.bf16.msra.mxu0 %v2361
        %2393 = vmatprep.subr.bf16.mxu0 0
        %2394 = vmatpush2.bf16.msra.mxu0 0
        %2395 = vmatprep.subr.bf16.mxu0 0
        %2396 = vmatpush2.bf16.msra.mxu0 0
        %2397 = vmatprep.subr.bf16.mxu0 0
        %2398 = vmatpush2.bf16.msra.mxu0 0
        %2399 = vmatprep.subr.bf16.mxu0 0
        %2400 = vmatpush2.bf16.msra.mxu0 0
        %2401 = vmatprep.subr.bf16.mxu0 0
        %2402 = vmatpush2.bf16.msra.mxu0 0
        %2403 = vmatprep.subr.bf16.mxu0 0
        %2404 = vmatpush2.bf16.msra.mxu0 0
        %2405 = vmatprep.subr.bf16.mxu0 0
        %2406 = vmatpush2.bf16.msra.mxu0 0
        %2407 = vmatprep.subr.bf16.mxu0 0
        %2408 = vmatpush2.bf16.msra.mxu0 0
        %2409 = vmatprep.mubr.bf16.mxu0 0
        %2410 = vmatmul.mubr.bf16.gmra.mxu0 %v2321
        %v2411 = vpop.f32.mrf.mxu0
        %v2412 = vadd.f32 0.0, %v2411
        %v2413 = vpop.f32.mrf.mxu0
        %v2414 = vpop.f32.mrf.mxu0
        %v2415 = vadd.f32 0.0, %v2414
        %v2416 = vpop.f32.mrf.mxu0
        %2417 = vmatprep.mubr.bf16.mxu0 0
        %2418 = vmatmul.mubr.bf16.gmra.mxu0 %v2322
        %v2419 = vpop.f32.mrf.mxu0
        %v2420 = vadd.f32 0.0, %v2419
        %v2421 = vpop.f32.mrf.mxu0
        %v2422 = vpop.f32.mrf.mxu0
        %v2423 = vadd.f32 0.0, %v2422
        %v2424 = vpop.f32.mrf.mxu0
        %2425 = vmatprep.mubr.bf16.mxu0 0
        %2426 = vmatmul.mubr.bf16.gmra.mxu0 %v2323
        %v2427 = vpop.f32.mrf.mxu0
        %v2428 = vadd.f32 0.0, %v2427
        %v2429 = vpop.f32.mrf.mxu0
        %v2430 = vpop.f32.mrf.mxu0
        %v2431 = vadd.f32 0.0, %v2430
        %v2432 = vpop.f32.mrf.mxu0
        %2433 = vmatprep.mubr.bf16.mxu0 0
        %2434 = vmatmul.mubr.bf16.gmra.mxu0 %v2324
        %v2435 = vpop.f32.mrf.mxu0
        %v2436 = vadd.f32 0.0, %v2435
        %v2437 = vpop.f32.mrf.mxu0
        %v2438 = vpop.f32.mrf.mxu0
        %v2439 = vadd.f32 0.0, %v2438
        %v2440 = vpop.f32.mrf.mxu0
        %2441 = vdwg.mxu0
        %v2442 = vadd.f32 %v2290, %v2412
        %v2443 = vadd.f32 %v2291, %v2415
        %v2444 = vadd.f32 %v2292, %v2420
        %v2445 = vadd.f32 %v2293, %v2423
        %v2446 = vadd.f32 %v2294, %v2428
        %v2447 = vadd.f32 %v2295, %v2431
        %v2448 = vadd.f32 %v2296, %v2436
        %v2449 = vadd.f32 %v2297, %v2439
        %v2450 = vadd.f32 %v2442, %v2443
        %v2451 = vadd.f32 %v2450, %v2444
        %v2452 = vadd.f32 %v2451, %v2445
        %v2453 = vadd.f32 %v2452, %v2446
        %v2454 = vadd.f32 %v2453, %v2447
        %v2455 = vadd.f32 %v2454, %v2448
        %v2456 = vadd.f32 %v2455, %v2449
        %v2457 = vrot.slane %v2456, 4
        %v2458 = vadd.f32 %v2456, %v2457
        %v2459 = vrot.slane %v2458, 2
        %v2460 = vadd.f32 %v2458, %v2459
        %v2461 = vrot.slane %v2460, 1
        %v2462 = vadd.f32 %v2460, %v2461
        %v2463 = vadd.f32 %v1802, %v2462
        %v2464 = vmul.f32 %v2442, %v2442
        %v2465 = vmul.f32 %v2443, %v2443
        %v2466 = vmul.f32 %v2444, %v2444
        %v2467 = vmul.f32 %v2445, %v2445
        %v2468 = vmul.f32 %v2446, %v2446
        %v2469 = vmul.f32 %v2447, %v2447
        %v2470 = vmul.f32 %v2448, %v2448
        %v2471 = vmul.f32 %v2449, %v2449
        %v2472 = vadd.f32 %v2464, %v2465
        %v2473 = vadd.f32 %v2472, %v2466
        %v2474 = vadd.f32 %v2473, %v2467
        %v2475 = vadd.f32 %v2474, %v2468
        %v2476 = vadd.f32 %v2475, %v2469
        %v2477 = vadd.f32 %v2476, %v2470
        %v2478 = vadd.f32 %v2477, %v2471
        %v2479 = vrot.slane %v2478, 4
        %v2480 = vadd.f32 %v2478, %v2479
        %v2481 = vrot.slane %v2480, 2
        %v2482 = vadd.f32 %v2480, %v2481
        %v2483 = vrot.slane %v2482, 1
        %v2484 = vadd.f32 %v2482, %v2483
        %v2485 = vadd.f32 %v1824, %v2484
        %v2486 = vpack.c.bf16 %v2442, %v2442
        %v2487 = vpack.c.bf16 %v2443, %v2443
        %v2488 = vpack.c.bf16 %v2444, %v2444
        %v2489 = vpack.c.bf16 %v2445, %v2445
        %v2490 = vpack.c.bf16 %v2446, %v2446
        %v2491 = vpack.c.bf16 %v2447, %v2447
        %v2492 = vpack.c.bf16 %v2448, %v2448
        %v2493 = vpack.c.bf16 %v2449, %v2449
        %s2494 = scalar_lea.vmem %s187, 32 [#allocation3]
        %2495 = vst [vmem:[%s2494] sm:$0xf] %v2486
        %2496 = vst [vmem:[%s2494 + $0x4] sm:$0xf] %v2487
        %2497 = vst [vmem:[%s2494 + $0x8] sm:$0xf] %v2488
        %2498 = vst [vmem:[%s2494 + $0xc] sm:$0xf] %v2489
        %2499 = vst [vmem:[%s2494 + $0x10] sm:$0xf] %v2490
        %2500 = vst [vmem:[%s2494 + $0x14] sm:$0xf] %v2491
        %2501 = vst [vmem:[%s2494 + $0x18] sm:$0xf] %v2492
        %2502 = vst [vmem:[%s2494 + $0x1c] sm:$0xf] %v2493
        %s2503 = scalar_lea.vmem %s2, 512
        %v2504 = vld [vmem:[%s2503] sm:$0xf]
        %v2505 = vld [vmem:[%s2503 + $0x4] sm:$0xf]
        %v2506 = vld [vmem:[%s2503 + $0x8] sm:$0xf]
        %v2507 = vld [vmem:[%s2503 + $0xc] sm:$0xf]
        %v2508 = vld [vmem:[%s2503 + $0x10] sm:$0xf]
        %v2509 = vld [vmem:[%s2503 + $0x14] sm:$0xf]
        %v2510 = vld [vmem:[%s2503 + $0x18] sm:$0xf]
        %v2511 = vld [vmem:[%s2503 + $0x1c] sm:$0xf]
        %v2512 = vld [vmem:[%s2503 + $0x20] sm:$0xf]
        %v2513 = vld [vmem:[%s2503 + $0x24] sm:$0xf]
        %v2514 = vld [vmem:[%s2503 + $0x28] sm:$0xf]
        %v2515 = vld [vmem:[%s2503 + $0x2c] sm:$0xf]
        %v2516 = vld [vmem:[%s2503 + $0x30] sm:$0xf]
        %v2517 = vld [vmem:[%s2503 + $0x34] sm:$0xf]
        %v2518 = vld [vmem:[%s2503 + $0x38] sm:$0xf]
        %v2519 = vld [vmem:[%s2503 + $0x3c] sm:$0xf]
        %s2520 = scalar_lea.vmem %s2, 576
        %v2521 = vld [vmem:[%s2520] sm:$0xf]
        %v2522 = vld [vmem:[%s2520 + $0x4] sm:$0xf]
        %v2523 = vld [vmem:[%s2520 + $0x8] sm:$0xf]
        %v2524 = vld [vmem:[%s2520 + $0xc] sm:$0xf]
        %v2525 = vld [vmem:[%s2520 + $0x10] sm:$0xf]
        %v2526 = vld [vmem:[%s2520 + $0x14] sm:$0xf]
        %v2527 = vld [vmem:[%s2520 + $0x18] sm:$0xf]
        %v2528 = vld [vmem:[%s2520 + $0x1c] sm:$0xf]
        %v2529 = vld [vmem:[%s2520 + $0x20] sm:$0xf]
        %v2530 = vld [vmem:[%s2520 + $0x24] sm:$0xf]
        %v2531 = vld [vmem:[%s2520 + $0x28] sm:$0xf]
        %v2532 = vld [vmem:[%s2520 + $0x2c] sm:$0xf]
        %v2533 = vld [vmem:[%s2520 + $0x30] sm:$0xf]
        %v2534 = vld [vmem:[%s2520 + $0x34] sm:$0xf]
        %v2535 = vld [vmem:[%s2520 + $0x38] sm:$0xf]
        %v2536 = vld [vmem:[%s2520 + $0x3c] sm:$0xf]
        %v2553 = vunpack.c.l.b16 %v2521
        %v2554 = vunpack.c.l.b16 %v2522
        %v2555 = vunpack.c.l.b16 %v2523
        %v2556 = vunpack.c.l.b16 %v2524
        %v2557 = vunpack.c.l.b16 %v2525
        %v2558 = vunpack.c.l.b16 %v2526
        %v2559 = vunpack.c.l.b16 %v2527
        %v2560 = vunpack.c.l.b16 %v2528
        %v2561 = vunpack.c.l.b16 %v2529
        %v2562 = vunpack.c.l.b16 %v2530
        %v2563 = vunpack.c.l.b16 %v2531
        %v2564 = vunpack.c.l.b16 %v2532
        %v2565 = vunpack.c.l.b16 %v2533
        %v2566 = vunpack.c.l.b16 %v2534
        %v2567 = vunpack.c.l.b16 %v2535
        %v2568 = vunpack.c.l.b16 %v2536
        %v2569 = vpack.c.b16 %v2554, %v2553
        %v2570 = vpack.c.b16 %v2556, %v2555
        %v2571 = vpack.c.b16 %v2558, %v2557
        %v2572 = vpack.c.b16 %v2560, %v2559
        %v2573 = vpack.c.b16 %v2562, %v2561
        %v2574 = vpack.c.b16 %v2564, %v2563
        %v2575 = vpack.c.b16 %v2566, %v2565
        %v2576 = vpack.c.b16 %v2568, %v2567
        %2585 = vmatprep.subr.bf16.mxu0 0
        %2586 = vmatpush1.bf16.msra.mxu0 %v2576
        %2587 = vmatprep.subr.bf16.mxu0 0
        %2588 = vmatpush1.bf16.msra.mxu0 %v2575
        %2589 = vmatprep.subr.bf16.mxu0 0
        %2590 = vmatpush1.bf16.msra.mxu0 %v2574
        %2591 = vmatprep.subr.bf16.mxu0 0
        %2592 = vmatpush1.bf16.msra.mxu0 %v2573
        %2593 = vmatprep.subr.bf16.mxu0 0
        %2594 = vmatpush1.bf16.msra.mxu0 %v2572
        %2595 = vmatprep.subr.bf16.mxu0 0
        %2596 = vmatpush1.bf16.msra.mxu0 %v2571
        %2597 = vmatprep.subr.bf16.mxu0 0
        %2598 = vmatpush1.bf16.msra.mxu0 %v2570
        %2599 = vmatprep.subr.bf16.mxu0 0
        %2600 = vmatpush1.bf16.msra.mxu0 %v2569
        %2601 = vmatprep.subr.bf16.mxu0 0
        %2602 = vmatpush2.bf16.msra.mxu0 0
        %2603 = vmatprep.subr.bf16.mxu0 0
        %2604 = vmatpush2.bf16.msra.mxu0 0
        %2605 = vmatprep.subr.bf16.mxu0 0
        %2606 = vmatpush2.bf16.msra.mxu0 0
        %2607 = vmatprep.subr.bf16.mxu0 0
        %2608 = vmatpush2.bf16.msra.mxu0 0
        %2609 = vmatprep.subr.bf16.mxu0 0
        %2610 = vmatpush2.bf16.msra.mxu0 0
        %2611 = vmatprep.subr.bf16.mxu0 0
        %2612 = vmatpush2.bf16.msra.mxu0 0
        %2613 = vmatprep.subr.bf16.mxu0 0
        %2614 = vmatpush2.bf16.msra.mxu0 0
        %2615 = vmatprep.subr.bf16.mxu0 0
        %2616 = vmatpush2.bf16.msra.mxu0 0
        %2617 = vmatprep.mubr.bf16.mxu0 0
        %2618 = vmatmul.mubr.bf16.gmra.mxu0 %v1230
        %v2619 = vpop.f32.mrf.mxu0
        %v2620 = vadd.f32 0.0, %v2619
        %v2621 = vpop.f32.mrf.mxu0
        %v2622 = vpop.f32.mrf.mxu0
        %v2623 = vadd.f32 0.0, %v2622
        %v2624 = vpop.f32.mrf.mxu0
        %2625 = vmatprep.mubr.bf16.mxu0 0
        %2626 = vmatmul.mubr.bf16.gmra.mxu0 %v1231
        %v2627 = vpop.f32.mrf.mxu0
        %v2628 = vadd.f32 0.0, %v2627
        %v2629 = vpop.f32.mrf.mxu0
        %v2630 = vpop.f32.mrf.mxu0
        %v2631 = vadd.f32 0.0, %v2630
        %v2632 = vpop.f32.mrf.mxu0
        %2633 = vmatprep.mubr.bf16.mxu0 0
        %2634 = vmatmul.mubr.bf16.gmra.mxu0 %v1232
        %v2635 = vpop.f32.mrf.mxu0
        %v2636 = vadd.f32 0.0, %v2635
        %v2637 = vpop.f32.mrf.mxu0
        %v2638 = vpop.f32.mrf.mxu0
        %v2639 = vadd.f32 0.0, %v2638
        %v2640 = vpop.f32.mrf.mxu0
        %2641 = vmatprep.mubr.bf16.mxu0 0
        %2642 = vmatmul.mubr.bf16.gmra.mxu0 %v1233
        %v2643 = vpop.f32.mrf.mxu0
        %v2644 = vadd.f32 0.0, %v2643
        %v2645 = vpop.f32.mrf.mxu0
        %v2646 = vpop.f32.mrf.mxu0
        %v2647 = vadd.f32 0.0, %v2646
        %v2648 = vpop.f32.mrf.mxu0
        %2649 = vdwg.mxu0
        %v2666 = vunpack.c.l.b16 %v2504
        %v2667 = vunpack.c.l.b16 %v2505
        %v2668 = vunpack.c.l.b16 %v2506
        %v2669 = vunpack.c.l.b16 %v2507
        %v2670 = vunpack.c.l.b16 %v2508
        %v2671 = vunpack.c.l.b16 %v2509
        %v2672 = vunpack.c.l.b16 %v2510
        %v2673 = vunpack.c.l.b16 %v2511
        %v2674 = vunpack.c.l.b16 %v2512
        %v2675 = vunpack.c.l.b16 %v2513
        %v2676 = vunpack.c.l.b16 %v2514
        %v2677 = vunpack.c.l.b16 %v2515
        %v2678 = vunpack.c.l.b16 %v2516
        %v2679 = vunpack.c.l.b16 %v2517
        %v2680 = vunpack.c.l.b16 %v2518
        %v2681 = vunpack.c.l.b16 %v2519
        %v2682 = vpack.c.b16 %v2667, %v2666
        %v2683 = vpack.c.b16 %v2669, %v2668
        %v2684 = vpack.c.b16 %v2671, %v2670
        %v2685 = vpack.c.b16 %v2673, %v2672
        %v2686 = vpack.c.b16 %v2675, %v2674
        %v2687 = vpack.c.b16 %v2677, %v2676
        %v2688 = vpack.c.b16 %v2679, %v2678
        %v2689 = vpack.c.b16 %v2681, %v2680
        %2698 = vmatprep.subr.bf16.mxu0 0
        %2699 = vmatpush1.bf16.msra.mxu0 %v2689
        %2700 = vmatprep.subr.bf16.mxu0 0
        %2701 = vmatpush1.bf16.msra.mxu0 %v2688
        %2702 = vmatprep.subr.bf16.mxu0 0
        %2703 = vmatpush1.bf16.msra.mxu0 %v2687
        %2704 = vmatprep.subr.bf16.mxu0 0
        %2705 = vmatpush1.bf16.msra.mxu0 %v2686
        %2706 = vmatprep.subr.bf16.mxu0 0
        %2707 = vmatpush1.bf16.msra.mxu0 %v2685
        %2708 = vmatprep.subr.bf16.mxu0 0
        %2709 = vmatpush1.bf16.msra.mxu0 %v2684
        %2710 = vmatprep.subr.bf16.mxu0 0
        %2711 = vmatpush1.bf16.msra.mxu0 %v2683
        %2712 = vmatprep.subr.bf16.mxu0 0
        %2713 = vmatpush1.bf16.msra.mxu0 %v2682
        %2714 = vmatprep.subr.bf16.mxu0 0
        %2715 = vmatpush2.bf16.msra.mxu0 0
        %2716 = vmatprep.subr.bf16.mxu0 0
        %2717 = vmatpush2.bf16.msra.mxu0 0
        %2718 = vmatprep.subr.bf16.mxu0 0
        %2719 = vmatpush2.bf16.msra.mxu0 0
        %2720 = vmatprep.subr.bf16.mxu0 0
        %2721 = vmatpush2.bf16.msra.mxu0 0
        %2722 = vmatprep.subr.bf16.mxu0 0
        %2723 = vmatpush2.bf16.msra.mxu0 0
        %2724 = vmatprep.subr.bf16.mxu0 0
        %2725 = vmatpush2.bf16.msra.mxu0 0
        %2726 = vmatprep.subr.bf16.mxu0 0
        %2727 = vmatpush2.bf16.msra.mxu0 0
        %2728 = vmatprep.subr.bf16.mxu0 0
        %2729 = vmatpush2.bf16.msra.mxu0 0
        %2730 = vmatprep.mubr.bf16.mxu0 0
        %2731 = vmatmul.mubr.bf16.gmra.mxu0 %v1359
        %v2732 = vpop.f32.mrf.mxu0
        %v2733 = vadd.f32 %v2620, %v2732
        %v2734 = vpop.f32.mrf.mxu0
        %v2735 = vpop.f32.mrf.mxu0
        %v2736 = vadd.f32 %v2623, %v2735
        %v2737 = vpop.f32.mrf.mxu0
        %2738 = vmatprep.mubr.bf16.mxu0 0
        %2739 = vmatmul.mubr.bf16.gmra.mxu0 %v1360
        %v2740 = vpop.f32.mrf.mxu0
        %v2741 = vadd.f32 %v2628, %v2740
        %v2742 = vpop.f32.mrf.mxu0
        %v2743 = vpop.f32.mrf.mxu0
        %v2744 = vadd.f32 %v2631, %v2743
        %v2745 = vpop.f32.mrf.mxu0
        %2746 = vmatprep.mubr.bf16.mxu0 0
        %2747 = vmatmul.mubr.bf16.gmra.mxu0 %v1361
        %v2748 = vpop.f32.mrf.mxu0
        %v2749 = vadd.f32 %v2636, %v2748
        %v2750 = vpop.f32.mrf.mxu0
        %v2751 = vpop.f32.mrf.mxu0
        %v2752 = vadd.f32 %v2639, %v2751
        %v2753 = vpop.f32.mrf.mxu0
        %2754 = vmatprep.mubr.bf16.mxu0 0
        %2755 = vmatmul.mubr.bf16.gmra.mxu0 %v1362
        %v2756 = vpop.f32.mrf.mxu0
        %v2757 = vadd.f32 %v2644, %v2756
        %v2758 = vpop.f32.mrf.mxu0
        %v2759 = vpop.f32.mrf.mxu0
        %v2760 = vadd.f32 %v2647, %v2759
        %v2761 = vpop.f32.mrf.mxu0
        %2762 = vdwg.mxu0
        %v2764 = vshrl.u32 %v1067, 16
        %v2766 = vrot.slane %v2764, 4
        %v2767 = vshll.u32 %v1067, 16
        %v2769 = vrot.slane %v2767, 5
        %v2770 = vor.u32 %v2766, %v2769
        %v2771 = vrot.slane %v2770, 4
        %v2773 = vshll.u32 %v1068, 16
        %v2775 = vrot.slane %v2773, 5
        %v2776 = vsel %vm347, %v2771, %v2775
        %s2777 = scalar_lea.vmem %s2, 640
        %v2778 = vld [vmem:[%s2777] sm:$0xf]
        %v2779 = vld [vmem:[%s2777 + $0x4] sm:$0xf]
        %v2780 = vld [vmem:[%s2777 + $0x8] sm:$0xf]
        %v2781 = vld [vmem:[%s2777 + $0xc] sm:$0xf]
        %v2782 = vld [vmem:[%s2777 + $0x10] sm:$0xf]
        %v2783 = vld [vmem:[%s2777 + $0x14] sm:$0xf]
        %v2784 = vld [vmem:[%s2777 + $0x18] sm:$0xf]
        %v2785 = vld [vmem:[%s2777 + $0x1c] sm:$0xf]
        %v2786 = vld [vmem:[%s2777 + $0x20] sm:$0xf]
        %v2787 = vld [vmem:[%s2777 + $0x24] sm:$0xf]
        %v2788 = vld [vmem:[%s2777 + $0x28] sm:$0xf]
        %v2789 = vld [vmem:[%s2777 + $0x2c] sm:$0xf]
        %v2790 = vld [vmem:[%s2777 + $0x30] sm:$0xf]
        %v2791 = vld [vmem:[%s2777 + $0x34] sm:$0xf]
        %v2792 = vld [vmem:[%s2777 + $0x38] sm:$0xf]
        %v2793 = vld [vmem:[%s2777 + $0x3c] sm:$0xf]
        %v2794 = vunpack.c.l.b16 %v2776
        %v2795 = vpack.c.b16 %v2794, %v1358
        %v2813 = vunpack.c.l.b16 %v2778
        %v2814 = vunpack.c.l.b16 %v2779
        %v2815 = vunpack.c.l.b16 %v2780
        %v2816 = vunpack.c.l.b16 %v2781
        %v2817 = vunpack.c.l.b16 %v2782
        %v2818 = vunpack.c.l.b16 %v2783
        %v2819 = vunpack.c.l.b16 %v2784
        %v2820 = vunpack.c.l.b16 %v2785
        %v2821 = vunpack.c.l.b16 %v2786
        %v2822 = vunpack.c.l.b16 %v2787
        %v2823 = vunpack.c.l.b16 %v2788
        %v2824 = vunpack.c.l.b16 %v2789
        %v2825 = vunpack.c.l.b16 %v2790
        %v2826 = vunpack.c.l.b16 %v2791
        %v2827 = vunpack.c.l.b16 %v2792
        %v2828 = vunpack.c.l.b16 %v2793
        %v2829 = vpack.c.b16 %v2814, %v2813
        %v2830 = vpack.c.b16 %v2816, %v2815
        %v2831 = vpack.c.b16 %v2818, %v2817
        %v2832 = vpack.c.b16 %v2820, %v2819
        %v2833 = vpack.c.b16 %v2822, %v2821
        %v2834 = vpack.c.b16 %v2824, %v2823
        %v2835 = vpack.c.b16 %v2826, %v2825
        %v2836 = vpack.c.b16 %v2828, %v2827
        %2845 = vmatprep.subr.bf16.mxu0 0
        %2846 = vmatpush1.bf16.msra.mxu0 %v2836
        %2847 = vmatprep.subr.bf16.mxu0 0
        %2848 = vmatpush1.bf16.msra.mxu0 %v2835
        %2849 = vmatprep.subr.bf16.mxu0 0
        %2850 = vmatpush1.bf16.msra.mxu0 %v2834
        %2851 = vmatprep.subr.bf16.mxu0 0
        %2852 = vmatpush1.bf16.msra.mxu0 %v2833
        %2853 = vmatprep.subr.bf16.mxu0 0
        %2854 = vmatpush1.bf16.msra.mxu0 %v2832
        %2855 = vmatprep.subr.bf16.mxu0 0
        %2856 = vmatpush1.bf16.msra.mxu0 %v2831
        %2857 = vmatprep.subr.bf16.mxu0 0
        %2858 = vmatpush1.bf16.msra.mxu0 %v2830
        %2859 = vmatprep.subr.bf16.mxu0 0
        %2860 = vmatpush1.bf16.msra.mxu0 %v2829
        %2861 = vmatprep.subr.bf16.mxu0 0
        %2862 = vmatpush2.bf16.msra.mxu0 0
        %2863 = vmatprep.subr.bf16.mxu0 0
        %2864 = vmatpush2.bf16.msra.mxu0 0
        %2865 = vmatprep.subr.bf16.mxu0 0
        %2866 = vmatpush2.bf16.msra.mxu0 0
        %2867 = vmatprep.subr.bf16.mxu0 0
        %2868 = vmatpush2.bf16.msra.mxu0 0
        %2869 = vmatprep.subr.bf16.mxu0 0
        %2870 = vmatpush2.bf16.msra.mxu0 0
        %2871 = vmatprep.subr.bf16.mxu0 0
        %2872 = vmatpush2.bf16.msra.mxu0 0
        %2873 = vmatprep.subr.bf16.mxu0 0
        %2874 = vmatpush2.bf16.msra.mxu0 0
        %2875 = vmatprep.subr.bf16.mxu0 0
        %2876 = vmatpush2.bf16.msra.mxu0 0
        %2877 = vmatprep.mubr.bf16.mxu0 0
        %2878 = vmatmul.mubr.bf16.gmra.mxu0 %v1513
        %v2879 = vpop.f32.mrf.mxu0
        %v2880 = vadd.f32 0.0, %v2879
        %v2881 = vpop.f32.mrf.mxu0
        %v2882 = vpop.f32.mrf.mxu0
        %v2883 = vadd.f32 0.0, %v2882
        %v2884 = vpop.f32.mrf.mxu0
        %2885 = vmatprep.mubr.bf16.mxu0 0
        %2886 = vmatmul.mubr.bf16.gmra.mxu0 %v1514
        %v2887 = vpop.f32.mrf.mxu0
        %v2888 = vadd.f32 0.0, %v2887
        %v2889 = vpop.f32.mrf.mxu0
        %v2890 = vpop.f32.mrf.mxu0
        %v2891 = vadd.f32 0.0, %v2890
        %v2892 = vpop.f32.mrf.mxu0
        %2893 = vmatprep.mubr.bf16.mxu0 0
        %2894 = vmatmul.mubr.bf16.gmra.mxu0 %v1515
        %v2895 = vpop.f32.mrf.mxu0
        %v2896 = vadd.f32 0.0, %v2895
        %v2897 = vpop.f32.mrf.mxu0
        %v2898 = vpop.f32.mrf.mxu0
        %v2899 = vadd.f32 0.0, %v2898
        %v2900 = vpop.f32.mrf.mxu0
        %2901 = vmatprep.mubr.bf16.mxu0 0
        %2902 = vmatmul.mubr.bf16.gmra.mxu0 %v2795
        %v2903 = vpop.f32.mrf.mxu0
        %v2904 = vadd.f32 0.0, %v2903
        %v2905 = vpop.f32.mrf.mxu0
        %v2906 = vpop.f32.mrf.mxu0
        %v2907 = vadd.f32 0.0, %v2906
        %v2908 = vpop.f32.mrf.mxu0
        %2909 = vdwg.mxu0
        %v2910 = vadd.f32 %v2733, %v2880
        %v2911 = vadd.f32 %v2736, %v2883
        %v2912 = vadd.f32 %v2741, %v2888
        %v2913 = vadd.f32 %v2744, %v2891
        %v2914 = vadd.f32 %v2749, %v2896
        %v2915 = vadd.f32 %v2752, %v2899
        %v2916 = vadd.f32 %v2757, %v2904
        %v2917 = vadd.f32 %v2760, %v2907
        %s2918 = scalar_lea.vmem %s2, 704
        %v2919 = vld [vmem:[%s2918] sm:$0xf]
        %v2920 = vld [vmem:[%s2918 + $0x4] sm:$0xf]
        %v2921 = vld [vmem:[%s2918 + $0x8] sm:$0xf]
        %v2922 = vld [vmem:[%s2918 + $0xc] sm:$0xf]
        %v2923 = vld [vmem:[%s2918 + $0x10] sm:$0xf]
        %v2924 = vld [vmem:[%s2918 + $0x14] sm:$0xf]
        %v2925 = vld [vmem:[%s2918 + $0x18] sm:$0xf]
        %v2926 = vld [vmem:[%s2918 + $0x1c] sm:$0xf]
        %v2927 = vld [vmem:[%s2918 + $0x20] sm:$0xf]
        %v2928 = vld [vmem:[%s2918 + $0x24] sm:$0xf]
        %v2929 = vld [vmem:[%s2918 + $0x28] sm:$0xf]
        %v2930 = vld [vmem:[%s2918 + $0x2c] sm:$0xf]
        %v2931 = vld [vmem:[%s2918 + $0x30] sm:$0xf]
        %v2932 = vld [vmem:[%s2918 + $0x34] sm:$0xf]
        %v2933 = vld [vmem:[%s2918 + $0x38] sm:$0xf]
        %v2934 = vld [vmem:[%s2918 + $0x3c] sm:$0xf]
        %v2936 = vunpack.c.l.b16 %v1067
        %v2937 = vpack.c.b16 %v2936, %v1229
        %v2955 = vunpack.c.l.b16 %v2919
        %v2956 = vunpack.c.l.b16 %v2920
        %v2957 = vunpack.c.l.b16 %v2921
        %v2958 = vunpack.c.l.b16 %v2922
        %v2959 = vunpack.c.l.b16 %v2923
        %v2960 = vunpack.c.l.b16 %v2924
        %v2961 = vunpack.c.l.b16 %v2925
        %v2962 = vunpack.c.l.b16 %v2926
        %v2963 = vunpack.c.l.b16 %v2927
        %v2964 = vunpack.c.l.b16 %v2928
        %v2965 = vunpack.c.l.b16 %v2929
        %v2966 = vunpack.c.l.b16 %v2930
        %v2967 = vunpack.c.l.b16 %v2931
        %v2968 = vunpack.c.l.b16 %v2932
        %v2969 = vunpack.c.l.b16 %v2933
        %v2970 = vunpack.c.l.b16 %v2934
        %v2971 = vpack.c.b16 %v2956, %v2955
        %v2972 = vpack.c.b16 %v2958, %v2957
        %v2973 = vpack.c.b16 %v2960, %v2959
        %v2974 = vpack.c.b16 %v2962, %v2961
        %v2975 = vpack.c.b16 %v2964, %v2963
        %v2976 = vpack.c.b16 %v2966, %v2965
        %v2977 = vpack.c.b16 %v2968, %v2967
        %v2978 = vpack.c.b16 %v2970, %v2969
        %2987 = vmatprep.subr.bf16.mxu0 0
        %2988 = vmatpush1.bf16.msra.mxu0 %v2978
        %2989 = vmatprep.subr.bf16.mxu0 0
        %2990 = vmatpush1.bf16.msra.mxu0 %v2977
        %2991 = vmatprep.subr.bf16.mxu0 0
        %2992 = vmatpush1.bf16.msra.mxu0 %v2976
        %2993 = vmatprep.subr.bf16.mxu0 0
        %2994 = vmatpush1.bf16.msra.mxu0 %v2975
        %2995 = vmatprep.subr.bf16.mxu0 0
        %2996 = vmatpush1.bf16.msra.mxu0 %v2974
        %2997 = vmatprep.subr.bf16.mxu0 0
        %2998 = vmatpush1.bf16.msra.mxu0 %v2973
        %2999 = vmatprep.subr.bf16.mxu0 0
        %3000 = vmatpush1.bf16.msra.mxu0 %v2972
        %3001 = vmatprep.subr.bf16.mxu0 0
        %3002 = vmatpush1.bf16.msra.mxu0 %v2971
        %3003 = vmatprep.subr.bf16.mxu0 0
        %3004 = vmatpush2.bf16.msra.mxu0 0
        %3005 = vmatprep.subr.bf16.mxu0 0
        %3006 = vmatpush2.bf16.msra.mxu0 0
        %3007 = vmatprep.subr.bf16.mxu0 0
        %3008 = vmatpush2.bf16.msra.mxu0 0
        %3009 = vmatprep.subr.bf16.mxu0 0
        %3010 = vmatpush2.bf16.msra.mxu0 0
        %3011 = vmatprep.subr.bf16.mxu0 0
        %3012 = vmatpush2.bf16.msra.mxu0 0
        %3013 = vmatprep.subr.bf16.mxu0 0
        %3014 = vmatpush2.bf16.msra.mxu0 0
        %3015 = vmatprep.subr.bf16.mxu0 0
        %3016 = vmatpush2.bf16.msra.mxu0 0
        %3017 = vmatprep.subr.bf16.mxu0 0
        %3018 = vmatpush2.bf16.msra.mxu0 0
        %3019 = vmatprep.mubr.bf16.mxu0 0
        %3020 = vmatmul.mubr.bf16.gmra.mxu0 %v1661
        %v3021 = vpop.f32.mrf.mxu0
        %v3022 = vadd.f32 0.0, %v3021
        %v3023 = vpop.f32.mrf.mxu0
        %v3024 = vpop.f32.mrf.mxu0
        %v3025 = vadd.f32 0.0, %v3024
        %v3026 = vpop.f32.mrf.mxu0
        %3027 = vmatprep.mubr.bf16.mxu0 0
        %3028 = vmatmul.mubr.bf16.gmra.mxu0 %v1662
        %v3029 = vpop.f32.mrf.mxu0
        %v3030 = vadd.f32 0.0, %v3029
        %v3031 = vpop.f32.mrf.mxu0
        %v3032 = vpop.f32.mrf.mxu0
        %v3033 = vadd.f32 0.0, %v3032
        %v3034 = vpop.f32.mrf.mxu0
        %3035 = vmatprep.mubr.bf16.mxu0 0
        %3036 = vmatmul.mubr.bf16.gmra.mxu0 %v1663
        %v3037 = vpop.f32.mrf.mxu0
        %v3038 = vadd.f32 0.0, %v3037
        %v3039 = vpop.f32.mrf.mxu0
        %v3040 = vpop.f32.mrf.mxu0
        %v3041 = vadd.f32 0.0, %v3040
        %v3042 = vpop.f32.mrf.mxu0
        %3043 = vmatprep.mubr.bf16.mxu0 0
        %3044 = vmatmul.mubr.bf16.gmra.mxu0 %v2937
        %v3045 = vpop.f32.mrf.mxu0
        %v3046 = vadd.f32 0.0, %v3045
        %v3047 = vpop.f32.mrf.mxu0
        %v3048 = vpop.f32.mrf.mxu0
        %v3049 = vadd.f32 0.0, %v3048
        %v3050 = vpop.f32.mrf.mxu0
        %3051 = vdwg.mxu0
        %v3052 = vadd.f32 %v2910, %v3022
        %v3053 = vadd.f32 %v2911, %v3025
        %v3054 = vadd.f32 %v2912, %v3030
        %v3055 = vadd.f32 %v2913, %v3033
        %v3056 = vadd.f32 %v2914, %v3038
        %v3057 = vadd.f32 %v2915, %v3041
        %v3058 = vadd.f32 %v2916, %v3046
        %v3059 = vadd.f32 %v2917, %v3049
        %v3060 = vadd.f32 %v3052, %v3053
        %v3061 = vadd.f32 %v3060, %v3054
        %v3062 = vadd.f32 %v3061, %v3055
        %v3063 = vadd.f32 %v3062, %v3056
        %v3064 = vadd.f32 %v3063, %v3057
        %v3065 = vadd.f32 %v3064, %v3058
        %v3066 = vadd.f32 %v3065, %v3059
        %v3067 = vrot.slane %v3066, 4
        %v3068 = vadd.f32 %v3066, %v3067
        %v3069 = vrot.slane %v3068, 2
        %v3070 = vadd.f32 %v3068, %v3069
        %v3071 = vrot.slane %v3070, 1
        %v3072 = vadd.f32 %v3070, %v3071
        %v3073 = vadd.f32 %v2463, %v3072
        %v3074 = vmul.f32 %v3052, %v3052
        %v3075 = vmul.f32 %v3053, %v3053
        %v3076 = vmul.f32 %v3054, %v3054
        %v3077 = vmul.f32 %v3055, %v3055
        %v3078 = vmul.f32 %v3056, %v3056
        %v3079 = vmul.f32 %v3057, %v3057
        %v3080 = vmul.f32 %v3058, %v3058
        %v3081 = vmul.f32 %v3059, %v3059
        %v3082 = vadd.f32 %v3074, %v3075
        %v3083 = vadd.f32 %v3082, %v3076
        %v3084 = vadd.f32 %v3083, %v3077
        %v3085 = vadd.f32 %v3084, %v3078
        %v3086 = vadd.f32 %v3085, %v3079
        %v3087 = vadd.f32 %v3086, %v3080
        %v3088 = vadd.f32 %v3087, %v3081
        %v3089 = vrot.slane %v3088, 4
        %v3090 = vadd.f32 %v3088, %v3089
        %v3091 = vrot.slane %v3090, 2
        %v3092 = vadd.f32 %v3090, %v3091
        %v3093 = vrot.slane %v3092, 1
        %v3094 = vadd.f32 %v3092, %v3093
        %v3095 = vadd.f32 %v2485, %v3094
        %v3096 = vpack.c.bf16 %v3052, %v3052
        %v3097 = vpack.c.bf16 %v3053, %v3053
        %v3098 = vpack.c.bf16 %v3054, %v3054
        %v3099 = vpack.c.bf16 %v3055, %v3055
        %v3100 = vpack.c.bf16 %v3056, %v3056
        %v3101 = vpack.c.bf16 %v3057, %v3057
        %v3102 = vpack.c.bf16 %v3058, %v3058
        %v3103 = vpack.c.bf16 %v3059, %v3059
        %s3104 = scalar_lea.vmem %s187, 64 [#allocation3]
        %3105 = vst [vmem:[%s3104] sm:$0xf] %v3096
        %3106 = vst [vmem:[%s3104 + $0x4] sm:$0xf] %v3097
        %3107 = vst [vmem:[%s3104 + $0x8] sm:$0xf] %v3098
        %3108 = vst [vmem:[%s3104 + $0xc] sm:$0xf] %v3099
        %3109 = vst [vmem:[%s3104 + $0x10] sm:$0xf] %v3100
        %3110 = vst [vmem:[%s3104 + $0x14] sm:$0xf] %v3101
        %3111 = vst [vmem:[%s3104 + $0x18] sm:$0xf] %v3102
        %3112 = vst [vmem:[%s3104 + $0x1c] sm:$0xf] %v3103
        %s3113 = scalar_lea.vmem %s2, 768
        %v3114 = vld [vmem:[%s3113] sm:$0xf]
        %v3115 = vld [vmem:[%s3113 + $0x4] sm:$0xf]
        %v3116 = vld [vmem:[%s3113 + $0x8] sm:$0xf]
        %v3117 = vld [vmem:[%s3113 + $0xc] sm:$0xf]
        %v3118 = vld [vmem:[%s3113 + $0x10] sm:$0xf]
        %v3119 = vld [vmem:[%s3113 + $0x14] sm:$0xf]
        %v3120 = vld [vmem:[%s3113 + $0x18] sm:$0xf]
        %v3121 = vld [vmem:[%s3113 + $0x1c] sm:$0xf]
        %v3122 = vld [vmem:[%s3113 + $0x20] sm:$0xf]
        %v3123 = vld [vmem:[%s3113 + $0x24] sm:$0xf]
        %v3124 = vld [vmem:[%s3113 + $0x28] sm:$0xf]
        %v3125 = vld [vmem:[%s3113 + $0x2c] sm:$0xf]
        %v3126 = vld [vmem:[%s3113 + $0x30] sm:$0xf]
        %v3127 = vld [vmem:[%s3113 + $0x34] sm:$0xf]
        %v3128 = vld [vmem:[%s3113 + $0x38] sm:$0xf]
        %v3129 = vld [vmem:[%s3113 + $0x3c] sm:$0xf]
        %s3130 = scalar_lea.vmem %s2, 832
        %v3131 = vld [vmem:[%s3130] sm:$0xf]
        %v3132 = vld [vmem:[%s3130 + $0x4] sm:$0xf]
        %v3133 = vld [vmem:[%s3130 + $0x8] sm:$0xf]
        %v3134 = vld [vmem:[%s3130 + $0xc] sm:$0xf]
        %v3135 = vld [vmem:[%s3130 + $0x10] sm:$0xf]
        %v3136 = vld [vmem:[%s3130 + $0x14] sm:$0xf]
        %v3137 = vld [vmem:[%s3130 + $0x18] sm:$0xf]
        %v3138 = vld [vmem:[%s3130 + $0x1c] sm:$0xf]
        %v3139 = vld [vmem:[%s3130 + $0x20] sm:$0xf]
        %v3140 = vld [vmem:[%s3130 + $0x24] sm:$0xf]
        %v3141 = vld [vmem:[%s3130 + $0x28] sm:$0xf]
        %v3142 = vld [vmem:[%s3130 + $0x2c] sm:$0xf]
        %v3143 = vld [vmem:[%s3130 + $0x30] sm:$0xf]
        %v3144 = vld [vmem:[%s3130 + $0x34] sm:$0xf]
        %v3145 = vld [vmem:[%s3130 + $0x38] sm:$0xf]
        %v3146 = vld [vmem:[%s3130 + $0x3c] sm:$0xf]
        %v3163 = vunpack.c.l.b16 %v3131
        %v3164 = vunpack.c.l.b16 %v3132
        %v3165 = vunpack.c.l.b16 %v3133
        %v3166 = vunpack.c.l.b16 %v3134
        %v3167 = vunpack.c.l.b16 %v3135
        %v3168 = vunpack.c.l.b16 %v3136
        %v3169 = vunpack.c.l.b16 %v3137
        %v3170 = vunpack.c.l.b16 %v3138
        %v3171 = vunpack.c.l.b16 %v3139
        %v3172 = vunpack.c.l.b16 %v3140
        %v3173 = vunpack.c.l.b16 %v3141
        %v3174 = vunpack.c.l.b16 %v3142
        %v3175 = vunpack.c.l.b16 %v3143
        %v3176 = vunpack.c.l.b16 %v3144
        %v3177 = vunpack.c.l.b16 %v3145
        %v3178 = vunpack.c.l.b16 %v3146
        %v3179 = vpack.c.b16 %v3164, %v3163
        %v3180 = vpack.c.b16 %v3166, %v3165
        %v3181 = vpack.c.b16 %v3168, %v3167
        %v3182 = vpack.c.b16 %v3170, %v3169
        %v3183 = vpack.c.b16 %v3172, %v3171
        %v3184 = vpack.c.b16 %v3174, %v3173
        %v3185 = vpack.c.b16 %v3176, %v3175
        %v3186 = vpack.c.b16 %v3178, %v3177
        %3195 = vmatprep.subr.bf16.mxu0 0
        %3196 = vmatpush1.bf16.msra.mxu0 %v3186
        %3197 = vmatprep.subr.bf16.mxu0 0
        %3198 = vmatpush1.bf16.msra.mxu0 %v3185
        %3199 = vmatprep.subr.bf16.mxu0 0
        %3200 = vmatpush1.bf16.msra.mxu0 %v3184
        %3201 = vmatprep.subr.bf16.mxu0 0
        %3202 = vmatpush1.bf16.msra.mxu0 %v3183
        %3203 = vmatprep.subr.bf16.mxu0 0
        %3204 = vmatpush1.bf16.msra.mxu0 %v3182
        %3205 = vmatprep.subr.bf16.mxu0 0
        %3206 = vmatpush1.bf16.msra.mxu0 %v3181
        %3207 = vmatprep.subr.bf16.mxu0 0
        %3208 = vmatpush1.bf16.msra.mxu0 %v3180
        %3209 = vmatprep.subr.bf16.mxu0 0
        %3210 = vmatpush1.bf16.msra.mxu0 %v3179
        %3211 = vmatprep.subr.bf16.mxu0 0
        %3212 = vmatpush2.bf16.msra.mxu0 0
        %3213 = vmatprep.subr.bf16.mxu0 0
        %3214 = vmatpush2.bf16.msra.mxu0 0
        %3215 = vmatprep.subr.bf16.mxu0 0
        %3216 = vmatpush2.bf16.msra.mxu0 0
        %3217 = vmatprep.subr.bf16.mxu0 0
        %3218 = vmatpush2.bf16.msra.mxu0 0
        %3219 = vmatprep.subr.bf16.mxu0 0
        %3220 = vmatpush2.bf16.msra.mxu0 0
        %3221 = vmatprep.subr.bf16.mxu0 0
        %3222 = vmatpush2.bf16.msra.mxu0 0
        %3223 = vmatprep.subr.bf16.mxu0 0
        %3224 = vmatpush2.bf16.msra.mxu0 0
        %3225 = vmatprep.subr.bf16.mxu0 0
        %3226 = vmatpush2.bf16.msra.mxu0 0
        %3227 = vmatprep.mubr.bf16.mxu0 0
        %3228 = vmatmul.mubr.bf16.gmra.mxu0 %v1926
        %v3229 = vpop.f32.mrf.mxu0
        %v3230 = vadd.f32 0.0, %v3229
        %v3231 = vpop.f32.mrf.mxu0
        %v3232 = vpop.f32.mrf.mxu0
        %v3233 = vadd.f32 0.0, %v3232
        %v3234 = vpop.f32.mrf.mxu0
        %3235 = vmatprep.mubr.bf16.mxu0 0
        %3236 = vmatmul.mubr.bf16.gmra.mxu0 %v1927
        %v3237 = vpop.f32.mrf.mxu0
        %v3238 = vadd.f32 0.0, %v3237
        %v3239 = vpop.f32.mrf.mxu0
        %v3240 = vpop.f32.mrf.mxu0
        %v3241 = vadd.f32 0.0, %v3240
        %v3242 = vpop.f32.mrf.mxu0
        %3243 = vmatprep.mubr.bf16.mxu0 0
        %3244 = vmatmul.mubr.bf16.gmra.mxu0 %v1928
        %v3245 = vpop.f32.mrf.mxu0
        %v3246 = vadd.f32 0.0, %v3245
        %v3247 = vpop.f32.mrf.mxu0
        %v3248 = vpop.f32.mrf.mxu0
        %v3249 = vadd.f32 0.0, %v3248
        %v3250 = vpop.f32.mrf.mxu0
        %3251 = vmatprep.mubr.bf16.mxu0 0
        %3252 = vmatmul.mubr.bf16.gmra.mxu0 %v1929
        %v3253 = vpop.f32.mrf.mxu0
        %v3254 = vadd.f32 0.0, %v3253
        %v3255 = vpop.f32.mrf.mxu0
        %v3256 = vpop.f32.mrf.mxu0
        %v3257 = vadd.f32 0.0, %v3256
        %v3258 = vpop.f32.mrf.mxu0
        %3259 = vdwg.mxu0
        %v3276 = vunpack.c.l.b16 %v3114
        %v3277 = vunpack.c.l.b16 %v3115
        %v3278 = vunpack.c.l.b16 %v3116
        %v3279 = vunpack.c.l.b16 %v3117
        %v3280 = vunpack.c.l.b16 %v3118
        %v3281 = vunpack.c.l.b16 %v3119
        %v3282 = vunpack.c.l.b16 %v3120
        %v3283 = vunpack.c.l.b16 %v3121
        %v3284 = vunpack.c.l.b16 %v3122
        %v3285 = vunpack.c.l.b16 %v3123
        %v3286 = vunpack.c.l.b16 %v3124
        %v3287 = vunpack.c.l.b16 %v3125
        %v3288 = vunpack.c.l.b16 %v3126
        %v3289 = vunpack.c.l.b16 %v3127
        %v3290 = vunpack.c.l.b16 %v3128
        %v3291 = vunpack.c.l.b16 %v3129
        %v3292 = vpack.c.b16 %v3277, %v3276
        %v3293 = vpack.c.b16 %v3279, %v3278
        %v3294 = vpack.c.b16 %v3281, %v3280
        %v3295 = vpack.c.b16 %v3283, %v3282
        %v3296 = vpack.c.b16 %v3285, %v3284
        %v3297 = vpack.c.b16 %v3287, %v3286
        %v3298 = vpack.c.b16 %v3289, %v3288
        %v3299 = vpack.c.b16 %v3291, %v3290
        %3308 = vmatprep.subr.bf16.mxu0 0
        %3309 = vmatpush1.bf16.msra.mxu0 %v3299
        %3310 = vmatprep.subr.bf16.mxu0 0
        %3311 = vmatpush1.bf16.msra.mxu0 %v3298
        %3312 = vmatprep.subr.bf16.mxu0 0
        %3313 = vmatpush1.bf16.msra.mxu0 %v3297
        %3314 = vmatprep.subr.bf16.mxu0 0
        %3315 = vmatpush1.bf16.msra.mxu0 %v3296
        %3316 = vmatprep.subr.bf16.mxu0 0
        %3317 = vmatpush1.bf16.msra.mxu0 %v3295
        %3318 = vmatprep.subr.bf16.mxu0 0
        %3319 = vmatpush1.bf16.msra.mxu0 %v3294
        %3320 = vmatprep.subr.bf16.mxu0 0
        %3321 = vmatpush1.bf16.msra.mxu0 %v3293
        %3322 = vmatprep.subr.bf16.mxu0 0
        %3323 = vmatpush1.bf16.msra.mxu0 %v3292
        %3324 = vmatprep.subr.bf16.mxu0 0
        %3325 = vmatpush2.bf16.msra.mxu0 0
        %3326 = vmatprep.subr.bf16.mxu0 0
        %3327 = vmatpush2.bf16.msra.mxu0 0
        %3328 = vmatprep.subr.bf16.mxu0 0
        %3329 = vmatpush2.bf16.msra.mxu0 0
        %3330 = vmatprep.subr.bf16.mxu0 0
        %3331 = vmatpush2.bf16.msra.mxu0 0
        %3332 = vmatprep.subr.bf16.mxu0 0
        %3333 = vmatpush2.bf16.msra.mxu0 0
        %3334 = vmatprep.subr.bf16.mxu0 0
        %3335 = vmatpush2.bf16.msra.mxu0 0
        %3336 = vmatprep.subr.bf16.mxu0 0
        %3337 = vmatpush2.bf16.msra.mxu0 0
        %3338 = vmatprep.subr.bf16.mxu0 0
        %3339 = vmatpush2.bf16.msra.mxu0 0
        %3340 = vmatprep.mubr.bf16.mxu0 0
        %3341 = vmatmul.mubr.bf16.gmra.mxu0 %v1359
        %v3342 = vpop.f32.mrf.mxu0
        %v3343 = vadd.f32 %v3230, %v3342
        %v3344 = vpop.f32.mrf.mxu0
        %v3345 = vpop.f32.mrf.mxu0
        %v3346 = vadd.f32 %v3233, %v3345
        %v3347 = vpop.f32.mrf.mxu0
        %3348 = vmatprep.mubr.bf16.mxu0 0
        %3349 = vmatmul.mubr.bf16.gmra.mxu0 %v1360
        %v3350 = vpop.f32.mrf.mxu0
        %v3351 = vadd.f32 %v3238, %v3350
        %v3352 = vpop.f32.mrf.mxu0
        %v3353 = vpop.f32.mrf.mxu0
        %v3354 = vadd.f32 %v3241, %v3353
        %v3355 = vpop.f32.mrf.mxu0
        %3356 = vmatprep.mubr.bf16.mxu0 0
        %3357 = vmatmul.mubr.bf16.gmra.mxu0 %v1361
        %v3358 = vpop.f32.mrf.mxu0
        %v3359 = vadd.f32 %v3246, %v3358
        %v3360 = vpop.f32.mrf.mxu0
        %v3361 = vpop.f32.mrf.mxu0
        %v3362 = vadd.f32 %v3249, %v3361
        %v3363 = vpop.f32.mrf.mxu0
        %3364 = vmatprep.mubr.bf16.mxu0 0
        %3365 = vmatmul.mubr.bf16.gmra.mxu0 %v1362
        %v3366 = vpop.f32.mrf.mxu0
        %v3367 = vadd.f32 %v3254, %v3366
        %v3368 = vpop.f32.mrf.mxu0
        %v3369 = vpop.f32.mrf.mxu0
        %v3370 = vadd.f32 %v3257, %v3369
        %v3371 = vpop.f32.mrf.mxu0
        %3372 = vdwg.mxu0
        %s3373 = scalar_lea.vmem %s2, 896
        %v3374 = vld [vmem:[%s3373] sm:$0xf]
        %v3375 = vld [vmem:[%s3373 + $0x4] sm:$0xf]
        %v3376 = vld [vmem:[%s3373 + $0x8] sm:$0xf]
        %v3377 = vld [vmem:[%s3373 + $0xc] sm:$0xf]
        %v3378 = vld [vmem:[%s3373 + $0x10] sm:$0xf]
        %v3379 = vld [vmem:[%s3373 + $0x14] sm:$0xf]
        %v3380 = vld [vmem:[%s3373 + $0x18] sm:$0xf]
        %v3381 = vld [vmem:[%s3373 + $0x1c] sm:$0xf]
        %v3382 = vld [vmem:[%s3373 + $0x20] sm:$0xf]
        %v3383 = vld [vmem:[%s3373 + $0x24] sm:$0xf]
        %v3384 = vld [vmem:[%s3373 + $0x28] sm:$0xf]
        %v3385 = vld [vmem:[%s3373 + $0x2c] sm:$0xf]
        %v3386 = vld [vmem:[%s3373 + $0x30] sm:$0xf]
        %v3387 = vld [vmem:[%s3373 + $0x34] sm:$0xf]
        %v3388 = vld [vmem:[%s3373 + $0x38] sm:$0xf]
        %v3389 = vld [vmem:[%s3373 + $0x3c] sm:$0xf]
        %v3406 = vunpack.c.l.b16 %v3374
        %v3407 = vunpack.c.l.b16 %v3375
        %v3408 = vunpack.c.l.b16 %v3376
        %v3409 = vunpack.c.l.b16 %v3377
        %v3410 = vunpack.c.l.b16 %v3378
        %v3411 = vunpack.c.l.b16 %v3379
        %v3412 = vunpack.c.l.b16 %v3380
        %v3413 = vunpack.c.l.b16 %v3381
        %v3414 = vunpack.c.l.b16 %v3382
        %v3415 = vunpack.c.l.b16 %v3383
        %v3416 = vunpack.c.l.b16 %v3384
        %v3417 = vunpack.c.l.b16 %v3385
        %v3418 = vunpack.c.l.b16 %v3386
        %v3419 = vunpack.c.l.b16 %v3387
        %v3420 = vunpack.c.l.b16 %v3388
        %v3421 = vunpack.c.l.b16 %v3389
        %v3422 = vpack.c.b16 %v3407, %v3406
        %v3423 = vpack.c.b16 %v3409, %v3408
        %v3424 = vpack.c.b16 %v3411, %v3410
        %v3425 = vpack.c.b16 %v3413, %v3412
        %v3426 = vpack.c.b16 %v3415, %v3414
        %v3427 = vpack.c.b16 %v3417, %v3416
        %v3428 = vpack.c.b16 %v3419, %v3418
        %v3429 = vpack.c.b16 %v3421, %v3420
        %3438 = vmatprep.subr.bf16.mxu0 0
        %3439 = vmatpush1.bf16.msra.mxu0 %v3429
        %3440 = vmatprep.subr.bf16.mxu0 0
        %3441 = vmatpush1.bf16.msra.mxu0 %v3428
        %3442 = vmatprep.subr.bf16.mxu0 0
        %3443 = vmatpush1.bf16.msra.mxu0 %v3427
        %3444 = vmatprep.subr.bf16.mxu0 0
        %3445 = vmatpush1.bf16.msra.mxu0 %v3426
        %3446 = vmatprep.subr.bf16.mxu0 0
        %3447 = vmatpush1.bf16.msra.mxu0 %v3425
        %3448 = vmatprep.subr.bf16.mxu0 0
        %3449 = vmatpush1.bf16.msra.mxu0 %v3424
        %3450 = vmatprep.subr.bf16.mxu0 0
        %3451 = vmatpush1.bf16.msra.mxu0 %v3423
        %3452 = vmatprep.subr.bf16.mxu0 0
        %3453 = vmatpush1.bf16.msra.mxu0 %v3422
        %3454 = vmatprep.subr.bf16.mxu0 0
        %3455 = vmatpush2.bf16.msra.mxu0 0
        %3456 = vmatprep.subr.bf16.mxu0 0
        %3457 = vmatpush2.bf16.msra.mxu0 0
        %3458 = vmatprep.subr.bf16.mxu0 0
        %3459 = vmatpush2.bf16.msra.mxu0 0
        %3460 = vmatprep.subr.bf16.mxu0 0
        %3461 = vmatpush2.bf16.msra.mxu0 0
        %3462 = vmatprep.subr.bf16.mxu0 0
        %3463 = vmatpush2.bf16.msra.mxu0 0
        %3464 = vmatprep.subr.bf16.mxu0 0
        %3465 = vmatpush2.bf16.msra.mxu0 0
        %3466 = vmatprep.subr.bf16.mxu0 0
        %3467 = vmatpush2.bf16.msra.mxu0 0
        %3468 = vmatprep.subr.bf16.mxu0 0
        %3469 = vmatpush2.bf16.msra.mxu0 0
        %3470 = vmatprep.mubr.bf16.mxu0 0
        %3471 = vmatmul.mubr.bf16.gmra.mxu0 %v1513
        %v3472 = vpop.f32.mrf.mxu0
        %v3473 = vadd.f32 0.0, %v3472
        %v3474 = vpop.f32.mrf.mxu0
        %v3475 = vpop.f32.mrf.mxu0
        %v3476 = vadd.f32 0.0, %v3475
        %v3477 = vpop.f32.mrf.mxu0
        %3478 = vmatprep.mubr.bf16.mxu0 0
        %3479 = vmatmul.mubr.bf16.gmra.mxu0 %v1514
        %v3480 = vpop.f32.mrf.mxu0
        %v3481 = vadd.f32 0.0, %v3480
        %v3482 = vpop.f32.mrf.mxu0
        %v3483 = vpop.f32.mrf.mxu0
        %v3484 = vadd.f32 0.0, %v3483
        %v3485 = vpop.f32.mrf.mxu0
        %3486 = vmatprep.mubr.bf16.mxu0 0
        %3487 = vmatmul.mubr.bf16.gmra.mxu0 %v1515
        %v3488 = vpop.f32.mrf.mxu0
        %v3489 = vadd.f32 0.0, %v3488
        %v3490 = vpop.f32.mrf.mxu0
        %v3491 = vpop.f32.mrf.mxu0
        %v3492 = vadd.f32 0.0, %v3491
        %v3493 = vpop.f32.mrf.mxu0
        %3494 = vmatprep.mubr.bf16.mxu0 0
        %3495 = vmatmul.mubr.bf16.gmra.mxu0 %v2795
        %v3496 = vpop.f32.mrf.mxu0
        %v3497 = vadd.f32 0.0, %v3496
        %v3498 = vpop.f32.mrf.mxu0
        %v3499 = vpop.f32.mrf.mxu0
        %v3500 = vadd.f32 0.0, %v3499
        %v3501 = vpop.f32.mrf.mxu0
        %3502 = vdwg.mxu0
        %v3503 = vadd.f32 %v3343, %v3473
        %v3504 = vadd.f32 %v3346, %v3476
        %v3505 = vadd.f32 %v3351, %v3481
        %v3506 = vadd.f32 %v3354, %v3484
        %v3507 = vadd.f32 %v3359, %v3489
        %v3508 = vadd.f32 %v3362, %v3492
        %v3509 = vadd.f32 %v3367, %v3497
        %v3510 = vadd.f32 %v3370, %v3500
        %v3512 = vrot.slane %v1067, 5
        %v3513 = vrot.slane %v3512, 4
        %v3514 = vrot.slane %v1068, 5
        %v3515 = vsel %vm1868, %v3513, %v3514
        %s3516 = scalar_lea.vmem %s2, 960
        %v3517 = vld [vmem:[%s3516] sm:$0xf]
        %v3518 = vld [vmem:[%s3516 + $0x4] sm:$0xf]
        %v3519 = vld [vmem:[%s3516 + $0x8] sm:$0xf]
        %v3520 = vld [vmem:[%s3516 + $0xc] sm:$0xf]
        %v3521 = vld [vmem:[%s3516 + $0x10] sm:$0xf]
        %v3522 = vld [vmem:[%s3516 + $0x14] sm:$0xf]
        %v3523 = vld [vmem:[%s3516 + $0x18] sm:$0xf]
        %v3524 = vld [vmem:[%s3516 + $0x1c] sm:$0xf]
        %v3525 = vld [vmem:[%s3516 + $0x20] sm:$0xf]
        %v3526 = vld [vmem:[%s3516 + $0x24] sm:$0xf]
        %v3527 = vld [vmem:[%s3516 + $0x28] sm:$0xf]
        %v3528 = vld [vmem:[%s3516 + $0x2c] sm:$0xf]
        %v3529 = vld [vmem:[%s3516 + $0x30] sm:$0xf]
        %v3530 = vld [vmem:[%s3516 + $0x34] sm:$0xf]
        %v3531 = vld [vmem:[%s3516 + $0x38] sm:$0xf]
        %v3532 = vld [vmem:[%s3516 + $0x3c] sm:$0xf]
        %v3533 = vunpack.c.l.b16 %v3515
        %v3534 = vpack.c.b16 %v3533, %v1925
        %v3552 = vunpack.c.l.b16 %v3517
        %v3553 = vunpack.c.l.b16 %v3518
        %v3554 = vunpack.c.l.b16 %v3519
        %v3555 = vunpack.c.l.b16 %v3520
        %v3556 = vunpack.c.l.b16 %v3521
        %v3557 = vunpack.c.l.b16 %v3522
        %v3558 = vunpack.c.l.b16 %v3523
        %v3559 = vunpack.c.l.b16 %v3524
        %v3560 = vunpack.c.l.b16 %v3525
        %v3561 = vunpack.c.l.b16 %v3526
        %v3562 = vunpack.c.l.b16 %v3527
        %v3563 = vunpack.c.l.b16 %v3528
        %v3564 = vunpack.c.l.b16 %v3529
        %v3565 = vunpack.c.l.b16 %v3530
        %v3566 = vunpack.c.l.b16 %v3531
        %v3567 = vunpack.c.l.b16 %v3532
        %v3568 = vpack.c.b16 %v3553, %v3552
        %v3569 = vpack.c.b16 %v3555, %v3554
        %v3570 = vpack.c.b16 %v3557, %v3556
        %v3571 = vpack.c.b16 %v3559, %v3558
        %v3572 = vpack.c.b16 %v3561, %v3560
        %v3573 = vpack.c.b16 %v3563, %v3562
        %v3574 = vpack.c.b16 %v3565, %v3564
        %v3575 = vpack.c.b16 %v3567, %v3566
        %3584 = vmatprep.subr.bf16.mxu0 0
        %3585 = vmatpush1.bf16.msra.mxu0 %v3575
        %3586 = vmatprep.subr.bf16.mxu0 0
        %3587 = vmatpush1.bf16.msra.mxu0 %v3574
        %3588 = vmatprep.subr.bf16.mxu0 0
        %3589 = vmatpush1.bf16.msra.mxu0 %v3573
        %3590 = vmatprep.subr.bf16.mxu0 0
        %3591 = vmatpush1.bf16.msra.mxu0 %v3572
        %3592 = vmatprep.subr.bf16.mxu0 0
        %3593 = vmatpush1.bf16.msra.mxu0 %v3571
        %3594 = vmatprep.subr.bf16.mxu0 0
        %3595 = vmatpush1.bf16.msra.mxu0 %v3570
        %3596 = vmatprep.subr.bf16.mxu0 0
        %3597 = vmatpush1.bf16.msra.mxu0 %v3569
        %3598 = vmatprep.subr.bf16.mxu0 0
        %3599 = vmatpush1.bf16.msra.mxu0 %v3568
        %3600 = vmatprep.subr.bf16.mxu0 0
        %3601 = vmatpush2.bf16.msra.mxu0 0
        %3602 = vmatprep.subr.bf16.mxu0 0
        %3603 = vmatpush2.bf16.msra.mxu0 0
        %3604 = vmatprep.subr.bf16.mxu0 0
        %3605 = vmatpush2.bf16.msra.mxu0 0
        %3606 = vmatprep.subr.bf16.mxu0 0
        %3607 = vmatpush2.bf16.msra.mxu0 0
        %3608 = vmatprep.subr.bf16.mxu0 0
        %3609 = vmatpush2.bf16.msra.mxu0 0
        %3610 = vmatprep.subr.bf16.mxu0 0
        %3611 = vmatpush2.bf16.msra.mxu0 0
        %3612 = vmatprep.subr.bf16.mxu0 0
        %3613 = vmatpush2.bf16.msra.mxu0 0
        %3614 = vmatprep.subr.bf16.mxu0 0
        %3615 = vmatpush2.bf16.msra.mxu0 0
        %3616 = vmatprep.mubr.bf16.mxu0 0
        %3617 = vmatmul.mubr.bf16.gmra.mxu0 %v2322
        %v3618 = vpop.f32.mrf.mxu0
        %v3619 = vadd.f32 0.0, %v3618
        %v3620 = vpop.f32.mrf.mxu0
        %v3621 = vpop.f32.mrf.mxu0
        %v3622 = vadd.f32 0.0, %v3621
        %v3623 = vpop.f32.mrf.mxu0
        %3624 = vmatprep.mubr.bf16.mxu0 0
        %3625 = vmatmul.mubr.bf16.gmra.mxu0 %v2323
        %v3626 = vpop.f32.mrf.mxu0
        %v3627 = vadd.f32 0.0, %v3626
        %v3628 = vpop.f32.mrf.mxu0
        %v3629 = vpop.f32.mrf.mxu0
        %v3630 = vadd.f32 0.0, %v3629
        %v3631 = vpop.f32.mrf.mxu0
        %3632 = vmatprep.mubr.bf16.mxu0 0
        %3633 = vmatmul.mubr.bf16.gmra.mxu0 %v2324
        %v3634 = vpop.f32.mrf.mxu0
        %v3635 = vadd.f32 0.0, %v3634
        %v3636 = vpop.f32.mrf.mxu0
        %v3637 = vpop.f32.mrf.mxu0
        %v3638 = vadd.f32 0.0, %v3637
        %v3639 = vpop.f32.mrf.mxu0
        %3640 = vmatprep.mubr.bf16.mxu0 0
        %3641 = vmatmul.mubr.bf16.gmra.mxu0 %v3534
        %v3642 = vpop.f32.mrf.mxu0
        %v3643 = vadd.f32 0.0, %v3642
        %v3644 = vpop.f32.mrf.mxu0
        %v3645 = vpop.f32.mrf.mxu0
        %v3646 = vadd.f32 0.0, %v3645
        %v3647 = vpop.f32.mrf.mxu0
        %3648 = vdwg.mxu0
        %v3649 = vadd.f32 %v3503, %v3619
        %v3650 = vadd.f32 %v3504, %v3622
        %v3651 = vadd.f32 %v3505, %v3627
        %v3652 = vadd.f32 %v3506, %v3630
        %v3653 = vadd.f32 %v3507, %v3635
        %v3654 = vadd.f32 %v3508, %v3638
        %v3655 = vadd.f32 %v3509, %v3643
        %v3656 = vadd.f32 %v3510, %v3646
        %v3657 = vadd.f32 %v3649, %v3650
        %v3658 = vadd.f32 %v3657, %v3651
        %v3659 = vadd.f32 %v3658, %v3652
        %v3660 = vadd.f32 %v3659, %v3653
        %v3661 = vadd.f32 %v3660, %v3654
        %v3662 = vadd.f32 %v3661, %v3655
        %v3663 = vadd.f32 %v3662, %v3656
        %v3664 = vrot.slane %v3663, 4
        %v3665 = vadd.f32 %v3663, %v3664
        %v3666 = vrot.slane %v3665, 2
        %v3667 = vadd.f32 %v3665, %v3666
        %v3668 = vrot.slane %v3667, 1
        %v3669 = vadd.f32 %v3667, %v3668
        %v3670 = vadd.f32 %v3073, %v3669
        %v3671 = vmul.f32 %v3649, %v3649
        %v3672 = vmul.f32 %v3650, %v3650
        %v3673 = vmul.f32 %v3651, %v3651
        %v3674 = vmul.f32 %v3652, %v3652
        %v3675 = vmul.f32 %v3653, %v3653
        %v3676 = vmul.f32 %v3654, %v3654
        %v3677 = vmul.f32 %v3655, %v3655
        %v3678 = vmul.f32 %v3656, %v3656
        %v3679 = vadd.f32 %v3671, %v3672
        %v3680 = vadd.f32 %v3679, %v3673
        %v3681 = vadd.f32 %v3680, %v3674
        %v3682 = vadd.f32 %v3681, %v3675
        %v3683 = vadd.f32 %v3682, %v3676
        %v3684 = vadd.f32 %v3683, %v3677
        %v3685 = vadd.f32 %v3684, %v3678
        %v3686 = vrot.slane %v3685, 4
        %v3687 = vadd.f32 %v3685, %v3686
        %v3688 = vrot.slane %v3687, 2
        %v3689 = vadd.f32 %v3687, %v3688
        %v3690 = vrot.slane %v3689, 1
        %v3691 = vadd.f32 %v3689, %v3690
        %v3692 = vadd.f32 %v3095, %v3691
        %v3693 = vpack.c.bf16 %v3649, %v3649
        %v3694 = vpack.c.bf16 %v3650, %v3650
        %v3695 = vpack.c.bf16 %v3651, %v3651
        %v3696 = vpack.c.bf16 %v3652, %v3652
        %v3697 = vpack.c.bf16 %v3653, %v3653
        %v3698 = vpack.c.bf16 %v3654, %v3654
        %v3699 = vpack.c.bf16 %v3655, %v3655
        %v3700 = vpack.c.bf16 %v3656, %v3656
        %s3701 = scalar_lea.vmem %s187, 96 [#allocation3]
        %3702 = vst [vmem:[%s3701] sm:$0xf] %v3693
        %3703 = vst [vmem:[%s3701 + $0x4] sm:$0xf] %v3694
        %3704 = vst [vmem:[%s3701 + $0x8] sm:$0xf] %v3695
        %3705 = vst [vmem:[%s3701 + $0xc] sm:$0xf] %v3696
        %3706 = vst [vmem:[%s3701 + $0x10] sm:$0xf] %v3697
        %3707 = vst [vmem:[%s3701 + $0x14] sm:$0xf] %v3698
        %3708 = vst [vmem:[%s3701 + $0x18] sm:$0xf] %v3699
        %3709 = vst [vmem:[%s3701 + $0x1c] sm:$0xf] %v3700
        %vm3710 = vcmask 1040384
        %v3711 = vsel %vm3710, %v3670, %v3692
        %3712 = vst [vmem:[%s202] sm:$0x3] %v3711
        %s3713 = sand.u32 %s92, 1
        %s3714 = sand.u32 %s92, 1
        %s3715 = smul.addr %s3714, 128
        %s3716 = scalar_lea.vmem [#allocation3], %s3715
        %p3717 = scmp.lt.s32.totalorder %s16, 1
        %s3718 = scalar_select %p3717, %s16, 1
        %s3719 = smul.addr %s3718, 2
        %s3720 = scalar_lea.vmem %s4, %s3719
        // Predicated region
        $region33: #{unet_innermost_forward.2} parent=31 // pred_check
          %p3721 = pneg %p102
        $region34: #{unet_innermost_forward.2} parent=31 // pred_check_branch
          %3723 = sbr.rel (%p3721) target = $region36
        $region35: #{unet_innermost_forward.2} parent=31 // pred_region
          %s3724 = smul.addr %s16, 8
          %s3725 = smul.addr %s3724, 4
          %s3726 = scalar_lea.vmem %s3, %s3725
          // Predicated region
          $region37: #{unet_innermost_forward.2} parent=35 // pred_check
            _
          $region38: #{unet_innermost_forward.2} parent=35 // pred_check_branch
            %3728 = sbr.rel (0) target = $region40
          $region39: #{unet_innermost_forward.2} parent=35 // pred_region
            // Predicated region
            $region41: #{unet_innermost_forward.2} parent=39 // pred_check
              _
            $region42: #{unet_innermost_forward.2} parent=39 // pred_check_branch
              %3730 = sbr.rel target = $region44
            $region43: #{unet_innermost_forward.2} parent=39 // pred_region
              // Predicated region
              $region56: #{unet_innermost_forward.2} parent=43 // pred_check
                _
              $region57: #{unet_innermost_forward.2} parent=43 // pred_check_branch
                %3808 = sbr.rel (0) target = $region59
              $region58: #{unet_innermost_forward.2} parent=43 // pred_region
                loop: start=0, step=1, limit=1
                $region60: #{unet_innermost_forward.2} parent=58 // loop_pre_header
                  _
                $region61: #{unet_innermost_forward.2} parent=58 // loop_header
                  %s3810 = sphi 0, %s3814
                  %p3811 = scmp.ge.s32.totalorder %s3810, 1
                  %s3815 = sphi %s3716, %s3716
                  %s3816 = sphi %s3726, %s3726
                $region62: #{unet_innermost_forward.2} parent=58 // loop_header_branch
                  %3813 = sbr.rel (%p3811) target = $region66
                $region63: #{unet_innermost_forward.2} parent=58 // loop_body
                  _
                $region64: #{unet_innermost_forward.2} parent=58 // loop_footer
                  %s3814 = sadd.s32 1, %s3810
                $region65: #{unet_innermost_forward.2} parent=58 // loop_footer_branch
                  %3809 = sbr.rel target = $region61
                $region66: #{unet_innermost_forward.2} parent=58 // loop_exit
                  _
                %s3818 = ssub.s32 16, 1
                loop: start=0, step=1, limit=1
                $region67: #{unet_innermost_forward.2} parent=58 // loop_pre_header
                  _
                $region68: #{unet_innermost_forward.2} parent=58 // loop_header
                  %s3820 = sphi 0, %s3824
                  %p3821 = scmp.ge.s32.totalorder %s3820, 1
                  %s3825 = sphi %s3716, %s3716
                  %s3826 = sphi %s3726, %s3726
                $region69: #{unet_innermost_forward.2} parent=58 // loop_header_branch
                  %3823 = sbr.rel (%p3821) target = $region73
                $region70: #{unet_innermost_forward.2} parent=58 // loop_body
                  %v3827 = vld [vmem:[%s3825] sm:%s3818]
                  %3828 = vst [vmem:[%s3826] sm:%s3818] %v3827
                  %v3829 = vld [vmem:[%s3825 + $0x4] sm:%s3818]
                  %3830 = vst [vmem:[%s3826 + $0x4] sm:%s3818] %v3829
                  %v3831 = vld [vmem:[%s3825 + $0x8] sm:%s3818]
                  %3832 = vst [vmem:[%s3826 + $0x8] sm:%s3818] %v3831
                  %v3833 = vld [vmem:[%s3825 + $0xc] sm:%s3818]
                  %3834 = vst [vmem:[%s3826 + $0xc] sm:%s3818] %v3833
                  %v3835 = vld [vmem:[%s3825 + $0x10] sm:%s3818]
                  %3836 = vst [vmem:[%s3826 + $0x10] sm:%s3818] %v3835
                  %v3837 = vld [vmem:[%s3825 + $0x14] sm:%s3818]
                  %3838 = vst [vmem:[%s3826 + $0x14] sm:%s3818] %v3837
                  %v3839 = vld [vmem:[%s3825 + $0x18] sm:%s3818]
                  %3840 = vst [vmem:[%s3826 + $0x18] sm:%s3818] %v3839
                  %v3841 = vld [vmem:[%s3825 + $0x1c] sm:%s3818]
                  %3842 = vst [vmem:[%s3826 + $0x1c] sm:%s3818] %v3841
                  %v3843 = vld [vmem:[%s3825 + $0x20] sm:%s3818]
                  %3844 = vst [vmem:[%s3826 + $0x40] sm:%s3818] %v3843
                  %v3845 = vld [vmem:[%s3825 + $0x24] sm:%s3818]
                  %3846 = vst [vmem:[%s3826 + $0x44] sm:%s3818] %v3845
                  %v3847 = vld [vmem:[%s3825 + $0x28] sm:%s3818]
                  %3848 = vst [vmem:[%s3826 + $0x48] sm:%s3818] %v3847
                  %v3849 = vld [vmem:[%s3825 + $0x2c] sm:%s3818]
                  %3850 = vst [vmem:[%s3826 + $0x4c] sm:%s3818] %v3849
                  %v3851 = vld [vmem:[%s3825 + $0x30] sm:%s3818]
                  %3852 = vst [vmem:[%s3826 + $0x50] sm:%s3818] %v3851
                  %v3853 = vld [vmem:[%s3825 + $0x34] sm:%s3818]
                  %3854 = vst [vmem:[%s3826 + $0x54] sm:%s3818] %v3853
                  %v3855 = vld [vmem:[%s3825 + $0x38] sm:%s3818]
                  %3856 = vst [vmem:[%s3826 + $0x58] sm:%s3818] %v3855
                  %v3857 = vld [vmem:[%s3825 + $0x3c] sm:%s3818]
                  %3858 = vst [vmem:[%s3826 + $0x5c] sm:%s3818] %v3857
                  %v3859 = vld [vmem:[%s3825 + $0x40] sm:%s3818]
                  %3860 = vst [vmem:[%s3826 + $0x80] sm:%s3818] %v3859
                  %v3861 = vld [vmem:[%s3825 + $0x44] sm:%s3818]
                  %3862 = vst [vmem:[%s3826 + $0x84] sm:%s3818] %v3861
                  %v3863 = vld [vmem:[%s3825 + $0x48] sm:%s3818]
                  %3864 = vst [vmem:[%s3826 + $0x88] sm:%s3818] %v3863
                  %v3865 = vld [vmem:[%s3825 + $0x4c] sm:%s3818]
                  %3866 = vst [vmem:[%s3826 + $0x8c] sm:%s3818] %v3865
                  %v3867 = vld [vmem:[%s3825 + $0x50] sm:%s3818]
                  %3868 = vst [vmem:[%s3826 + $0x90] sm:%s3818] %v3867
                  %v3869 = vld [vmem:[%s3825 + $0x54] sm:%s3818]
                  %3870 = vst [vmem:[%s3826 + $0x94] sm:%s3818] %v3869
                  %v3871 = vld [vmem:[%s3825 + $0x58] sm:%s3818]
                  %3872 = vst [vmem:[%s3826 + $0x98] sm:%s3818] %v3871
                  %v3873 = vld [vmem:[%s3825 + $0x5c] sm:%s3818]
                  %3874 = vst [vmem:[%s3826 + $0x9c] sm:%s3818] %v3873
                  %v3875 = vld [vmem:[%s3825 + $0x60] sm:%s3818]
                  %3876 = vst [vmem:[%s3826 + $0xc0] sm:%s3818] %v3875
                  %v3877 = vld [vmem:[%s3825 + $0x64] sm:%s3818]
                  %3878 = vst [vmem:[%s3826 + $0xc4] sm:%s3818] %v3877
                  %v3879 = vld [vmem:[%s3825 + $0x68] sm:%s3818]
                  %3880 = vst [vmem:[%s3826 + $0xc8] sm:%s3818] %v3879
                  %v3881 = vld [vmem:[%s3825 + $0x6c] sm:%s3818]
                  %3882 = vst [vmem:[%s3826 + $0xcc] sm:%s3818] %v3881
                  %v3883 = vld [vmem:[%s3825 + $0x70] sm:%s3818]
                  %3884 = vst [vmem:[%s3826 + $0xd0] sm:%s3818] %v3883
                  %v3885 = vld [vmem:[%s3825 + $0x74] sm:%s3818]
                  %3886 = vst [vmem:[%s3826 + $0xd4] sm:%s3818] %v3885
                  %v3887 = vld [vmem:[%s3825 + $0x78] sm:%s3818]
                  %3888 = vst [vmem:[%s3826 + $0xd8] sm:%s3818] %v3887
                  %v3889 = vld [vmem:[%s3825 + $0x7c] sm:%s3818]
                  %3890 = vst [vmem:[%s3826 + $0xdc] sm:%s3818] %v3889
                $region71: #{unet_innermost_forward.2} parent=58 // loop_footer
                  %s3824 = sadd.s32 1, %s3820
                $region72: #{unet_innermost_forward.2} parent=58 // loop_footer_branch
                  %3819 = sbr.rel target = $region68
                $region73: #{unet_innermost_forward.2} parent=58 // loop_exit
                  _
              $region59: #{unet_innermost_forward.2} parent=43 // pred_fallthru
                _
            $region44: #{unet_innermost_forward.2} parent=39 // pred_fallthru
              _
            // Predicated region
            $region45: #{unet_innermost_forward.2} parent=39 // pred_check
              _
            $region46: #{unet_innermost_forward.2} parent=39 // pred_check_branch
              %3732 = sbr.rel (0) target = $region48
            $region47: #{unet_innermost_forward.2} parent=39 // pred_region
              %s3734 = ssub.s32 16, 1
              loop: start=0, step=1, limit=1
              $region49: #{unet_innermost_forward.2} parent=47 // loop_pre_header
                _
              $region50: #{unet_innermost_forward.2} parent=47 // loop_header
                %s3736 = sphi 0, %s3740
                %p3737 = scmp.ge.s32.totalorder %s3736, 1
                %s3741 = sphi %s3716, %s3716
                %s3742 = sphi %s3726, %s3726
              $region51: #{unet_innermost_forward.2} parent=47 // loop_header_branch
                %3739 = sbr.rel (%p3737) target = $region55
              $region52: #{unet_innermost_forward.2} parent=47 // loop_body
                %v3743 = vld [vmem:[%s3741] sm:%s3734]
                %3744 = vst [vmem:[%s3742] sm:%s3734] %v3743
                %v3745 = vld [vmem:[%s3741 + $0x4] sm:%s3734]
                %3746 = vst [vmem:[%s3742 + $0x4] sm:%s3734] %v3745
                %v3747 = vld [vmem:[%s3741 + $0x8] sm:%s3734]
                %3748 = vst [vmem:[%s3742 + $0x8] sm:%s3734] %v3747
                %v3749 = vld [vmem:[%s3741 + $0xc] sm:%s3734]
                %3750 = vst [vmem:[%s3742 + $0xc] sm:%s3734] %v3749
                %v3751 = vld [vmem:[%s3741 + $0x10] sm:%s3734]
                %3752 = vst [vmem:[%s3742 + $0x10] sm:%s3734] %v3751
                %v3753 = vld [vmem:[%s3741 + $0x14] sm:%s3734]
                %3754 = vst [vmem:[%s3742 + $0x14] sm:%s3734] %v3753
                %v3755 = vld [vmem:[%s3741 + $0x18] sm:%s3734]
                %3756 = vst [vmem:[%s3742 + $0x18] sm:%s3734] %v3755
                %v3757 = vld [vmem:[%s3741 + $0x1c] sm:%s3734]
                %3758 = vst [vmem:[%s3742 + $0x1c] sm:%s3734] %v3757
                %v3759 = vld [vmem:[%s3741 + $0x20] sm:%s3734]
                %3760 = vst [vmem:[%s3742 + $0x40] sm:%s3734] %v3759
                %v3761 = vld [vmem:[%s3741 + $0x24] sm:%s3734]
                %3762 = vst [vmem:[%s3742 + $0x44] sm:%s3734] %v3761
                %v3763 = vld [vmem:[%s3741 + $0x28] sm:%s3734]
                %3764 = vst [vmem:[%s3742 + $0x48] sm:%s3734] %v3763
                %v3765 = vld [vmem:[%s3741 + $0x2c] sm:%s3734]
                %3766 = vst [vmem:[%s3742 + $0x4c] sm:%s3734] %v3765
                %v3767 = vld [vmem:[%s3741 + $0x30] sm:%s3734]
                %3768 = vst [vmem:[%s3742 + $0x50] sm:%s3734] %v3767
                %v3769 = vld [vmem:[%s3741 + $0x34] sm:%s3734]
                %3770 = vst [vmem:[%s3742 + $0x54] sm:%s3734] %v3769
                %v3771 = vld [vmem:[%s3741 + $0x38] sm:%s3734]
                %3772 = vst [vmem:[%s3742 + $0x58] sm:%s3734] %v3771
                %v3773 = vld [vmem:[%s3741 + $0x3c] sm:%s3734]
                %3774 = vst [vmem:[%s3742 + $0x5c] sm:%s3734] %v3773
                %v3775 = vld [vmem:[%s3741 + $0x40] sm:%s3734]
                %3776 = vst [vmem:[%s3742 + $0x80] sm:%s3734] %v3775
                %v3777 = vld [vmem:[%s3741 + $0x44] sm:%s3734]
                %3778 = vst [vmem:[%s3742 + $0x84] sm:%s3734] %v3777
                %v3779 = vld [vmem:[%s3741 + $0x48] sm:%s3734]
                %3780 = vst [vmem:[%s3742 + $0x88] sm:%s3734] %v3779
                %v3781 = vld [vmem:[%s3741 + $0x4c] sm:%s3734]
                %3782 = vst [vmem:[%s3742 + $0x8c] sm:%s3734] %v3781
                %v3783 = vld [vmem:[%s3741 + $0x50] sm:%s3734]
                %3784 = vst [vmem:[%s3742 + $0x90] sm:%s3734] %v3783
                %v3785 = vld [vmem:[%s3741 + $0x54] sm:%s3734]
                %3786 = vst [vmem:[%s3742 + $0x94] sm:%s3734] %v3785
                %v3787 = vld [vmem:[%s3741 + $0x58] sm:%s3734]
                %3788 = vst [vmem:[%s3742 + $0x98] sm:%s3734] %v3787
                %v3789 = vld [vmem:[%s3741 + $0x5c] sm:%s3734]
                %3790 = vst [vmem:[%s3742 + $0x9c] sm:%s3734] %v3789
                %v3791 = vld [vmem:[%s3741 + $0x60] sm:%s3734]
                %3792 = vst [vmem:[%s3742 + $0xc0] sm:%s3734] %v3791
                %v3793 = vld [vmem:[%s3741 + $0x64] sm:%s3734]
                %3794 = vst [vmem:[%s3742 + $0xc4] sm:%s3734] %v3793
                %v3795 = vld [vmem:[%s3741 + $0x68] sm:%s3734]
                %3796 = vst [vmem:[%s3742 + $0xc8] sm:%s3734] %v3795
                %v3797 = vld [vmem:[%s3741 + $0x6c] sm:%s3734]
                %3798 = vst [vmem:[%s3742 + $0xcc] sm:%s3734] %v3797
                %v3799 = vld [vmem:[%s3741 + $0x70] sm:%s3734]
                %3800 = vst [vmem:[%s3742 + $0xd0] sm:%s3734] %v3799
                %v3801 = vld [vmem:[%s3741 + $0x74] sm:%s3734]
                %3802 = vst [vmem:[%s3742 + $0xd4] sm:%s3734] %v3801
                %v3803 = vld [vmem:[%s3741 + $0x78] sm:%s3734]
                %3804 = vst [vmem:[%s3742 + $0xd8] sm:%s3734] %v3803
                %v3805 = vld [vmem:[%s3741 + $0x7c] sm:%s3734]
                %3806 = vst [vmem:[%s3742 + $0xdc] sm:%s3734] %v3805
              $region53: #{unet_innermost_forward.2} parent=47 // loop_footer
                %s3740 = sadd.s32 1, %s3736
              $region54: #{unet_innermost_forward.2} parent=47 // loop_footer_branch
                %3735 = sbr.rel target = $region50
              $region55: #{unet_innermost_forward.2} parent=47 // loop_exit
                _
            $region48: #{unet_innermost_forward.2} parent=39 // pred_fallthru
              _
          $region40: #{unet_innermost_forward.2} parent=35 // pred_fallthru
            _
          %3891 = vnop
        $region36: #{unet_innermost_forward.2} parent=31 // pred_fallthru
          _
        // Predicated region
        $region74: #{unet_innermost_forward.2} parent=31 // pred_check
          %p3892 = pneg %p128
        $region75: #{unet_innermost_forward.2} parent=31 // pred_check_branch
          %3894 = sbr.rel (%p3892) target = $region77
        $region76: #{unet_innermost_forward.2} parent=31 // pred_region
          _
        $region77: #{unet_innermost_forward.2} parent=31 // pred_fallthru
          _
      $region32: #{unet_innermost_forward.2} parent=5 // pred_fallthru
        _
      %p3895 = scmp.le.s32.totalorder 2, %s11
      // Predicated region
      $region78: #{unet_innermost_forward.2} parent=5 // pred_check
        %p3896 = pneg %p3895
      $region79: #{unet_innermost_forward.2} parent=5 // pred_check_branch
        %3898 = sbr.rel (%p3896) target = $region81
      $region80: #{unet_innermost_forward.2} parent=5 // pred_region
        %s3899 = ssub.s32 %s11, 2
        // Predicated region
        $region82: #{unet_innermost_forward.2} parent=80 // pred_check
          %p3900 = pneg %p108
        $region83: #{unet_innermost_forward.2} parent=80 // pred_check_branch
          %3902 = sbr.rel (%p3900) target = $region85
        $region84: #{unet_innermost_forward.2} parent=80 // pred_region
          %s3903 = sand.u32 %s93, 1
          %s3904 = sand.u32 %s93, 1
          %s3905 = smul.addr %s3904, 128
          %s3906 = scalar_lea.vmem [#allocation3], %s3905
        $region85: #{unet_innermost_forward.2} parent=80 // pred_fallthru
          _
        // Predicated region
        $region86: #{unet_innermost_forward.2} parent=80 // pred_check
          %p3907 = pneg %p134
        $region87: #{unet_innermost_forward.2} parent=80 // pred_check_branch
          %3909 = sbr.rel (%p3907) target = $region89
        $region88: #{unet_innermost_forward.2} parent=80 // pred_region
          %p3910 = scmp.lt.s32.totalorder %s17, 1
          %s3911 = scalar_select %p3910, %s17, 1
          %s3912 = smul.addr %s3911, 2
          %s3913 = scalar_lea.vmem %s4, %s3912
        $region89: #{unet_innermost_forward.2} parent=80 // pred_fallthru
          _
      $region81: #{unet_innermost_forward.2} parent=5 // pred_fallthru
        _
    $region6: #{unet_innermost_forward.2} parent=1 // loop_footer
      %s15 = sadd.s32 1, %s11
    $region7: #{unet_innermost_forward.2} parent=1 // loop_footer_branch
      %10 = sbr.rel target = $region3
    $region8: #{unet_innermost_forward.2} parent=1 // loop_exit
      _

</llo_original>
